<compile_context>
chip_gen: v5e
topology: v5e:2x2
jax: 0.10.0
libtpu: 0.0.40
codegen_flags: <defaults>
</compile_context>

<pallas_src>
import numpy as np
import jax
import jax.numpy as jnp
from jax import lax
from jax.experimental import pallas as pl
from jax.experimental.pallas import tpu as pltpu

# ---------------- hyper-parameters (small but consistent with the module) -------------
BS = 2
N_VARS = 4          # c_in / n_vars
PATCH_LEN = 16
PATCH_NUM = 8       # q_len
D_MODEL = 32
N_HEADS = 4
D_K = D_MODEL // N_HEADS          # = d_v
D_FF = 64
N_LAYERS = 2
LOCAL_WS = 3                       # odd local window
H_WIN = LOCAL_WS // 2 + 1          # masked_fill where |i-j| < H_WIN
SCALE = float(D_K) ** -0.5         # lsa=False -> fixed, non-learned scale
BN_EPS = 1e-5
NEG_MASK = -1e30                   # finite "masked" value; exp underflows to 0 exactly
NEG_INF = float("-inf")            # reference only

HD = N_HEADS * D_K                 # concatenated-head feature width (= D_MODEL)
HQ = N_HEADS * PATCH_NUM           # packed per-head scores lane width

_PER_LAYER_ARGS = 12               # wqkv,bqkv,wo,bo,g1,be1,w1,b1,w2,b2,g2,be2


# ---------------- constant selector matrices (built once, host-side numpy) ------------
def _np_constants():
    Q, H, dk = PATCH_NUM, N_HEADS, D_K
    i = np.arange(Q)
    lm_qq = (np.abs(i[:, None] - i[None, :]) < H_WIN).astype(np.float32)       # (Q, Q)
    lmask = np.tile(lm_qq, (1, H))                                             # (Q, HQ): col h*Q+j -> |i-j|<H_WIN
    r = np.arange(HQ)
    c = np.arange(HD)
    bd = (r[:, None] // Q == c[None, :] // dk).astype(np.float32)              # (HQ, HD) block-diag selector
    bones = (r[:, None] // Q == r[None, :] // Q).astype(np.float32)            # (HQ, HQ) block-ones (per-head sum)
    return lmask, bd, bones


_LMASK_NP, _BD_NP, _BONES_NP = _np_constants()


# ---------------- exact-erf GELU from supported primitives ----------------------------
def _erf_f32(x):
    # Abramowitz & Stegun 7.1.26 rational approximation, |abs err| < 1.5e-7.
    a1, a2, a3, a4, a5 = 0.254829592, -0.284496736, 1.421413741, -1.453152027, 1.061405429
    p = 0.3275911
    ax = jnp.abs(x)
    t = 1.0 / (1.0 + p * ax)
    poly = ((((a5 * t + a4) * t + a3) * t + a2) * t + a1) * t
    y = 1.0 - poly * jnp.exp(-ax * ax)
    return jnp.where(x >= 0, y, -y)


def _gelu_exact(x):
    return 0.5 * x * (1.0 + _erf_f32(x * np.float32(1.0 / np.sqrt(2.0))))


# ----------------------------- fused Pallas kernel -------------------------------------
def fused_encoder_kernel(x_ref, wp_ref, bp_ref, pos_ref,
                         lmask_ref, bd_ref, bones_ref, *rest):
    """Patch embedding + positional encoding + N_LAYERS TSTEncoderLayers, fully in VMEM.

    x_ref    : [BN*Q, patch_len]
    wp_ref   : [patch_len, D], bp_ref : [1, D]
    pos_ref  : [BN*Q, D]        (W_pos pre-tiled over BN in the wrapper)
    lmask_ref: [Q, HQ]  1.0 where the local-attention mask hits
    bd_ref   : [HQ, HD] block-diagonal 0/1 selector (head h block)
    bones_ref: [HQ, HQ] block-ones 0/1 (per-head softmax denominator)
    rest     : per-layer (wqkv,bqkv,wo,bo,g1,be1,w1,b1,w2,b2,g2,be2)*N_LAYERS, then out_ref.
    """
    *layer_refs, out_ref = rest

    BNQ = x_ref.shape[0]
    D = wp_ref.shape[1]
    Q = PATCH_NUM
    BN = BNQ // Q

    # ---- patch embedding + positional encoding (u = x @ W_P + b_P + W_pos) ----
    u = jnp.dot(x_ref[...], wp_ref[...], preferred_element_type=jnp.float32) + bp_ref[...]
    cur = u + pos_ref[...]                                       # (BN*Q, D)

    is_masked = (lmask_ref[...] > 0.5)[None, :, :]               # (1, Q, HQ) bool
    bd_mask = bd_ref[...]                                        # (HQ, HD)
    blk_ones = bones_ref[...]                                    # (HQ, HQ)

    prev = None                                                  # packed residual scores (BN, Q, HQ)
    for l in range(N_LAYERS):                                    # statically unrolled
        (wqkv_ref, bqkv_ref, wo_ref, bo_ref,
         g1_ref, be1_ref, w1_ref, b1_ref,
         w2_ref, b2_ref, g2_ref, be2_ref) = \
            layer_refs[l * _PER_LAYER_ARGS:(l + 1) * _PER_LAYER_ARGS]

        x2 = cur                                                 # (BN*Q, D)

        # fused Q/K/V projection: one (BN*Q, D) @ (D, 3*HD) matmul
        qkv = (jnp.dot(x2, wqkv_ref[...], preferred_element_type=jnp.float32)
               + bqkv_ref[...])                                  # (BN*Q, 3*HD)
        q3 = qkv[:, :HD].reshape(BN, Q, HD)
        k3 = qkv[:, HD:2 * HD].reshape(BN, Q, HD)
        v3 = qkv[:, 2 * HD:].reshape(BN, Q, HD)

        # block-diagonal head expansion: Kblk[b, h*Q+j, h*dk+d] = k[b, j, h, d] (else 0)
        kblk = jnp.concatenate([k3] * N_HEADS, axis=1) * bd_mask[None, :, :]   # (BN, HQ, HD)
        vblk = jnp.concatenate([v3] * N_HEADS, axis=1) * bd_mask[None, :, :]   # (BN, HQ, HD)

        # all-head scores in one batched einsum, packed lane-dense as (BN, Q, HQ)
        s = jnp.einsum('bqd,bkd->bqk', q3, kblk,
                       preferred_element_type=jnp.float32) * SCALE
        if prev is not None:                                     # residual attention
            s = s + prev
        s = jnp.where(is_masked, NEG_MASK, s)                    # locality mask
        prev = s                                                 # packed scores for next layer

        # per-head softmax: subtracting the per-row (all-head) max is exact per head;
        # per-head denominator via one matmul with the block-ones matrix.
        m = jnp.max(s, axis=-1, keepdims=True)
        p = jnp.exp(s - m)                                       # masked lanes -> 0
        denom = jnp.dot(p.reshape(BNQ, HQ), blk_ones,
                        preferred_element_type=jnp.float32).reshape(BN, Q, HQ)
        r = pl.reciprocal(denom, approx=True)                    # EUP slot
        r = r * (2.0 - denom * r)                                # one Newton step (VPU, slack)
        attn = p * r

        # attn @ V for all heads, already in concatenated [h*dk+d] layout
        o = jnp.einsum('bqk,bkd->bqd', attn, vblk,
                       preferred_element_type=jnp.float32).reshape(BNQ, HD)
        src2 = (jnp.dot(o, wo_ref[...], preferred_element_type=jnp.float32)
                + bo_ref[...])

        # residual + BatchNorm1d over d_model (batch stats over BN*Q, two-pass variance)
        x = x2 + src2
        mu = jnp.mean(x, axis=0, keepdims=True)
        xc = x - mu
        var = jnp.mean(xc * xc, axis=0, keepdims=True)
        x = xc * lax.rsqrt(var + BN_EPS) * g1_ref[...] + be1_ref[...]

        # position-wise feed-forward: Linear -> GELU(exact erf) -> Linear
        h1 = jnp.dot(x, w1_ref[...], preferred_element_type=jnp.float32) + b1_ref[...]
        h1 = _gelu_exact(h1)
        ff = jnp.dot(h1, w2_ref[...], preferred_element_type=jnp.float32) + b2_ref[...]

        # residual + BatchNorm1d
        x = x + ff
        mu = jnp.mean(x, axis=0, keepdims=True)
        xc = x - mu
        var = jnp.mean(xc * xc, axis=0, keepdims=True)
        x = xc * lax.rsqrt(var + BN_EPS) * g2_ref[...] + be2_ref[...]

        cur = x

    out_ref[...] = cur                                           # (BN*Q, D)


# ----------------------------- wrapper --------------------------------------------------
@jax.jit
def tsti_encoder_forward(x, wp, bp, pos, layers):
    bs, nvars, plen, pnum = x.shape
    BN = bs * nvars
    D = wp.shape[1]

    # glue: permute(0,1,3,2) + merge (bs, n_vars) + merge (BN, Q) -> rows
    xp = jnp.transpose(x, (0, 1, 3, 2)).reshape(BN * pnum, plen)
    pos_tiled = jnp.tile(pos, (BN, 1))                           # (BN*Q, D)

    args = [xp, wp, bp.reshape(1, D), pos_tiled,
            jnp.asarray(_LMASK_NP), jnp.asarray(_BD_NP), jnp.asarray(_BONES_NP)]
    for p in layers:
        wqkv = jnp.concatenate([p['wq'], p['wk'], p['wv']], axis=1)       # (D, 3*HD)
        bqkv = jnp.concatenate([p['bq'], p['bk'], p['bv']], axis=0).reshape(1, -1)
        args += [wqkv, bqkv,
                 p['wo'], p['bo'].reshape(1, -1),
                 p['g1'].reshape(1, -1), p['be1'].reshape(1, -1),
                 p['w1'], p['b1'].reshape(1, -1),
                 p['w2'], p['b2'].reshape(1, -1),
                 p['g2'].reshape(1, -1), p['be2'].reshape(1, -1)]

    vmem_spec = pl.BlockSpec(memory_space=pltpu.MemorySpace.VMEM)
    out2d = pl.pallas_call(
        fused_encoder_kernel,
        out_shape=jax.ShapeDtypeStruct((BN * pnum, D), jnp.float32),
        in_specs=[vmem_spec] * len(args),
        out_specs=vmem_spec,
        compiler_params=pltpu.CompilerParams(vmem_limit_bytes=32 * 1024 * 1024),
    )(*args)

    z = out2d.reshape(bs, nvars, pnum, D)
    return jnp.transpose(z, (0, 1, 3, 2))        # [bs, n_vars, d_model, patch_num]


# ----------------------------- pure-JAX reference ---------------------------------------
def _bn_ref(x, g, b):
    BN, Q, D = x.shape
    x2 = x.reshape(BN * Q, D)
    m = x2.mean(0, keepdims=True)
    v = ((x2 - m) ** 2).mean(0, keepdims=True)
    return ((x2 - m) / jnp.sqrt(v + BN_EPS) * g + b).reshape(BN, Q, D)


def reference_forward(x, wp, bp, pos, layers):
    bs, nvars, plen, pnum = x.shape
    xp = jnp.transpose(x, (0, 1, 3, 2)).reshape(bs * nvars, pnum, plen)
    u = xp @ wp + bp + pos[None]
    ii = np.arange(pnum)
    lm = jnp.asarray(np.abs(ii[:, None] - ii[None, :]) < H_WIN)[None, None]
    out, prev = u, None
    for p in layers:
        BN, Q, D = out.shape
        q = (out @ p['wq'] + p['bq']).reshape(BN, Q, N_HEADS, D_K).transpose(0, 2, 1, 3)
        k = (out @ p['wk'] + p['bk']).reshape(BN, Q, N_HEADS, D_K).transpose(0, 2, 1, 3)
        v = (out @ p['wv'] + p['bv']).reshape(BN, Q, N_HEADS, D_K).transpose(0, 2, 1, 3)
        s = jnp.einsum('bhqd,bhkd->bhqk', q, k) * SCALE
        if prev is not None:
            s = s + prev
        s = jnp.where(lm, NEG_INF, s)
        attn = jax.nn.softmax(s, axis=-1)
        o = jnp.einsum('bhqk,bhkd->bhqd', attn, v).transpose(0, 2, 1, 3).reshape(BN, Q, -1)
        src = out + (o @ p['wo'] + p['bo'])
        src = _bn_ref(src, p['g1'], p['be1'])
        ff = jax.nn.gelu(src @ p['w1'] + p['b1'], approximate=False) @ p['w2'] + p['b2']
        src = _bn_ref(src + ff, p['g2'], p['be2'])
        out, prev = src, s
    z = out.reshape(bs, nvars, pnum, D_MODEL)
    return jnp.transpose(z, (0, 1, 3, 2))


# ----------------------------- deterministic init ---------------------------------------
def init_params(key):
    def linear(k, fan_in, fan_out):
        k1, k2 = jax.random.split(k)
        bound = 1.0 / np.sqrt(fan_in)
        w = jax.random.uniform(k1, (fan_in, fan_out), jnp.float32, -bound, bound)
        b = jax.random.uniform(k2, (fan_out,), jnp.float32, -bound, bound)
        return w, b

    keys = jax.random.split(key, 2 + N_LAYERS)
    wp, bp = linear(keys[0], PATCH_LEN, D_MODEL)
    pos = jax.random.uniform(keys[1], (PATCH_NUM, D_MODEL), jnp.float32, -0.02, 0.02)
    layers = []
    for l in range(N_LAYERS):
        lk = jax.random.split(keys[2 + l], 6)
        wq, bq = linear(lk[0], D_MODEL, N_HEADS * D_K)
        wk, bk = linear(lk[1], D_MODEL, N_HEADS * D_K)
        wv, bv = linear(lk[2], D_MODEL, N_HEADS * D_K)
        wo, bo = linear(lk[3], N_HEADS * D_K, D_MODEL)
        w1, b1 = linear(lk[4], D_MODEL, D_FF)
        w2, b2 = linear(lk[5], D_FF, D_MODEL)
        layers.append(dict(
            wq=wq, bq=bq, wk=wk, bk=bk, wv=wv, bv=bv, wo=wo, bo=bo,
            w1=w1, b1=b1, w2=w2, b2=b2,
            g1=jnp.ones((D_MODEL,), jnp.float32), be1=jnp.zeros((D_MODEL,), jnp.float32),
            g2=jnp.ones((D_MODEL,), jnp.float32), be2=jnp.zeros((D_MODEL,), jnp.float32)))
    return wp, bp, pos, layers


# ----------------------------------- main ------------------------------------------------
if __name__ == "__main__":
    key = jax.random.PRNGKey(0)
    kx, kp = jax.random.split(key)
    # x: [bs, n_vars, patch_len, patch_num]
    x = jax.random.normal(kx, (BS, N_VARS, PATCH_LEN, PATCH_NUM), jnp.float32)
    wp, bp, pos, layers = init_params(kp)

    z = tsti_encoder_forward(x, wp, bp, pos, layers)
    z = jax.block_until_ready(z)
    assert z.shape == (BS, N_VARS, D_MODEL, PATCH_NUM)

    z_ref = jax.block_until_ready(reference_forward(x, wp, bp, pos, layers))
    np.testing.assert_allclose(np.asarray(z), np.asarray(z_ref), rtol=2e-3, atol=2e-3)

    print("KERNEL_OK")
</pallas_src>

<mosaic_0001>
module attributes {stable_mosaic.version = 11 : i64} {
  func.func @fused_encoder_kernel(%arg0: memref<64x16xf32, #tpu.memory_space<vmem>>, %arg1: memref<16x32xf32, #tpu.memory_space<vmem>>, %arg2: memref<1x32xf32, #tpu.memory_space<vmem>>, %arg3: memref<64x32xf32, #tpu.memory_space<vmem>>, %arg4: memref<8x32xf32, #tpu.memory_space<vmem>>, %arg5: memref<32x32xf32, #tpu.memory_space<vmem>>, %arg6: memref<32x32xf32, #tpu.memory_space<vmem>>, %arg7: memref<32x96xf32, #tpu.memory_space<vmem>>, %arg8: memref<1x96xf32, #tpu.memory_space<vmem>>, %arg9: memref<32x32xf32, #tpu.memory_space<vmem>>, %arg10: memref<1x32xf32, #tpu.memory_space<vmem>>, %arg11: memref<1x32xf32, #tpu.memory_space<vmem>>, %arg12: memref<1x32xf32, #tpu.memory_space<vmem>>, %arg13: memref<32x64xf32, #tpu.memory_space<vmem>>, %arg14: memref<1x64xf32, #tpu.memory_space<vmem>>, %arg15: memref<64x32xf32, #tpu.memory_space<vmem>>, %arg16: memref<1x32xf32, #tpu.memory_space<vmem>>, %arg17: memref<1x32xf32, #tpu.memory_space<vmem>>, %arg18: memref<1x32xf32, #tpu.memory_space<vmem>>, %arg19: memref<32x96xf32, #tpu.memory_space<vmem>>, %arg20: memref<1x96xf32, #tpu.memory_space<vmem>>, %arg21: memref<32x32xf32, #tpu.memory_space<vmem>>, %arg22: memref<1x32xf32, #tpu.memory_space<vmem>>, %arg23: memref<1x32xf32, #tpu.memory_space<vmem>>, %arg24: memref<1x32xf32, #tpu.memory_space<vmem>>, %arg25: memref<32x64xf32, #tpu.memory_space<vmem>>, %arg26: memref<1x64xf32, #tpu.memory_space<vmem>>, %arg27: memref<64x32xf32, #tpu.memory_space<vmem>>, %arg28: memref<1x32xf32, #tpu.memory_space<vmem>>, %arg29: memref<1x32xf32, #tpu.memory_space<vmem>>, %arg30: memref<1x32xf32, #tpu.memory_space<vmem>>, %arg31: memref<64x32xf32, #tpu.memory_space<vmem>>) attributes {dimension_semantics = [], scalar_prefetch = 0 : i64, scratch_operands = 0 : i64, tpu.core_type = #tpu.core_type<tc>} {
    %c0 = arith.constant 0 : index
    %c0_0 = arith.constant 0 : index
    %0 = vector.load %arg0[%c0, %c0_0] : memref<64x16xf32, #tpu.memory_space<vmem>>, vector<64x16xf32>
    %c0_1 = arith.constant 0 : index
    %c0_2 = arith.constant 0 : index
    %1 = vector.load %arg1[%c0_1, %c0_2] : memref<16x32xf32, #tpu.memory_space<vmem>>, vector<16x32xf32>
    %cst = arith.constant dense<0.000000e+00> : vector<64x32xf32>
    %2 = tpu.matmul %0, %1, %cst {dimension_numbers = #tpu.dot_dimension_numbers<[1], [0], [0], [1], [0, 0, 1, 1], [], []>} : vector<64x16xf32>, vector<16x32xf32>, vector<64x32xf32> -> vector<64x32xf32>
    %c0_3 = arith.constant 0 : index
    %c0_4 = arith.constant 0 : index
    %3 = vector.load %arg2[%c0_3, %c0_4] : memref<1x32xf32, #tpu.memory_space<vmem>>, vector<1x32xf32>
    %4 = vector.broadcast %3 : vector<1x32xf32> to vector<64x32xf32>
    %5 = arith.addf %2, %4 : vector<64x32xf32>
    %c0_5 = arith.constant 0 : index
    %c0_6 = arith.constant 0 : index
    %6 = vector.load %arg3[%c0_5, %c0_6] : memref<64x32xf32, #tpu.memory_space<vmem>>, vector<64x32xf32>
    %7 = arith.addf %5, %6 : vector<64x32xf32>
    %c0_7 = arith.constant 0 : index
    %c0_8 = arith.constant 0 : index
    %8 = vector.load %arg4[%c0_7, %c0_8] : memref<8x32xf32, #tpu.memory_space<vmem>>, vector<8x32xf32>
    %cst_9 = arith.constant 5.000000e-01 : f32
    %9 = vector.broadcast %cst_9 : f32 to vector<8x32xf32>
    %10 = arith.cmpf ogt, %8, %9 : vector<8x32xf32>
    %11 = vector.shape_cast %10 : vector<8x32xi1> to vector<1x8x32xi1>
    %c0_10 = arith.constant 0 : index
    %c0_11 = arith.constant 0 : index
    %12 = vector.load %arg5[%c0_10, %c0_11] : memref<32x32xf32, #tpu.memory_space<vmem>>, vector<32x32xf32>
    %c0_12 = arith.constant 0 : index
    %c0_13 = arith.constant 0 : index
    %13 = vector.load %arg6[%c0_12, %c0_13] : memref<32x32xf32, #tpu.memory_space<vmem>>, vector<32x32xf32>
    %c0_14 = arith.constant 0 : index
    %c0_15 = arith.constant 0 : index
    %14 = vector.load %arg7[%c0_14, %c0_15] : memref<32x96xf32, #tpu.memory_space<vmem>>, vector<32x96xf32>
    %cst_16 = arith.constant dense<0.000000e+00> : vector<64x96xf32>
    %15 = tpu.matmul %7, %14, %cst_16 {dimension_numbers = #tpu.dot_dimension_numbers<[1], [0], [0], [1], [0, 0, 1, 1], [], []>} : vector<64x32xf32>, vector<32x96xf32>, vector<64x96xf32> -> vector<64x96xf32>
    %c0_17 = arith.constant 0 : index
    %c0_18 = arith.constant 0 : index
    %16 = vector.load %arg8[%c0_17, %c0_18] : memref<1x96xf32, #tpu.memory_space<vmem>>, vector<1x96xf32>
    %17 = vector.broadcast %16 : vector<1x96xf32> to vector<64x96xf32>
    %18 = arith.addf %15, %17 : vector<64x96xf32>
    %19 = vector.extract_strided_slice %18 {offsets = [0, 0], sizes = [64, 32], strides = [1, 1]} : vector<64x96xf32> to vector<64x32xf32>
    %20 = vector.shape_cast %19 : vector<64x32xf32> to vector<8x8x32xf32>
    %21 = vector.extract_strided_slice %18 {offsets = [0, 32], sizes = [64, 32], strides = [1, 1]} : vector<64x96xf32> to vector<64x32xf32>
    %22 = vector.shape_cast %21 : vector<64x32xf32> to vector<8x8x32xf32>
    %23 = vector.extract_strided_slice %18 {offsets = [0, 64], sizes = [64, 32], strides = [1, 1]} : vector<64x96xf32> to vector<64x32xf32>
    %24 = vector.shape_cast %23 : vector<64x32xf32> to vector<8x8x32xf32>
    %25 = tpu.concatenate %22, %22, %22, %22 in 1 : vector<8x8x32xf32>, vector<8x8x32xf32>, vector<8x8x32xf32>, vector<8x8x32xf32> -> vector<8x32x32xf32>
    %26 = vector.shape_cast %12 : vector<32x32xf32> to vector<1x32x32xf32>
    %27 = vector.broadcast %26 : vector<1x32x32xf32> to vector<8x32x32xf32>
    %28 = arith.mulf %25, %27 : vector<8x32x32xf32>
    %29 = tpu.concatenate %24, %24, %24, %24 in 1 : vector<8x8x32xf32>, vector<8x8x32xf32>, vector<8x8x32xf32>, vector<8x8x32xf32> -> vector<8x32x32xf32>
    %30 = vector.shape_cast %12 : vector<32x32xf32> to vector<1x32x32xf32>
    %31 = vector.broadcast %30 : vector<1x32x32xf32> to vector<8x32x32xf32>
    %32 = arith.mulf %29, %31 : vector<8x32x32xf32>
    "tpu.trace_start"() <{level = 10 : i32, message = "bqd,bkd->bqk"}> : () -> ()
    %cst_19 = arith.constant dense<0.000000e+00> : vector<8x8x32xf32>
    %33 = tpu.matmul %20, %28, %cst_19 {dimension_numbers = #tpu.dot_dimension_numbers<[2], [2], [1], [1], [0, 0, 0, 1, 1, 1], [0], [0]>} : vector<8x8x32xf32>, vector<8x32x32xf32>, vector<8x8x32xf32> -> vector<8x8x32xf32>
    "tpu.trace_stop"() : () -> ()
    %cst_20 = arith.constant 0.353553385 : f32
    %34 = vector.broadcast %cst_20 : f32 to vector<8x8x32xf32>
    %35 = arith.mulf %33, %34 : vector<8x8x32xf32>
    %cst_21 = arith.constant -1.000000e+30 : f32
    %36 = vector.shape_cast %11 : vector<1x8x32xi1> to vector<1x8x32xi1>
    %37 = vector.broadcast %36 : vector<1x8x32xi1> to vector<8x8x32xi1>
    %38 = vector.broadcast %cst_21 : f32 to vector<8x8x32xf32>
    %39 = arith.select %37, %38, %35 : vector<8x8x32xi1>, vector<8x8x32xf32>
    %cst_22 = arith.constant dense<0xFF800000> : vector<8x8xf32>
    %40 = vector.multi_reduction <maximumf>, %39, %cst_22 [2] : vector<8x8x32xf32> to vector<8x8xf32>
    %41 = vector.shape_cast %40 : vector<8x8xf32> to vector<8x8x1xf32>
    %42 = vector.broadcast %41 : vector<8x8x1xf32> to vector<8x8x32xf32>
    %43 = arith.subf %39, %42 : vector<8x8x32xf32>
    %44 = math.exp %43 : vector<8x8x32xf32>
    %45 = vector.shape_cast %44 : vector<8x8x32xf32> to vector<64x32xf32>
    %cst_23 = arith.constant dense<0.000000e+00> : vector<64x32xf32>
    %46 = tpu.matmul %45, %13, %cst_23 {dimension_numbers = #tpu.dot_dimension_numbers<[1], [0], [0], [1], [0, 0, 1, 1], [], []>} : vector<64x32xf32>, vector<32x32xf32>, vector<64x32xf32> -> vector<64x32xf32>
    %47 = vector.shape_cast %46 : vector<64x32xf32> to vector<8x8x32xf32>
    %48 = tpu.reciprocal %47 {approx = true} : vector<8x8x32xf32> -> vector<8x8x32xf32>
    %49 = arith.mulf %47, %48 : vector<8x8x32xf32>
    %cst_24 = arith.constant 2.000000e+00 : f32
    %50 = vector.broadcast %cst_24 : f32 to vector<8x8x32xf32>
    %51 = arith.subf %50, %49 : vector<8x8x32xf32>
    %52 = arith.mulf %48, %51 : vector<8x8x32xf32>
    %53 = arith.mulf %44, %52 : vector<8x8x32xf32>
    "tpu.trace_start"() <{level = 10 : i32, message = "bqk,bkd->bqd"}> : () -> ()
    %cst_25 = arith.constant dense<0.000000e+00> : vector<8x8x32xf32>
    %54 = tpu.matmul %53, %32, %cst_25 {dimension_numbers = #tpu.dot_dimension_numbers<[2], [1], [1], [2], [0, 0, 0, 1, 1, 2], [0], [0]>} : vector<8x8x32xf32>, vector<8x32x32xf32>, vector<8x8x32xf32> -> vector<8x8x32xf32>
    "tpu.trace_stop"() : () -> ()
    %55 = vector.shape_cast %54 : vector<8x8x32xf32> to vector<64x32xf32>
    %c0_26 = arith.constant 0 : index
    %c0_27 = arith.constant 0 : index
    %56 = vector.load %arg9[%c0_26, %c0_27] : memref<32x32xf32, #tpu.memory_space<vmem>>, vector<32x32xf32>
    %cst_28 = arith.constant dense<0.000000e+00> : vector<64x32xf32>
    %57 = tpu.matmul %55, %56, %cst_28 {dimension_numbers = #tpu.dot_dimension_numbers<[1], [0], [0], [1], [0, 0, 1, 1], [], []>} : vector<64x32xf32>, vector<32x32xf32>, vector<64x32xf32> -> vector<64x32xf32>
    %c0_29 = arith.constant 0 : index
    %c0_30 = arith.constant 0 : index
    %58 = vector.load %arg10[%c0_29, %c0_30] : memref<1x32xf32, #tpu.memory_space<vmem>>, vector<1x32xf32>
    %59 = vector.broadcast %58 : vector<1x32xf32> to vector<64x32xf32>
    %60 = arith.addf %57, %59 : vector<64x32xf32>
    %61 = arith.addf %7, %60 : vector<64x32xf32>
    %cst_31 = arith.constant dense<0.000000e+00> : vector<32xf32>
    %62 = vector.multi_reduction <add>, %61, %cst_31 [0] : vector<64x32xf32> to vector<32xf32>
    %63 = vector.shape_cast %62 : vector<32xf32> to vector<1x32xf32>
    %cst_32 = arith.constant 6.400000e+01 : f32
    %64 = vector.broadcast %cst_32 : f32 to vector<1x32xf32>
    %65 = arith.divf %63, %64 : vector<1x32xf32>
    %66 = vector.broadcast %65 : vector<1x32xf32> to vector<64x32xf32>
    %67 = arith.subf %61, %66 : vector<64x32xf32>
    %68 = arith.mulf %67, %67 : vector<64x32xf32>
    %cst_33 = arith.constant dense<0.000000e+00> : vector<32xf32>
    %69 = vector.multi_reduction <add>, %68, %cst_33 [0] : vector<64x32xf32> to vector<32xf32>
    %70 = vector.shape_cast %69 : vector<32xf32> to vector<1x32xf32>
    %cst_34 = arith.constant 6.400000e+01 : f32
    %71 = vector.broadcast %cst_34 : f32 to vector<1x32xf32>
    %72 = arith.divf %70, %71 : vector<1x32xf32>
    %cst_35 = arith.constant 9.99999974E-6 : f32
    %73 = vector.broadcast %cst_35 : f32 to vector<1x32xf32>
    %74 = arith.addf %72, %73 : vector<1x32xf32>
    %75 = math.rsqrt %74 : vector<1x32xf32>
    %76 = vector.broadcast %75 : vector<1x32xf32> to vector<64x32xf32>
    %77 = arith.mulf %67, %76 : vector<64x32xf32>
    %c0_36 = arith.constant 0 : index
    %c0_37 = arith.constant 0 : index
    %78 = vector.load %arg11[%c0_36, %c0_37] : memref<1x32xf32, #tpu.memory_space<vmem>>, vector<1x32xf32>
    %79 = vector.broadcast %78 : vector<1x32xf32> to vector<64x32xf32>
    %80 = arith.mulf %77, %79 : vector<64x32xf32>
    %c0_38 = arith.constant 0 : index
    %c0_39 = arith.constant 0 : index
    %81 = vector.load %arg12[%c0_38, %c0_39] : memref<1x32xf32, #tpu.memory_space<vmem>>, vector<1x32xf32>
    %82 = vector.broadcast %81 : vector<1x32xf32> to vector<64x32xf32>
    %83 = arith.addf %80, %82 : vector<64x32xf32>
    %c0_40 = arith.constant 0 : index
    %c0_41 = arith.constant 0 : index
    %84 = vector.load %arg13[%c0_40, %c0_41] : memref<32x64xf32, #tpu.memory_space<vmem>>, vector<32x64xf32>
    %cst_42 = arith.constant dense<0.000000e+00> : vector<64x64xf32>
    %85 = tpu.matmul %83, %84, %cst_42 {dimension_numbers = #tpu.dot_dimension_numbers<[1], [0], [0], [1], [0, 0, 1, 1], [], []>} : vector<64x32xf32>, vector<32x64xf32>, vector<64x64xf32> -> vector<64x64xf32>
    %c0_43 = arith.constant 0 : index
    %c0_44 = arith.constant 0 : index
    %86 = vector.load %arg14[%c0_43, %c0_44] : memref<1x64xf32, #tpu.memory_space<vmem>>, vector<1x64xf32>
    %87 = vector.broadcast %86 : vector<1x64xf32> to vector<64x64xf32>
    %88 = arith.addf %85, %87 : vector<64x64xf32>
    %cst_45 = arith.constant 5.000000e-01 : f32
    %89 = vector.broadcast %cst_45 : f32 to vector<64x64xf32>
    %90 = arith.mulf %89, %88 : vector<64x64xf32>
    %cst_46 = arith.constant 0.707106769 : f32
    %91 = vector.broadcast %cst_46 : f32 to vector<64x64xf32>
    %92 = arith.mulf %88, %91 : vector<64x64xf32>
    %93 = math.absf %92 : vector<64x64xf32>
    %cst_47 = arith.constant 0.327591091 : f32
    %94 = vector.broadcast %cst_47 : f32 to vector<64x64xf32>
    %95 = arith.mulf %94, %93 : vector<64x64xf32>
    %cst_48 = arith.constant 1.000000e+00 : f32
    %96 = vector.broadcast %cst_48 : f32 to vector<64x64xf32>
    %97 = arith.addf %96, %95 : vector<64x64xf32>
    %cst_49 = arith.constant 1.000000e+00 : f32
    %98 = vector.broadcast %cst_49 : f32 to vector<64x64xf32>
    %99 = arith.divf %98, %97 : vector<64x64xf32>
    %cst_50 = arith.constant 1.06140542 : f32
    %100 = vector.broadcast %cst_50 : f32 to vector<64x64xf32>
    %101 = arith.mulf %100, %99 : vector<64x64xf32>
    %cst_51 = arith.constant -1.45315206 : f32
    %102 = vector.broadcast %cst_51 : f32 to vector<64x64xf32>
    %103 = arith.addf %101, %102 : vector<64x64xf32>
    %104 = arith.mulf %103, %99 : vector<64x64xf32>
    %cst_52 = arith.constant 1.42141378 : f32
    %105 = vector.broadcast %cst_52 : f32 to vector<64x64xf32>
    %106 = arith.addf %104, %105 : vector<64x64xf32>
    %107 = arith.mulf %106, %99 : vector<64x64xf32>
    %cst_53 = arith.constant -0.284496725 : f32
    %108 = vector.broadcast %cst_53 : f32 to vector<64x64xf32>
    %109 = arith.addf %107, %108 : vector<64x64xf32>
    %110 = arith.mulf %109, %99 : vector<64x64xf32>
    %cst_54 = arith.constant 0.254829586 : f32
    %111 = vector.broadcast %cst_54 : f32 to vector<64x64xf32>
    %112 = arith.addf %110, %111 : vector<64x64xf32>
    %113 = arith.mulf %112, %99 : vector<64x64xf32>
    %cst_55 = arith.constant 0.000000e+00 : f32
    %114 = vector.broadcast %cst_55 : f32 to vector<64x64xf32>
    %115 = arith.subf %114, %93 : vector<64x64xf32>
    %116 = arith.mulf %115, %93 : vector<64x64xf32>
    %117 = math.exp %116 : vector<64x64xf32>
    %118 = arith.mulf %113, %117 : vector<64x64xf32>
    %cst_56 = arith.constant 1.000000e+00 : f32
    %119 = vector.broadcast %cst_56 : f32 to vector<64x64xf32>
    %120 = arith.subf %119, %118 : vector<64x64xf32>
    %cst_57 = arith.constant 0.000000e+00 : f32
    %121 = vector.broadcast %cst_57 : f32 to vector<64x64xf32>
    %122 = arith.cmpf oge, %92, %121 : vector<64x64xf32>
    %cst_58 = arith.constant 0.000000e+00 : f32
    %123 = vector.broadcast %cst_58 : f32 to vector<64x64xf32>
    %124 = arith.subf %123, %120 : vector<64x64xf32>
    %125 = arith.select %122, %120, %124 : vector<64x64xi1>, vector<64x64xf32>
    %cst_59 = arith.constant 1.000000e+00 : f32
    %126 = vector.broadcast %cst_59 : f32 to vector<64x64xf32>
    %127 = arith.addf %126, %125 : vector<64x64xf32>
    %128 = arith.mulf %90, %127 : vector<64x64xf32>
    %c0_60 = arith.constant 0 : index
    %c0_61 = arith.constant 0 : index
    %129 = vector.load %arg15[%c0_60, %c0_61] : memref<64x32xf32, #tpu.memory_space<vmem>>, vector<64x32xf32>
    %cst_62 = arith.constant dense<0.000000e+00> : vector<64x32xf32>
    %130 = tpu.matmul %128, %129, %cst_62 {dimension_numbers = #tpu.dot_dimension_numbers<[1], [0], [0], [1], [0, 0, 1, 1], [], []>} : vector<64x64xf32>, vector<64x32xf32>, vector<64x32xf32> -> vector<64x32xf32>
    %c0_63 = arith.constant 0 : index
    %c0_64 = arith.constant 0 : index
    %131 = vector.load %arg16[%c0_63, %c0_64] : memref<1x32xf32, #tpu.memory_space<vmem>>, vector<1x32xf32>
    %132 = vector.broadcast %131 : vector<1x32xf32> to vector<64x32xf32>
    %133 = arith.addf %130, %132 : vector<64x32xf32>
    %134 = arith.addf %83, %133 : vector<64x32xf32>
    %cst_65 = arith.constant dense<0.000000e+00> : vector<32xf32>
    %135 = vector.multi_reduction <add>, %134, %cst_65 [0] : vector<64x32xf32> to vector<32xf32>
    %136 = vector.shape_cast %135 : vector<32xf32> to vector<1x32xf32>
    %cst_66 = arith.constant 6.400000e+01 : f32
    %137 = vector.broadcast %cst_66 : f32 to vector<1x32xf32>
    %138 = arith.divf %136, %137 : vector<1x32xf32>
    %139 = vector.broadcast %138 : vector<1x32xf32> to vector<64x32xf32>
    %140 = arith.subf %134, %139 : vector<64x32xf32>
    %141 = arith.mulf %140, %140 : vector<64x32xf32>
    %cst_67 = arith.constant dense<0.000000e+00> : vector<32xf32>
    %142 = vector.multi_reduction <add>, %141, %cst_67 [0] : vector<64x32xf32> to vector<32xf32>
    %143 = vector.shape_cast %142 : vector<32xf32> to vector<1x32xf32>
    %cst_68 = arith.constant 6.400000e+01 : f32
    %144 = vector.broadcast %cst_68 : f32 to vector<1x32xf32>
    %145 = arith.divf %143, %144 : vector<1x32xf32>
    %cst_69 = arith.constant 9.99999974E-6 : f32
    %146 = vector.broadcast %cst_69 : f32 to vector<1x32xf32>
    %147 = arith.addf %145, %146 : vector<1x32xf32>
    %148 = math.rsqrt %147 : vector<1x32xf32>
    %149 = vector.broadcast %148 : vector<1x32xf32> to vector<64x32xf32>
    %150 = arith.mulf %140, %149 : vector<64x32xf32>
    %c0_70 = arith.constant 0 : index
    %c0_71 = arith.constant 0 : index
    %151 = vector.load %arg17[%c0_70, %c0_71] : memref<1x32xf32, #tpu.memory_space<vmem>>, vector<1x32xf32>
    %152 = vector.broadcast %151 : vector<1x32xf32> to vector<64x32xf32>
    %153 = arith.mulf %150, %152 : vector<64x32xf32>
    %c0_72 = arith.constant 0 : index
    %c0_73 = arith.constant 0 : index
    %154 = vector.load %arg18[%c0_72, %c0_73] : memref<1x32xf32, #tpu.memory_space<vmem>>, vector<1x32xf32>
    %155 = vector.broadcast %154 : vector<1x32xf32> to vector<64x32xf32>
    %156 = arith.addf %153, %155 : vector<64x32xf32>
    %c0_74 = arith.constant 0 : index
    %c0_75 = arith.constant 0 : index
    %157 = vector.load %arg19[%c0_74, %c0_75] : memref<32x96xf32, #tpu.memory_space<vmem>>, vector<32x96xf32>
    %cst_76 = arith.constant dense<0.000000e+00> : vector<64x96xf32>
    %158 = tpu.matmul %156, %157, %cst_76 {dimension_numbers = #tpu.dot_dimension_numbers<[1], [0], [0], [1], [0, 0, 1, 1], [], []>} : vector<64x32xf32>, vector<32x96xf32>, vector<64x96xf32> -> vector<64x96xf32>
    %c0_77 = arith.constant 0 : index
    %c0_78 = arith.constant 0 : index
    %159 = vector.load %arg20[%c0_77, %c0_78] : memref<1x96xf32, #tpu.memory_space<vmem>>, vector<1x96xf32>
    %160 = vector.broadcast %159 : vector<1x96xf32> to vector<64x96xf32>
    %161 = arith.addf %158, %160 : vector<64x96xf32>
    %162 = vector.extract_strided_slice %161 {offsets = [0, 0], sizes = [64, 32], strides = [1, 1]} : vector<64x96xf32> to vector<64x32xf32>
    %163 = vector.shape_cast %162 : vector<64x32xf32> to vector<8x8x32xf32>
    %164 = vector.extract_strided_slice %161 {offsets = [0, 32], sizes = [64, 32], strides = [1, 1]} : vector<64x96xf32> to vector<64x32xf32>
    %165 = vector.shape_cast %164 : vector<64x32xf32> to vector<8x8x32xf32>
    %166 = vector.extract_strided_slice %161 {offsets = [0, 64], sizes = [64, 32], strides = [1, 1]} : vector<64x96xf32> to vector<64x32xf32>
    %167 = vector.shape_cast %166 : vector<64x32xf32> to vector<8x8x32xf32>
    %168 = tpu.concatenate %165, %165, %165, %165 in 1 : vector<8x8x32xf32>, vector<8x8x32xf32>, vector<8x8x32xf32>, vector<8x8x32xf32> -> vector<8x32x32xf32>
    %169 = vector.shape_cast %12 : vector<32x32xf32> to vector<1x32x32xf32>
    %170 = vector.broadcast %169 : vector<1x32x32xf32> to vector<8x32x32xf32>
    %171 = arith.mulf %168, %170 : vector<8x32x32xf32>
    %172 = tpu.concatenate %167, %167, %167, %167 in 1 : vector<8x8x32xf32>, vector<8x8x32xf32>, vector<8x8x32xf32>, vector<8x8x32xf32> -> vector<8x32x32xf32>
    %173 = vector.shape_cast %12 : vector<32x32xf32> to vector<1x32x32xf32>
    %174 = vector.broadcast %173 : vector<1x32x32xf32> to vector<8x32x32xf32>
    %175 = arith.mulf %172, %174 : vector<8x32x32xf32>
    "tpu.trace_start"() <{level = 10 : i32, message = "bqd,bkd->bqk"}> : () -> ()
    %cst_79 = arith.constant dense<0.000000e+00> : vector<8x8x32xf32>
    %176 = tpu.matmul %163, %171, %cst_79 {dimension_numbers = #tpu.dot_dimension_numbers<[2], [2], [1], [1], [0, 0, 0, 1, 1, 1], [0], [0]>} : vector<8x8x32xf32>, vector<8x32x32xf32>, vector<8x8x32xf32> -> vector<8x8x32xf32>
    "tpu.trace_stop"() : () -> ()
    %cst_80 = arith.constant 0.353553385 : f32
    %177 = vector.broadcast %cst_80 : f32 to vector<8x8x32xf32>
    %178 = arith.mulf %176, %177 : vector<8x8x32xf32>
    %179 = arith.addf %178, %39 : vector<8x8x32xf32>
    %cst_81 = arith.constant -1.000000e+30 : f32
    %180 = vector.shape_cast %11 : vector<1x8x32xi1> to vector<1x8x32xi1>
    %181 = vector.broadcast %180 : vector<1x8x32xi1> to vector<8x8x32xi1>
    %182 = vector.broadcast %cst_81 : f32 to vector<8x8x32xf32>
    %183 = arith.select %181, %182, %179 : vector<8x8x32xi1>, vector<8x8x32xf32>
    %cst_82 = arith.constant dense<0xFF800000> : vector<8x8xf32>
    %184 = vector.multi_reduction <maximumf>, %183, %cst_82 [2] : vector<8x8x32xf32> to vector<8x8xf32>
    %185 = vector.shape_cast %184 : vector<8x8xf32> to vector<8x8x1xf32>
    %186 = vector.broadcast %185 : vector<8x8x1xf32> to vector<8x8x32xf32>
    %187 = arith.subf %183, %186 : vector<8x8x32xf32>
    %188 = math.exp %187 : vector<8x8x32xf32>
    %189 = vector.shape_cast %188 : vector<8x8x32xf32> to vector<64x32xf32>
    %cst_83 = arith.constant dense<0.000000e+00> : vector<64x32xf32>
    %190 = tpu.matmul %189, %13, %cst_83 {dimension_numbers = #tpu.dot_dimension_numbers<[1], [0], [0], [1], [0, 0, 1, 1], [], []>} : vector<64x32xf32>, vector<32x32xf32>, vector<64x32xf32> -> vector<64x32xf32>
    %191 = vector.shape_cast %190 : vector<64x32xf32> to vector<8x8x32xf32>
    %192 = tpu.reciprocal %191 {approx = true} : vector<8x8x32xf32> -> vector<8x8x32xf32>
    %193 = arith.mulf %191, %192 : vector<8x8x32xf32>
    %cst_84 = arith.constant 2.000000e+00 : f32
    %194 = vector.broadcast %cst_84 : f32 to vector<8x8x32xf32>
    %195 = arith.subf %194, %193 : vector<8x8x32xf32>
    %196 = arith.mulf %192, %195 : vector<8x8x32xf32>
    %197 = arith.mulf %188, %196 : vector<8x8x32xf32>
    "tpu.trace_start"() <{level = 10 : i32, message = "bqk,bkd->bqd"}> : () -> ()
    %cst_85 = arith.constant dense<0.000000e+00> : vector<8x8x32xf32>
    %198 = tpu.matmul %197, %175, %cst_85 {dimension_numbers = #tpu.dot_dimension_numbers<[2], [1], [1], [2], [0, 0, 0, 1, 1, 2], [0], [0]>} : vector<8x8x32xf32>, vector<8x32x32xf32>, vector<8x8x32xf32> -> vector<8x8x32xf32>
    "tpu.trace_stop"() : () -> ()
    %199 = vector.shape_cast %198 : vector<8x8x32xf32> to vector<64x32xf32>
    %c0_86 = arith.constant 0 : index
    %c0_87 = arith.constant 0 : index
    %200 = vector.load %arg21[%c0_86, %c0_87] : memref<32x32xf32, #tpu.memory_space<vmem>>, vector<32x32xf32>
    %cst_88 = arith.constant dense<0.000000e+00> : vector<64x32xf32>
    %201 = tpu.matmul %199, %200, %cst_88 {dimension_numbers = #tpu.dot_dimension_numbers<[1], [0], [0], [1], [0, 0, 1, 1], [], []>} : vector<64x32xf32>, vector<32x32xf32>, vector<64x32xf32> -> vector<64x32xf32>
    %c0_89 = arith.constant 0 : index
    %c0_90 = arith.constant 0 : index
    %202 = vector.load %arg22[%c0_89, %c0_90] : memref<1x32xf32, #tpu.memory_space<vmem>>, vector<1x32xf32>
    %203 = vector.broadcast %202 : vector<1x32xf32> to vector<64x32xf32>
    %204 = arith.addf %201, %203 : vector<64x32xf32>
    %205 = arith.addf %156, %204 : vector<64x32xf32>
    %cst_91 = arith.constant dense<0.000000e+00> : vector<32xf32>
    %206 = vector.multi_reduction <add>, %205, %cst_91 [0] : vector<64x32xf32> to vector<32xf32>
    %207 = vector.shape_cast %206 : vector<32xf32> to vector<1x32xf32>
    %cst_92 = arith.constant 6.400000e+01 : f32
    %208 = vector.broadcast %cst_92 : f32 to vector<1x32xf32>
    %209 = arith.divf %207, %208 : vector<1x32xf32>
    %210 = vector.broadcast %209 : vector<1x32xf32> to vector<64x32xf32>
    %211 = arith.subf %205, %210 : vector<64x32xf32>
    %212 = arith.mulf %211, %211 : vector<64x32xf32>
    %cst_93 = arith.constant dense<0.000000e+00> : vector<32xf32>
    %213 = vector.multi_reduction <add>, %212, %cst_93 [0] : vector<64x32xf32> to vector<32xf32>
    %214 = vector.shape_cast %213 : vector<32xf32> to vector<1x32xf32>
    %cst_94 = arith.constant 6.400000e+01 : f32
    %215 = vector.broadcast %cst_94 : f32 to vector<1x32xf32>
    %216 = arith.divf %214, %215 : vector<1x32xf32>
    %cst_95 = arith.constant 9.99999974E-6 : f32
    %217 = vector.broadcast %cst_95 : f32 to vector<1x32xf32>
    %218 = arith.addf %216, %217 : vector<1x32xf32>
    %219 = math.rsqrt %218 : vector<1x32xf32>
    %220 = vector.broadcast %219 : vector<1x32xf32> to vector<64x32xf32>
    %221 = arith.mulf %211, %220 : vector<64x32xf32>
    %c0_96 = arith.constant 0 : index
    %c0_97 = arith.constant 0 : index
    %222 = vector.load %arg23[%c0_96, %c0_97] : memref<1x32xf32, #tpu.memory_space<vmem>>, vector<1x32xf32>
    %223 = vector.broadcast %222 : vector<1x32xf32> to vector<64x32xf32>
    %224 = arith.mulf %221, %223 : vector<64x32xf32>
    %c0_98 = arith.constant 0 : index
    %c0_99 = arith.constant 0 : index
    %225 = vector.load %arg24[%c0_98, %c0_99] : memref<1x32xf32, #tpu.memory_space<vmem>>, vector<1x32xf32>
    %226 = vector.broadcast %225 : vector<1x32xf32> to vector<64x32xf32>
    %227 = arith.addf %224, %226 : vector<64x32xf32>
    %c0_100 = arith.constant 0 : index
    %c0_101 = arith.constant 0 : index
    %228 = vector.load %arg25[%c0_100, %c0_101] : memref<32x64xf32, #tpu.memory_space<vmem>>, vector<32x64xf32>
    %cst_102 = arith.constant dense<0.000000e+00> : vector<64x64xf32>
    %229 = tpu.matmul %227, %228, %cst_102 {dimension_numbers = #tpu.dot_dimension_numbers<[1], [0], [0], [1], [0, 0, 1, 1], [], []>} : vector<64x32xf32>, vector<32x64xf32>, vector<64x64xf32> -> vector<64x64xf32>
    %c0_103 = arith.constant 0 : index
    %c0_104 = arith.constant 0 : index
    %230 = vector.load %arg26[%c0_103, %c0_104] : memref<1x64xf32, #tpu.memory_space<vmem>>, vector<1x64xf32>
    %231 = vector.broadcast %230 : vector<1x64xf32> to vector<64x64xf32>
    %232 = arith.addf %229, %231 : vector<64x64xf32>
    %cst_105 = arith.constant 5.000000e-01 : f32
    %233 = vector.broadcast %cst_105 : f32 to vector<64x64xf32>
    %234 = arith.mulf %233, %232 : vector<64x64xf32>
    %cst_106 = arith.constant 0.707106769 : f32
    %235 = vector.broadcast %cst_106 : f32 to vector<64x64xf32>
    %236 = arith.mulf %232, %235 : vector<64x64xf32>
    %237 = math.absf %236 : vector<64x64xf32>
    %cst_107 = arith.constant 0.327591091 : f32
    %238 = vector.broadcast %cst_107 : f32 to vector<64x64xf32>
    %239 = arith.mulf %238, %237 : vector<64x64xf32>
    %cst_108 = arith.constant 1.000000e+00 : f32
    %240 = vector.broadcast %cst_108 : f32 to vector<64x64xf32>
    %241 = arith.addf %240, %239 : vector<64x64xf32>
    %cst_109 = arith.constant 1.000000e+00 : f32
    %242 = vector.broadcast %cst_109 : f32 to vector<64x64xf32>
    %243 = arith.divf %242, %241 : vector<64x64xf32>
    %cst_110 = arith.constant 1.06140542 : f32
    %244 = vector.broadcast %cst_110 : f32 to vector<64x64xf32>
    %245 = arith.mulf %244, %243 : vector<64x64xf32>
    %cst_111 = arith.constant -1.45315206 : f32
    %246 = vector.broadcast %cst_111 : f32 to vector<64x64xf32>
    %247 = arith.addf %245, %246 : vector<64x64xf32>
    %248 = arith.mulf %247, %243 : vector<64x64xf32>
    %cst_112 = arith.constant 1.42141378 : f32
    %249 = vector.broadcast %cst_112 : f32 to vector<64x64xf32>
    %250 = arith.addf %248, %249 : vector<64x64xf32>
    %251 = arith.mulf %250, %243 : vector<64x64xf32>
    %cst_113 = arith.constant -0.284496725 : f32
    %252 = vector.broadcast %cst_113 : f32 to vector<64x64xf32>
    %253 = arith.addf %251, %252 : vector<64x64xf32>
    %254 = arith.mulf %253, %243 : vector<64x64xf32>
    %cst_114 = arith.constant 0.254829586 : f32
    %255 = vector.broadcast %cst_114 : f32 to vector<64x64xf32>
    %256 = arith.addf %254, %255 : vector<64x64xf32>
    %257 = arith.mulf %256, %243 : vector<64x64xf32>
    %cst_115 = arith.constant 0.000000e+00 : f32
    %258 = vector.broadcast %cst_115 : f32 to vector<64x64xf32>
    %259 = arith.subf %258, %237 : vector<64x64xf32>
    %260 = arith.mulf %259, %237 : vector<64x64xf32>
    %261 = math.exp %260 : vector<64x64xf32>
    %262 = arith.mulf %257, %261 : vector<64x64xf32>
    %cst_116 = arith.constant 1.000000e+00 : f32
    %263 = vector.broadcast %cst_116 : f32 to vector<64x64xf32>
    %264 = arith.subf %263, %262 : vector<64x64xf32>
    %cst_117 = arith.constant 0.000000e+00 : f32
    %265 = vector.broadcast %cst_117 : f32 to vector<64x64xf32>
    %266 = arith.cmpf oge, %236, %265 : vector<64x64xf32>
    %cst_118 = arith.constant 0.000000e+00 : f32
    %267 = vector.broadcast %cst_118 : f32 to vector<64x64xf32>
    %268 = arith.subf %267, %264 : vector<64x64xf32>
    %269 = arith.select %266, %264, %268 : vector<64x64xi1>, vector<64x64xf32>
    %cst_119 = arith.constant 1.000000e+00 : f32
    %270 = vector.broadcast %cst_119 : f32 to vector<64x64xf32>
    %271 = arith.addf %270, %269 : vector<64x64xf32>
    %272 = arith.mulf %234, %271 : vector<64x64xf32>
    %c0_120 = arith.constant 0 : index
    %c0_121 = arith.constant 0 : index
    %273 = vector.load %arg27[%c0_120, %c0_121] : memref<64x32xf32, #tpu.memory_space<vmem>>, vector<64x32xf32>
    %cst_122 = arith.constant dense<0.000000e+00> : vector<64x32xf32>
    %274 = tpu.matmul %272, %273, %cst_122 {dimension_numbers = #tpu.dot_dimension_numbers<[1], [0], [0], [1], [0, 0, 1, 1], [], []>} : vector<64x64xf32>, vector<64x32xf32>, vector<64x32xf32> -> vector<64x32xf32>
    %c0_123 = arith.constant 0 : index
    %c0_124 = arith.constant 0 : index
    %275 = vector.load %arg28[%c0_123, %c0_124] : memref<1x32xf32, #tpu.memory_space<vmem>>, vector<1x32xf32>
    %276 = vector.broadcast %275 : vector<1x32xf32> to vector<64x32xf32>
    %277 = arith.addf %274, %276 : vector<64x32xf32>
    %278 = arith.addf %227, %277 : vector<64x32xf32>
    %cst_125 = arith.constant dense<0.000000e+00> : vector<32xf32>
    %279 = vector.multi_reduction <add>, %278, %cst_125 [0] : vector<64x32xf32> to vector<32xf32>
    %280 = vector.shape_cast %279 : vector<32xf32> to vector<1x32xf32>
    %cst_126 = arith.constant 6.400000e+01 : f32
    %281 = vector.broadcast %cst_126 : f32 to vector<1x32xf32>
    %282 = arith.divf %280, %281 : vector<1x32xf32>
    %283 = vector.broadcast %282 : vector<1x32xf32> to vector<64x32xf32>
    %284 = arith.subf %278, %283 : vector<64x32xf32>
    %285 = arith.mulf %284, %284 : vector<64x32xf32>
    %cst_127 = arith.constant dense<0.000000e+00> : vector<32xf32>
    %286 = vector.multi_reduction <add>, %285, %cst_127 [0] : vector<64x32xf32> to vector<32xf32>
    %287 = vector.shape_cast %286 : vector<32xf32> to vector<1x32xf32>
    %cst_128 = arith.constant 6.400000e+01 : f32
    %288 = vector.broadcast %cst_128 : f32 to vector<1x32xf32>
    %289 = arith.divf %287, %288 : vector<1x32xf32>
    %cst_129 = arith.constant 9.99999974E-6 : f32
    %290 = vector.broadcast %cst_129 : f32 to vector<1x32xf32>
    %291 = arith.addf %289, %290 : vector<1x32xf32>
    %292 = math.rsqrt %291 : vector<1x32xf32>
    %293 = vector.broadcast %292 : vector<1x32xf32> to vector<64x32xf32>
    %294 = arith.mulf %284, %293 : vector<64x32xf32>
    %c0_130 = arith.constant 0 : index
    %c0_131 = arith.constant 0 : index
    %295 = vector.load %arg29[%c0_130, %c0_131] : memref<1x32xf32, #tpu.memory_space<vmem>>, vector<1x32xf32>
    %296 = vector.broadcast %295 : vector<1x32xf32> to vector<64x32xf32>
    %297 = arith.mulf %294, %296 : vector<64x32xf32>
    %c0_132 = arith.constant 0 : index
    %c0_133 = arith.constant 0 : index
    %298 = vector.load %arg30[%c0_132, %c0_133] : memref<1x32xf32, #tpu.memory_space<vmem>>, vector<1x32xf32>
    %299 = vector.broadcast %298 : vector<1x32xf32> to vector<64x32xf32>
    %300 = arith.addf %297, %299 : vector<64x32xf32>
    %c0_134 = arith.constant 0 : index
    %c0_135 = arith.constant 0 : index
    %301 = vector.load %arg31[%c0_134, %c0_135] : memref<64x32xf32, #tpu.memory_space<vmem>>, vector<64x32xf32>
    tpu.vector_store %arg31[%c0_134, %c0_135], %300 {strides = array<i32>} : memref<64x32xf32, #tpu.memory_space<vmem>>, vector<64x32xf32>,
    return
  }
}

</mosaic_0001>

<llo_original>
// kernel: tsti_encoder_forward.1
$region0: #{tsti_encoder_forward.1}
  #allocation0 [shape = 'u32[]', space=smem, size = 0x4, offset = 0x4, fixed_abs, tag = 'smem constant byte address 0x4 - core index']
  #allocation1 [shape = 'u32[72,128]{1,0:T(1,128)}', space=vmem, size = 0x9000, scoped, tag = 'internal scratch']
  %s0 = inlined_call_operand.smem [shape: u32[32], index: -1, kind: input, shape index: {}]
  %s1 = sld [smem:[%s0]]
  %s2 = scalar_lea.smem %s0, 1
  %s3 = sld [smem:[%s2]]
  %s4 = scalar_lea.smem %s0, 2
  %s5 = sld [smem:[%s4]]
  %s6 = scalar_lea.smem %s0, 3
  %s7 = sld [smem:[%s6]]
  %s8 = scalar_lea.smem %s0, 4
  %s9 = sld [smem:[%s8]]
  %s10 = scalar_lea.smem %s0, 5
  %s11 = sld [smem:[%s10]]
  %s12 = scalar_lea.smem %s0, 6
  %s13 = sld [smem:[%s12]]
  %s14 = scalar_lea.smem %s0, 7
  %s15 = sld [smem:[%s14]]
  %s16 = scalar_lea.smem %s0, 8
  %s17 = sld [smem:[%s16]]
  %s18 = scalar_lea.smem %s0, 9
  %s19 = sld [smem:[%s18]]
  %s20 = scalar_lea.smem %s0, 10
  %s21 = sld [smem:[%s20]]
  %s22 = scalar_lea.smem %s0, 11
  %s23 = sld [smem:[%s22]]
  %s24 = scalar_lea.smem %s0, 12
  %s25 = sld [smem:[%s24]]
  %s26 = scalar_lea.smem %s0, 13
  %s27 = sld [smem:[%s26]]
  %s28 = scalar_lea.smem %s0, 14
  %s29 = sld [smem:[%s28]]
  %s30 = scalar_lea.smem %s0, 15
  %s31 = sld [smem:[%s30]]
  %s32 = scalar_lea.smem %s0, 16
  %s33 = sld [smem:[%s32]]
  %s34 = scalar_lea.smem %s0, 17
  %s35 = sld [smem:[%s34]]
  %s36 = scalar_lea.smem %s0, 18
  %s37 = sld [smem:[%s36]]
  %s38 = scalar_lea.smem %s0, 19
  %s39 = sld [smem:[%s38]]
  %s40 = scalar_lea.smem %s0, 20
  %s41 = sld [smem:[%s40]]
  %s42 = scalar_lea.smem %s0, 21
  %s43 = sld [smem:[%s42]]
  %s44 = scalar_lea.smem %s0, 22
  %s45 = sld [smem:[%s44]]
  %s46 = scalar_lea.smem %s0, 23
  %s47 = sld [smem:[%s46]]
  %s48 = scalar_lea.smem %s0, 24
  %s49 = sld [smem:[%s48]]
  %s50 = scalar_lea.smem %s0, 25
  %s51 = sld [smem:[%s50]]
  %s52 = scalar_lea.smem %s0, 26
  %s53 = sld [smem:[%s52]]
  %s54 = scalar_lea.smem %s0, 27
  %s55 = sld [smem:[%s54]]
  %s56 = scalar_lea.smem %s0, 28
  %s57 = sld [smem:[%s56]]
  %s58 = scalar_lea.smem %s0, 29
  %s59 = sld [smem:[%s58]]
  %s60 = scalar_lea.smem %s0, 30
  %s61 = sld [smem:[%s60]]
  %s62 = scalar_lea.smem %s0, 31
  %s63 = sld [smem:[%s62]]
  %s64 = sld [smem:[#allocation0]]
  $region134: #{tsti_encoder_forward.1} parent=0
    _
  %s66 = ssub.s32 1, %s64
  %s67 = scalar_select 0, %s66, %s64
  $region1: #{tsti_encoder_forward.1} parent=0
    #allocation2 [shape = 'u8[32768]{0}', space=vmem, size = 0x8000, scoped, tag = 'output window, operand 0, single buffered']
    #allocation3 [shape = 's32[1]{0}', space=sflag, size = 0x4, scoped, tag = 'scoped memory for tsti_encoder_forward.1']
    %68 = vsyncpa [#allocation3], 0
    // Predicated region
    $region2: #{tsti_encoder_forward.1} parent=1 // pred_check
      _
    $region3: #{tsti_encoder_forward.1} parent=1 // pred_check_branch
      %70 = sbr.rel (0) target = $region5
    $region4: #{tsti_encoder_forward.1} parent=1 // pred_region
      _
    $region5: #{tsti_encoder_forward.1} parent=1 // pred_fallthru
      _
    // Predicated region
    $region6: #{tsti_encoder_forward.1} parent=1 // pred_check
      _
    $region7: #{tsti_encoder_forward.1} parent=1 // pred_check_branch
      %72 = sbr.rel (0) target = $region9
    $region8: #{tsti_encoder_forward.1} parent=1 // pred_region
      _
    $region9: #{tsti_encoder_forward.1} parent=1 // pred_fallthru
      _
    // Predicated region
    $region10: #{tsti_encoder_forward.1} parent=1 // pred_check
      _
    $region11: #{tsti_encoder_forward.1} parent=1 // pred_check_branch
      %74 = sbr.rel (0) target = $region13
    $region12: #{tsti_encoder_forward.1} parent=1 // pred_region
      _
    $region13: #{tsti_encoder_forward.1} parent=1 // pred_fallthru
      _
    // Predicated region
    $region14: #{tsti_encoder_forward.1} parent=1 // pred_check
      _
    $region15: #{tsti_encoder_forward.1} parent=1 // pred_check_branch
      %76 = sbr.rel (0) target = $region17
    $region16: #{tsti_encoder_forward.1} parent=1 // pred_region
      _
    $region17: #{tsti_encoder_forward.1} parent=1 // pred_fallthru
      _
    // Predicated region
    $region18: #{tsti_encoder_forward.1} parent=1 // pred_check
      _
    $region19: #{tsti_encoder_forward.1} parent=1 // pred_check_branch
      %78 = sbr.rel (0) target = $region21
    $region20: #{tsti_encoder_forward.1} parent=1 // pred_region
      _
    $region21: #{tsti_encoder_forward.1} parent=1 // pred_fallthru
      _
    // Predicated region
    $region22: #{tsti_encoder_forward.1} parent=1 // pred_check
      _
    $region23: #{tsti_encoder_forward.1} parent=1 // pred_check_branch
      %80 = sbr.rel (0) target = $region25
    $region24: #{tsti_encoder_forward.1} parent=1 // pred_region
      _
    $region25: #{tsti_encoder_forward.1} parent=1 // pred_fallthru
      _
    // Predicated region
    $region26: #{tsti_encoder_forward.1} parent=1 // pred_check
      _
    $region27: #{tsti_encoder_forward.1} parent=1 // pred_check_branch
      %82 = sbr.rel (0) target = $region29
    $region28: #{tsti_encoder_forward.1} parent=1 // pred_region
      _
    $region29: #{tsti_encoder_forward.1} parent=1 // pred_fallthru
      _
    // Predicated region
    $region30: #{tsti_encoder_forward.1} parent=1 // pred_check
      _
    $region31: #{tsti_encoder_forward.1} parent=1 // pred_check_branch
      %84 = sbr.rel (0) target = $region33
    $region32: #{tsti_encoder_forward.1} parent=1 // pred_region
      _
    $region33: #{tsti_encoder_forward.1} parent=1 // pred_fallthru
      _
    // Predicated region
    $region34: #{tsti_encoder_forward.1} parent=1 // pred_check
      _
    $region35: #{tsti_encoder_forward.1} parent=1 // pred_check_branch
      %86 = sbr.rel (0) target = $region37
    $region36: #{tsti_encoder_forward.1} parent=1 // pred_region
      _
    $region37: #{tsti_encoder_forward.1} parent=1 // pred_fallthru
      _
    // Predicated region
    $region38: #{tsti_encoder_forward.1} parent=1 // pred_check
      _
    $region39: #{tsti_encoder_forward.1} parent=1 // pred_check_branch
      %88 = sbr.rel (0) target = $region41
    $region40: #{tsti_encoder_forward.1} parent=1 // pred_region
      _
    $region41: #{tsti_encoder_forward.1} parent=1 // pred_fallthru
      _
    // Predicated region
    $region42: #{tsti_encoder_forward.1} parent=1 // pred_check
      _
    $region43: #{tsti_encoder_forward.1} parent=1 // pred_check_branch
      %90 = sbr.rel (0) target = $region45
    $region44: #{tsti_encoder_forward.1} parent=1 // pred_region
      _
    $region45: #{tsti_encoder_forward.1} parent=1 // pred_fallthru
      _
    // Predicated region
    $region46: #{tsti_encoder_forward.1} parent=1 // pred_check
      _
    $region47: #{tsti_encoder_forward.1} parent=1 // pred_check_branch
      %92 = sbr.rel (0) target = $region49
    $region48: #{tsti_encoder_forward.1} parent=1 // pred_region
      _
    $region49: #{tsti_encoder_forward.1} parent=1 // pred_fallthru
      _
    // Predicated region
    $region50: #{tsti_encoder_forward.1} parent=1 // pred_check
      _
    $region51: #{tsti_encoder_forward.1} parent=1 // pred_check_branch
      %94 = sbr.rel (0) target = $region53
    $region52: #{tsti_encoder_forward.1} parent=1 // pred_region
      _
    $region53: #{tsti_encoder_forward.1} parent=1 // pred_fallthru
      _
    // Predicated region
    $region54: #{tsti_encoder_forward.1} parent=1 // pred_check
      _
    $region55: #{tsti_encoder_forward.1} parent=1 // pred_check_branch
      %96 = sbr.rel (0) target = $region57
    $region56: #{tsti_encoder_forward.1} parent=1 // pred_region
      _
    $region57: #{tsti_encoder_forward.1} parent=1 // pred_fallthru
      _
    // Predicated region
    $region58: #{tsti_encoder_forward.1} parent=1 // pred_check
      _
    $region59: #{tsti_encoder_forward.1} parent=1 // pred_check_branch
      %98 = sbr.rel (0) target = $region61
    $region60: #{tsti_encoder_forward.1} parent=1 // pred_region
      _
    $region61: #{tsti_encoder_forward.1} parent=1 // pred_fallthru
      _
    // Predicated region
    $region62: #{tsti_encoder_forward.1} parent=1 // pred_check
      _
    $region63: #{tsti_encoder_forward.1} parent=1 // pred_check_branch
      %100 = sbr.rel (0) target = $region65
    $region64: #{tsti_encoder_forward.1} parent=1 // pred_region
      _
    $region65: #{tsti_encoder_forward.1} parent=1 // pred_fallthru
      _
    // Predicated region
    $region66: #{tsti_encoder_forward.1} parent=1 // pred_check
      _
    $region67: #{tsti_encoder_forward.1} parent=1 // pred_check_branch
      %102 = sbr.rel (0) target = $region69
    $region68: #{tsti_encoder_forward.1} parent=1 // pred_region
      _
    $region69: #{tsti_encoder_forward.1} parent=1 // pred_fallthru
      _
    // Predicated region
    $region70: #{tsti_encoder_forward.1} parent=1 // pred_check
      _
    $region71: #{tsti_encoder_forward.1} parent=1 // pred_check_branch
      %104 = sbr.rel (0) target = $region73
    $region72: #{tsti_encoder_forward.1} parent=1 // pred_region
      _
    $region73: #{tsti_encoder_forward.1} parent=1 // pred_fallthru
      _
    // Predicated region
    $region74: #{tsti_encoder_forward.1} parent=1 // pred_check
      _
    $region75: #{tsti_encoder_forward.1} parent=1 // pred_check_branch
      %106 = sbr.rel (0) target = $region77
    $region76: #{tsti_encoder_forward.1} parent=1 // pred_region
      _
    $region77: #{tsti_encoder_forward.1} parent=1 // pred_fallthru
      _
    // Predicated region
    $region78: #{tsti_encoder_forward.1} parent=1 // pred_check
      _
    $region79: #{tsti_encoder_forward.1} parent=1 // pred_check_branch
      %108 = sbr.rel (0) target = $region81
    $region80: #{tsti_encoder_forward.1} parent=1 // pred_region
      _
    $region81: #{tsti_encoder_forward.1} parent=1 // pred_fallthru
      _
    // Predicated region
    $region82: #{tsti_encoder_forward.1} parent=1 // pred_check
      _
    $region83: #{tsti_encoder_forward.1} parent=1 // pred_check_branch
      %110 = sbr.rel (0) target = $region85
    $region84: #{tsti_encoder_forward.1} parent=1 // pred_region
      _
    $region85: #{tsti_encoder_forward.1} parent=1 // pred_fallthru
      _
    // Predicated region
    $region86: #{tsti_encoder_forward.1} parent=1 // pred_check
      _
    $region87: #{tsti_encoder_forward.1} parent=1 // pred_check_branch
      %112 = sbr.rel (0) target = $region89
    $region88: #{tsti_encoder_forward.1} parent=1 // pred_region
      _
    $region89: #{tsti_encoder_forward.1} parent=1 // pred_fallthru
      _
    // Predicated region
    $region90: #{tsti_encoder_forward.1} parent=1 // pred_check
      _
    $region91: #{tsti_encoder_forward.1} parent=1 // pred_check_branch
      %114 = sbr.rel (0) target = $region93
    $region92: #{tsti_encoder_forward.1} parent=1 // pred_region
      _
    $region93: #{tsti_encoder_forward.1} parent=1 // pred_fallthru
      _
    // Predicated region
    $region94: #{tsti_encoder_forward.1} parent=1 // pred_check
      _
    $region95: #{tsti_encoder_forward.1} parent=1 // pred_check_branch
      %116 = sbr.rel (0) target = $region97
    $region96: #{tsti_encoder_forward.1} parent=1 // pred_region
      _
    $region97: #{tsti_encoder_forward.1} parent=1 // pred_fallthru
      _
    // Predicated region
    $region98: #{tsti_encoder_forward.1} parent=1 // pred_check
      _
    $region99: #{tsti_encoder_forward.1} parent=1 // pred_check_branch
      %118 = sbr.rel (0) target = $region101
    $region100: #{tsti_encoder_forward.1} parent=1 // pred_region
      _
    $region101: #{tsti_encoder_forward.1} parent=1 // pred_fallthru
      _
    // Predicated region
    $region102: #{tsti_encoder_forward.1} parent=1 // pred_check
      _
    $region103: #{tsti_encoder_forward.1} parent=1 // pred_check_branch
      %120 = sbr.rel (0) target = $region105
    $region104: #{tsti_encoder_forward.1} parent=1 // pred_region
      _
    $region105: #{tsti_encoder_forward.1} parent=1 // pred_fallthru
      _
    // Predicated region
    $region106: #{tsti_encoder_forward.1} parent=1 // pred_check
      _
    $region107: #{tsti_encoder_forward.1} parent=1 // pred_check_branch
      %122 = sbr.rel (0) target = $region109
    $region108: #{tsti_encoder_forward.1} parent=1 // pred_region
      _
    $region109: #{tsti_encoder_forward.1} parent=1 // pred_fallthru
      _
    // Predicated region
    $region110: #{tsti_encoder_forward.1} parent=1 // pred_check
      _
    $region111: #{tsti_encoder_forward.1} parent=1 // pred_check_branch
      %124 = sbr.rel (0) target = $region113
    $region112: #{tsti_encoder_forward.1} parent=1 // pred_region
      _
    $region113: #{tsti_encoder_forward.1} parent=1 // pred_fallthru
      _
    // Predicated region
    $region114: #{tsti_encoder_forward.1} parent=1 // pred_check
      _
    $region115: #{tsti_encoder_forward.1} parent=1 // pred_check_branch
      %126 = sbr.rel (0) target = $region117
    $region116: #{tsti_encoder_forward.1} parent=1 // pred_region
      _
    $region117: #{tsti_encoder_forward.1} parent=1 // pred_fallthru
      _
    // Predicated region
    $region118: #{tsti_encoder_forward.1} parent=1 // pred_check
      _
    $region119: #{tsti_encoder_forward.1} parent=1 // pred_check_branch
      %128 = sbr.rel (0) target = $region121
    $region120: #{tsti_encoder_forward.1} parent=1 // pred_region
      _
    $region121: #{tsti_encoder_forward.1} parent=1 // pred_fallthru
      _
    // Predicated region
    $region122: #{tsti_encoder_forward.1} parent=1 // pred_check
      _
    $region123: #{tsti_encoder_forward.1} parent=1 // pred_check_branch
      %130 = sbr.rel (0) target = $region125
    $region124: #{tsti_encoder_forward.1} parent=1 // pred_region
      _
    $region125: #{tsti_encoder_forward.1} parent=1 // pred_fallthru
      _
    %v131 = vld [vmem:[%s1] sm:$0xff]
    %v132 = vld [vmem:[%s1 + $0x8] sm:$0xff]
    %v133 = vld [vmem:[%s1 + $0x10] sm:$0xff]
    %v134 = vld [vmem:[%s1 + $0x18] sm:$0xff]
    %v135 = vld [vmem:[%s1 + $0x20] sm:$0xff]
    %v136 = vld [vmem:[%s1 + $0x28] sm:$0xff]
    %v137 = vld [vmem:[%s1 + $0x30] sm:$0xff]
    %v138 = vld [vmem:[%s1 + $0x38] sm:$0xff]
    %v139 = vld [vmem:[%s3] sm:$0xff]
    %v140 = vld [vmem:[%s3 + $0x8] sm:$0xff]
    %v141 = vld [vmem:[%s5] sm:$0x1]
    %v143 = vperm.slane %v141, 0
    %vm145 = vcmask 130048
    %v147 = vsel %vm145, %v131, 0
    %v150 = vsel %vm145, %v132, 0
    %v153 = vsel %vm145, %v133, 0
    %v156 = vsel %vm145, %v134, 0
    %v159 = vsel %vm145, %v135, 0
    %v162 = vsel %vm145, %v136, 0
    %v165 = vsel %vm145, %v137, 0
    %v168 = vsel %vm145, %v138, 0
    %170 = vmatpush.msra.mxu0 0.0
    %171 = vmatpush.msra.mxu0 0.0
    %172 = vmatpush.msra.mxu0 0.0
    %173 = vmatpush.msra.mxu0 0.0
    %174 = vmatpush.msra.mxu0 0.0
    %175 = vmatpush.msra.mxu0 0.0
    %176 = vmatpush.msra.mxu0 0.0
    %177 = vmatpush.msra.mxu0 0.0
    %178 = vmatpush.msra.mxu0 0.0
    %179 = vmatpush.msra.mxu0 0.0
    %180 = vmatpush.msra.mxu0 0.0
    %181 = vmatpush.msra.mxu0 0.0
    %182 = vmatpush.msra.mxu0 0.0
    %183 = vmatpush.msra.mxu0 0.0
    %184 = vmatpush.msra.mxu0 %v140
    %185 = vmatpush.msra.mxu0 %v139
    %186 = vmatmul.f32.gmra.mxu0 %v147
    %v187 = vpop.f32.mrf.mxu0
    %v188 = vadd.f32 %v143, %v187
    %189 = vmatmul.f32.gmra.mxu0 %v150
    %v190 = vpop.f32.mrf.mxu0
    %v191 = vadd.f32 %v143, %v190
    %192 = vmatmul.f32.gmra.mxu0 %v153
    %v193 = vpop.f32.mrf.mxu0
    %v194 = vadd.f32 %v143, %v193
    %195 = vmatmul.f32.gmra.mxu0 %v156
    %v196 = vpop.f32.mrf.mxu0
    %v197 = vadd.f32 %v143, %v196
    %198 = vmatmul.f32.gmra.mxu0 %v159
    %v199 = vpop.f32.mrf.mxu0
    %v200 = vadd.f32 %v143, %v199
    %201 = vmatmul.f32.gmra.mxu0 %v162
    %v202 = vpop.f32.mrf.mxu0
    %v203 = vadd.f32 %v143, %v202
    %204 = vmatmul.f32.gmra.mxu0 %v165
    %v205 = vpop.f32.mrf.mxu0
    %v206 = vadd.f32 %v143, %v205
    %207 = vmatmul.f32.gmra.mxu0 %v168
    %v208 = vpop.f32.mrf.mxu0
    %v209 = vadd.f32 %v143, %v208
    %210 = vdwg.mxu0
    %v211 = vld [vmem:[%s7] sm:$0xff]
    %v212 = vld [vmem:[%s7 + $0x8] sm:$0xff]
    %v213 = vld [vmem:[%s7 + $0x10] sm:$0xff]
    %v214 = vld [vmem:[%s7 + $0x18] sm:$0xff]
    %v215 = vld [vmem:[%s7 + $0x20] sm:$0xff]
    %v216 = vld [vmem:[%s7 + $0x28] sm:$0xff]
    %v217 = vld [vmem:[%s7 + $0x30] sm:$0xff]
    %v218 = vld [vmem:[%s7 + $0x38] sm:$0xff]
    %v219 = vadd.f32 %v188, %v211
    %v220 = vadd.f32 %v191, %v212
    %v221 = vadd.f32 %v194, %v213
    %v222 = vadd.f32 %v197, %v214
    %v223 = vadd.f32 %v200, %v215
    %v224 = vadd.f32 %v203, %v216
    %v225 = vadd.f32 %v206, %v217
    %v226 = vadd.f32 %v209, %v218
    %v227 = vld [vmem:[%s9] sm:$0xff]
    %vm228 = vcmp.gt.f32.partialorder %v227, 0.5
    %v229 = vld [vmem:[%s11] sm:$0xff]
    %v230 = vld [vmem:[%s11 + $0x8] sm:$0xff]
    %v231 = vld [vmem:[%s11 + $0x10] sm:$0xff]
    %v232 = vld [vmem:[%s11 + $0x18] sm:$0xff]
    %v233 = vld [vmem:[%s13] sm:$0xff]
    %v234 = vld [vmem:[%s13 + $0x8] sm:$0xff]
    %v235 = vld [vmem:[%s13 + $0x10] sm:$0xff]
    %v236 = vld [vmem:[%s13 + $0x18] sm:$0xff]
    %v237 = vld [vmem:[%s15] sm:$0xff]
    %v238 = vld [vmem:[%s15 + $0x8] sm:$0xff]
    %v239 = vld [vmem:[%s15 + $0x10] sm:$0xff]
    %v240 = vld [vmem:[%s15 + $0x18] sm:$0xff]
    %v241 = vld [vmem:[%s17] sm:$0x1]
    %v243 = vperm.slane %v241, 0
    %vm245 = vcmask 261120
    %v247 = vsel %vm245, %v219, 0
    %v250 = vsel %vm245, %v220, 0
    %v253 = vsel %vm245, %v221, 0
    %v256 = vsel %vm245, %v222, 0
    %v259 = vsel %vm245, %v223, 0
    %v262 = vsel %vm245, %v224, 0
    %v265 = vsel %vm245, %v225, 0
    %v268 = vsel %vm245, %v226, 0
    %270 = vmatpush.msra.mxu0 0.0
    %271 = vmatpush.msra.mxu0 0.0
    %272 = vmatpush.msra.mxu0 0.0
    %273 = vmatpush.msra.mxu0 0.0
    %274 = vmatpush.msra.mxu0 0.0
    %275 = vmatpush.msra.mxu0 0.0
    %276 = vmatpush.msra.mxu0 0.0
    %277 = vmatpush.msra.mxu0 0.0
    %278 = vmatpush.msra.mxu0 0.0
    %279 = vmatpush.msra.mxu0 0.0
    %280 = vmatpush.msra.mxu0 0.0
    %281 = vmatpush.msra.mxu0 0.0
    %282 = vmatpush.msra.mxu0 %v240
    %283 = vmatpush.msra.mxu0 %v239
    %284 = vmatpush.msra.mxu0 %v238
    %285 = vmatpush.msra.mxu0 %v237
    %286 = vmatmul.f32.gmra.mxu0 %v247
    %v287 = vpop.f32.mrf.mxu0
    %v288 = vadd.f32 %v243, %v287
    %289 = vmatmul.f32.gmra.mxu0 %v250
    %v290 = vpop.f32.mrf.mxu0
    %v291 = vadd.f32 %v243, %v290
    %292 = vmatmul.f32.gmra.mxu0 %v253
    %v293 = vpop.f32.mrf.mxu0
    %v294 = vadd.f32 %v243, %v293
    %295 = vmatmul.f32.gmra.mxu0 %v256
    %v296 = vpop.f32.mrf.mxu0
    %v297 = vadd.f32 %v243, %v296
    %298 = vmatmul.f32.gmra.mxu0 %v259
    %v299 = vpop.f32.mrf.mxu0
    %v300 = vadd.f32 %v243, %v299
    %301 = vmatmul.f32.gmra.mxu0 %v262
    %v302 = vpop.f32.mrf.mxu0
    %v303 = vadd.f32 %v243, %v302
    %304 = vmatmul.f32.gmra.mxu0 %v265
    %v305 = vpop.f32.mrf.mxu0
    %v306 = vadd.f32 %v243, %v305
    %307 = vmatmul.f32.gmra.mxu0 %v268
    %v308 = vpop.f32.mrf.mxu0
    %v309 = vadd.f32 %v243, %v308
    %310 = vdwg.mxu0
    %315 = vrot.lane.b32.xlu0 %v229, 32
    %v316 = vpop.permute.xlu0 %315
    %317 = vrot.lane.b32.xlu0 %v230, 32
    %v318 = vpop.permute.xlu0 %317
    %319 = vrot.lane.b32.xlu0 %v231, 32
    %v320 = vpop.permute.xlu0 %319
    %321 = vrot.lane.b32.xlu0 %v232, 32
    %v322 = vpop.permute.xlu0 %321
    %v327 = vmul.f32 %v288, %v316
    %v328 = vmul.f32 %v288, %v318
    %v329 = vmul.f32 %v288, %v320
    %v330 = vmul.f32 %v288, %v322
    %v331 = vmul.f32 %v291, %v316
    %v332 = vmul.f32 %v291, %v318
    %v333 = vmul.f32 %v291, %v320
    %v334 = vmul.f32 %v291, %v322
    %v335 = vmul.f32 %v294, %v316
    %v336 = vmul.f32 %v294, %v318
    %v337 = vmul.f32 %v294, %v320
    %v338 = vmul.f32 %v294, %v322
    %v339 = vmul.f32 %v297, %v316
    %v340 = vmul.f32 %v297, %v318
    %v341 = vmul.f32 %v297, %v320
    %v342 = vmul.f32 %v297, %v322
    %v343 = vmul.f32 %v300, %v316
    %v344 = vmul.f32 %v300, %v318
    %v345 = vmul.f32 %v300, %v320
    %v346 = vmul.f32 %v300, %v322
    %v347 = vmul.f32 %v303, %v316
    %v348 = vmul.f32 %v303, %v318
    %v349 = vmul.f32 %v303, %v320
    %v350 = vmul.f32 %v303, %v322
    %v351 = vmul.f32 %v306, %v316
    %v352 = vmul.f32 %v306, %v318
    %v353 = vmul.f32 %v306, %v320
    %v354 = vmul.f32 %v306, %v322
    %v355 = vmul.f32 %v309, %v316
    %v356 = vmul.f32 %v309, %v318
    %v357 = vmul.f32 %v309, %v320
    %v358 = vmul.f32 %v309, %v322
    %359 = vrot.lane.b32.xlu0 %v229, 64
    %v360 = vpop.permute.xlu0 %359
    %361 = vrot.lane.b32.xlu0 %v230, 64
    %v362 = vpop.permute.xlu0 %361
    %363 = vrot.lane.b32.xlu0 %v231, 64
    %v364 = vpop.permute.xlu0 %363
    %365 = vrot.lane.b32.xlu0 %v232, 64
    %v366 = vpop.permute.xlu0 %365
    %v371 = vmul.f32 %v288, %v360
    %v372 = vmul.f32 %v288, %v362
    %v373 = vmul.f32 %v288, %v364
    %v374 = vmul.f32 %v288, %v366
    %v375 = vmul.f32 %v291, %v360
    %v376 = vmul.f32 %v291, %v362
    %v377 = vmul.f32 %v291, %v364
    %v378 = vmul.f32 %v291, %v366
    %v379 = vmul.f32 %v294, %v360
    %v380 = vmul.f32 %v294, %v362
    %v381 = vmul.f32 %v294, %v364
    %v382 = vmul.f32 %v294, %v366
    %v383 = vmul.f32 %v297, %v360
    %v384 = vmul.f32 %v297, %v362
    %v385 = vmul.f32 %v297, %v364
    %v386 = vmul.f32 %v297, %v366
    %v387 = vmul.f32 %v300, %v360
    %v388 = vmul.f32 %v300, %v362
    %v389 = vmul.f32 %v300, %v364
    %v390 = vmul.f32 %v300, %v366
    %v391 = vmul.f32 %v303, %v360
    %v392 = vmul.f32 %v303, %v362
    %v393 = vmul.f32 %v303, %v364
    %v394 = vmul.f32 %v303, %v366
    %v395 = vmul.f32 %v306, %v360
    %v396 = vmul.f32 %v306, %v362
    %v397 = vmul.f32 %v306, %v364
    %v398 = vmul.f32 %v306, %v366
    %v399 = vmul.f32 %v309, %v360
    %v400 = vmul.f32 %v309, %v362
    %v401 = vmul.f32 %v309, %v364
    %v402 = vmul.f32 %v309, %v366
    %407 = vrot.lane.b32.xlu0 %v327, 96
    %v408 = vpop.permute.xlu0 %407
    %409 = vrot.lane.b32.xlu0 %v328, 96
    %v410 = vpop.permute.xlu0 %409
    %411 = vrot.lane.b32.xlu0 %v329, 96
    %v412 = vpop.permute.xlu0 %411
    %413 = vrot.lane.b32.xlu0 %v330, 96
    %v414 = vpop.permute.xlu0 %413
    %v416 = vsel %vm245, %v288, 0
    %v418 = vsel %vm245, %v408, 0
    %v420 = vsel %vm245, %v410, 0
    %v422 = vsel %vm245, %v412, 0
    %v424 = vsel %vm245, %v414, 0
    %426 = vmatpush.xpose.msra.mxu0 0.0
    %427 = vmatpush.xpose.msra.mxu0 0.0
    %428 = vmatpush.xpose.msra.mxu0 0.0
    %429 = vmatpush.xpose.msra.mxu0 0.0
    %430 = vmatpush.xpose.msra.mxu0 0.0
    %431 = vmatpush.xpose.msra.mxu0 0.0
    %432 = vmatpush.xpose.msra.mxu0 0.0
    %433 = vmatpush.xpose.msra.mxu0 0.0
    %434 = vmatpush.xpose.msra.mxu0 0.0
    %435 = vmatpush.xpose.msra.mxu0 0.0
    %436 = vmatpush.xpose.msra.mxu0 0.0
    %437 = vmatpush.xpose.msra.mxu0 0.0
    %438 = vmatpush.xpose.msra.mxu0 %v424
    %439 = vmatpush.xpose.msra.mxu0 %v422
    %440 = vmatpush.xpose.msra.mxu0 %v420
    %441 = vmatpush.xpose.msra.mxu0 %v418
    %442 = vmatmul.f32.gmra.mxu0 %v416
    %v443 = vpop.f32.mrf.mxu0
    %v444 = vadd.f32 0.0, %v443
    %445 = vdwg.mxu0
    %450 = vrot.lane.b32.xlu0 %v331, 96
    %v451 = vpop.permute.xlu0 %450
    %452 = vrot.lane.b32.xlu0 %v332, 96
    %v453 = vpop.permute.xlu0 %452
    %454 = vrot.lane.b32.xlu0 %v333, 96
    %v455 = vpop.permute.xlu0 %454
    %456 = vrot.lane.b32.xlu0 %v334, 96
    %v457 = vpop.permute.xlu0 %456
    %v459 = vsel %vm245, %v291, 0
    %v461 = vsel %vm245, %v451, 0
    %v463 = vsel %vm245, %v453, 0
    %v465 = vsel %vm245, %v455, 0
    %v467 = vsel %vm245, %v457, 0
    %469 = vmatpush.xpose.msra.mxu0 0.0
    %470 = vmatpush.xpose.msra.mxu0 0.0
    %471 = vmatpush.xpose.msra.mxu0 0.0
    %472 = vmatpush.xpose.msra.mxu0 0.0
    %473 = vmatpush.xpose.msra.mxu0 0.0
    %474 = vmatpush.xpose.msra.mxu0 0.0
    %475 = vmatpush.xpose.msra.mxu0 0.0
    %476 = vmatpush.xpose.msra.mxu0 0.0
    %477 = vmatpush.xpose.msra.mxu0 0.0
    %478 = vmatpush.xpose.msra.mxu0 0.0
    %479 = vmatpush.xpose.msra.mxu0 0.0
    %480 = vmatpush.xpose.msra.mxu0 0.0
    %481 = vmatpush.xpose.msra.mxu0 %v467
    %482 = vmatpush.xpose.msra.mxu0 %v465
    %483 = vmatpush.xpose.msra.mxu0 %v463
    %484 = vmatpush.xpose.msra.mxu0 %v461
    %485 = vmatmul.f32.gmra.mxu0 %v459
    %v486 = vpop.f32.mrf.mxu0
    %v487 = vadd.f32 0.0, %v486
    %488 = vdwg.mxu0
    %493 = vrot.lane.b32.xlu0 %v335, 96
    %v494 = vpop.permute.xlu0 %493
    %495 = vrot.lane.b32.xlu0 %v336, 96
    %v496 = vpop.permute.xlu0 %495
    %497 = vrot.lane.b32.xlu0 %v337, 96
    %v498 = vpop.permute.xlu0 %497
    %499 = vrot.lane.b32.xlu0 %v338, 96
    %v500 = vpop.permute.xlu0 %499
    %v502 = vsel %vm245, %v294, 0
    %v504 = vsel %vm245, %v494, 0
    %v506 = vsel %vm245, %v496, 0
    %v508 = vsel %vm245, %v498, 0
    %v510 = vsel %vm245, %v500, 0
    %512 = vmatpush.xpose.msra.mxu0 0.0
    %513 = vmatpush.xpose.msra.mxu0 0.0
    %514 = vmatpush.xpose.msra.mxu0 0.0
    %515 = vmatpush.xpose.msra.mxu0 0.0
    %516 = vmatpush.xpose.msra.mxu0 0.0
    %517 = vmatpush.xpose.msra.mxu0 0.0
    %518 = vmatpush.xpose.msra.mxu0 0.0
    %519 = vmatpush.xpose.msra.mxu0 0.0
    %520 = vmatpush.xpose.msra.mxu0 0.0
    %521 = vmatpush.xpose.msra.mxu0 0.0
    %522 = vmatpush.xpose.msra.mxu0 0.0
    %523 = vmatpush.xpose.msra.mxu0 0.0
    %524 = vmatpush.xpose.msra.mxu0 %v510
    %525 = vmatpush.xpose.msra.mxu0 %v508
    %526 = vmatpush.xpose.msra.mxu0 %v506
    %527 = vmatpush.xpose.msra.mxu0 %v504
    %528 = vmatmul.f32.gmra.mxu0 %v502
    %v529 = vpop.f32.mrf.mxu0
    %v530 = vadd.f32 0.0, %v529
    %531 = vdwg.mxu0
    %536 = vrot.lane.b32.xlu0 %v339, 96
    %v537 = vpop.permute.xlu0 %536
    %538 = vrot.lane.b32.xlu0 %v340, 96
    %v539 = vpop.permute.xlu0 %538
    %540 = vrot.lane.b32.xlu0 %v341, 96
    %v541 = vpop.permute.xlu0 %540
    %542 = vrot.lane.b32.xlu0 %v342, 96
    %v543 = vpop.permute.xlu0 %542
    %v545 = vsel %vm245, %v297, 0
    %v547 = vsel %vm245, %v537, 0
    %v549 = vsel %vm245, %v539, 0
    %v551 = vsel %vm245, %v541, 0
    %v553 = vsel %vm245, %v543, 0
    %555 = vmatpush.xpose.msra.mxu0 0.0
    %556 = vmatpush.xpose.msra.mxu0 0.0
    %557 = vmatpush.xpose.msra.mxu0 0.0
    %558 = vmatpush.xpose.msra.mxu0 0.0
    %559 = vmatpush.xpose.msra.mxu0 0.0
    %560 = vmatpush.xpose.msra.mxu0 0.0
    %561 = vmatpush.xpose.msra.mxu0 0.0
    %562 = vmatpush.xpose.msra.mxu0 0.0
    %563 = vmatpush.xpose.msra.mxu0 0.0
    %564 = vmatpush.xpose.msra.mxu0 0.0
    %565 = vmatpush.xpose.msra.mxu0 0.0
    %566 = vmatpush.xpose.msra.mxu0 0.0
    %567 = vmatpush.xpose.msra.mxu0 %v553
    %568 = vmatpush.xpose.msra.mxu0 %v551
    %569 = vmatpush.xpose.msra.mxu0 %v549
    %570 = vmatpush.xpose.msra.mxu0 %v547
    %571 = vmatmul.f32.gmra.mxu0 %v545
    %v572 = vpop.f32.mrf.mxu0
    %v573 = vadd.f32 0.0, %v572
    %574 = vdwg.mxu0
    %579 = vrot.lane.b32.xlu0 %v343, 96
    %v580 = vpop.permute.xlu0 %579
    %581 = vrot.lane.b32.xlu0 %v344, 96
    %v582 = vpop.permute.xlu0 %581
    %583 = vrot.lane.b32.xlu0 %v345, 96
    %v584 = vpop.permute.xlu0 %583
    %585 = vrot.lane.b32.xlu0 %v346, 96
    %v586 = vpop.permute.xlu0 %585
    %v588 = vsel %vm245, %v300, 0
    %v590 = vsel %vm245, %v580, 0
    %v592 = vsel %vm245, %v582, 0
    %v594 = vsel %vm245, %v584, 0
    %v596 = vsel %vm245, %v586, 0
    %598 = vmatpush.xpose.msra.mxu0 0.0
    %599 = vmatpush.xpose.msra.mxu0 0.0
    %600 = vmatpush.xpose.msra.mxu0 0.0
    %601 = vmatpush.xpose.msra.mxu0 0.0
    %602 = vmatpush.xpose.msra.mxu0 0.0
    %603 = vmatpush.xpose.msra.mxu0 0.0
    %604 = vmatpush.xpose.msra.mxu0 0.0
    %605 = vmatpush.xpose.msra.mxu0 0.0
    %606 = vmatpush.xpose.msra.mxu0 0.0
    %607 = vmatpush.xpose.msra.mxu0 0.0
    %608 = vmatpush.xpose.msra.mxu0 0.0
    %609 = vmatpush.xpose.msra.mxu0 0.0
    %610 = vmatpush.xpose.msra.mxu0 %v596
    %611 = vmatpush.xpose.msra.mxu0 %v594
    %612 = vmatpush.xpose.msra.mxu0 %v592
    %613 = vmatpush.xpose.msra.mxu0 %v590
    %614 = vmatmul.f32.gmra.mxu0 %v588
    %v615 = vpop.f32.mrf.mxu0
    %v616 = vadd.f32 0.0, %v615
    %617 = vdwg.mxu0
    %622 = vrot.lane.b32.xlu0 %v347, 96
    %v623 = vpop.permute.xlu0 %622
    %624 = vrot.lane.b32.xlu0 %v348, 96
    %v625 = vpop.permute.xlu0 %624
    %626 = vrot.lane.b32.xlu0 %v349, 96
    %v627 = vpop.permute.xlu0 %626
    %628 = vrot.lane.b32.xlu0 %v350, 96
    %v629 = vpop.permute.xlu0 %628
    %v631 = vsel %vm245, %v303, 0
    %v633 = vsel %vm245, %v623, 0
    %v635 = vsel %vm245, %v625, 0
    %v637 = vsel %vm245, %v627, 0
    %v639 = vsel %vm245, %v629, 0
    %641 = vmatpush.xpose.msra.mxu0 0.0
    %642 = vmatpush.xpose.msra.mxu0 0.0
    %643 = vmatpush.xpose.msra.mxu0 0.0
    %644 = vmatpush.xpose.msra.mxu0 0.0
    %645 = vmatpush.xpose.msra.mxu0 0.0
    %646 = vmatpush.xpose.msra.mxu0 0.0
    %647 = vmatpush.xpose.msra.mxu0 0.0
    %648 = vmatpush.xpose.msra.mxu0 0.0
    %649 = vmatpush.xpose.msra.mxu0 0.0
    %650 = vmatpush.xpose.msra.mxu0 0.0
    %651 = vmatpush.xpose.msra.mxu0 0.0
    %652 = vmatpush.xpose.msra.mxu0 0.0
    %653 = vmatpush.xpose.msra.mxu0 %v639
    %654 = vmatpush.xpose.msra.mxu0 %v637
    %655 = vmatpush.xpose.msra.mxu0 %v635
    %656 = vmatpush.xpose.msra.mxu0 %v633
    %657 = vmatmul.f32.gmra.mxu0 %v631
    %v658 = vpop.f32.mrf.mxu0
    %v659 = vadd.f32 0.0, %v658
    %660 = vdwg.mxu0
    %665 = vrot.lane.b32.xlu0 %v351, 96
    %v666 = vpop.permute.xlu0 %665
    %667 = vrot.lane.b32.xlu0 %v352, 96
    %v668 = vpop.permute.xlu0 %667
    %669 = vrot.lane.b32.xlu0 %v353, 96
    %v670 = vpop.permute.xlu0 %669
    %671 = vrot.lane.b32.xlu0 %v354, 96
    %v672 = vpop.permute.xlu0 %671
    %v674 = vsel %vm245, %v306, 0
    %v676 = vsel %vm245, %v666, 0
    %v678 = vsel %vm245, %v668, 0
    %v680 = vsel %vm245, %v670, 0
    %v682 = vsel %vm245, %v672, 0
    %684 = vmatpush.xpose.msra.mxu0 0.0
    %685 = vmatpush.xpose.msra.mxu0 0.0
    %686 = vmatpush.xpose.msra.mxu0 0.0
    %687 = vmatpush.xpose.msra.mxu0 0.0
    %688 = vmatpush.xpose.msra.mxu0 0.0
    %689 = vmatpush.xpose.msra.mxu0 0.0
    %690 = vmatpush.xpose.msra.mxu0 0.0
    %691 = vmatpush.xpose.msra.mxu0 0.0
    %692 = vmatpush.xpose.msra.mxu0 0.0
    %693 = vmatpush.xpose.msra.mxu0 0.0
    %694 = vmatpush.xpose.msra.mxu0 0.0
    %695 = vmatpush.xpose.msra.mxu0 0.0
    %696 = vmatpush.xpose.msra.mxu0 %v682
    %697 = vmatpush.xpose.msra.mxu0 %v680
    %698 = vmatpush.xpose.msra.mxu0 %v678
    %699 = vmatpush.xpose.msra.mxu0 %v676
    %700 = vmatmul.f32.gmra.mxu0 %v674
    %v701 = vpop.f32.mrf.mxu0
    %v702 = vadd.f32 0.0, %v701
    %703 = vdwg.mxu0
    %708 = vrot.lane.b32.xlu0 %v355, 96
    %v709 = vpop.permute.xlu0 %708
    %710 = vrot.lane.b32.xlu0 %v356, 96
    %v711 = vpop.permute.xlu0 %710
    %712 = vrot.lane.b32.xlu0 %v357, 96
    %v713 = vpop.permute.xlu0 %712
    %714 = vrot.lane.b32.xlu0 %v358, 96
    %v715 = vpop.permute.xlu0 %714
    %v717 = vsel %vm245, %v309, 0
    %v719 = vsel %vm245, %v709, 0
    %v721 = vsel %vm245, %v711, 0
    %v723 = vsel %vm245, %v713, 0
    %v725 = vsel %vm245, %v715, 0
    %727 = vmatpush.xpose.msra.mxu0 0.0
    %728 = vmatpush.xpose.msra.mxu0 0.0
    %729 = vmatpush.xpose.msra.mxu0 0.0
    %730 = vmatpush.xpose.msra.mxu0 0.0
    %731 = vmatpush.xpose.msra.mxu0 0.0
    %732 = vmatpush.xpose.msra.mxu0 0.0
    %733 = vmatpush.xpose.msra.mxu0 0.0
    %734 = vmatpush.xpose.msra.mxu0 0.0
    %735 = vmatpush.xpose.msra.mxu0 0.0
    %736 = vmatpush.xpose.msra.mxu0 0.0
    %737 = vmatpush.xpose.msra.mxu0 0.0
    %738 = vmatpush.xpose.msra.mxu0 0.0
    %739 = vmatpush.xpose.msra.mxu0 %v725
    %740 = vmatpush.xpose.msra.mxu0 %v723
    %741 = vmatpush.xpose.msra.mxu0 %v721
    %742 = vmatpush.xpose.msra.mxu0 %v719
    %743 = vmatmul.f32.gmra.mxu0 %v717
    %v744 = vpop.f32.mrf.mxu0
    %v745 = vadd.f32 0.0, %v744
    %746 = vdwg.mxu0
    %v747 = vmul.f32 %v444, 0.35355338
    %v748 = vmul.f32 %v487, 0.35355338
    %v749 = vmul.f32 %v530, 0.35355338
    %v750 = vmul.f32 %v573, 0.35355338
    %v751 = vmul.f32 %v616, 0.35355338
    %v752 = vmul.f32 %v659, 0.35355338
    %v753 = vmul.f32 %v702, 0.35355338
    %v754 = vmul.f32 %v745, 0.35355338
    %v755 = vsel %vm228, 1, 0
    %vm756 = vcmp.eq.s32.totalorder %v755, 1
    %v757 = vsel %vm756, -1e+30, %v747
    %v758 = vsel %vm756, -1e+30, %v748
    %v759 = vsel %vm756, -1e+30, %v749
    %v760 = vsel %vm756, -1e+30, %v750
    %v761 = vsel %vm756, -1e+30, %v751
    %v762 = vsel %vm756, -1e+30, %v752
    %v763 = vsel %vm756, -1e+30, %v753
    %v764 = vsel %vm756, -1e+30, %v754
    %v765 = vsel %vm245, %v757, -inf
    %766 = vmax.xlane.f32.xlu0 %v765
    %v767 = vpop.xlane.xlu0 %766
    %v768 = vsel %vm245, %v758, -inf
    %769 = vmax.xlane.f32.xlu0 %v768
    %v770 = vpop.xlane.xlu0 %769
    %v771 = vsel %vm245, %v759, -inf
    %772 = vmax.xlane.f32.xlu0 %v771
    %v773 = vpop.xlane.xlu0 %772
    %v774 = vsel %vm245, %v760, -inf
    %775 = vmax.xlane.f32.xlu0 %v774
    %v776 = vpop.xlane.xlu0 %775
    %v777 = vsel %vm245, %v761, -inf
    %778 = vmax.xlane.f32.xlu0 %v777
    %v779 = vpop.xlane.xlu0 %778
    %v780 = vsel %vm245, %v762, -inf
    %781 = vmax.xlane.f32.xlu0 %v780
    %v782 = vpop.xlane.xlu0 %781
    %v783 = vsel %vm245, %v763, -inf
    %784 = vmax.xlane.f32.xlu0 %v783
    %v785 = vpop.xlane.xlu0 %784
    %v786 = vsel %vm245, %v764, -inf
    %787 = vmax.xlane.f32.xlu0 %v786
    %v788 = vpop.xlane.xlu0 %787
    %v789 = vsub.f32 %v757, %v767
    %v790 = vsub.f32 %v758, %v770
    %v791 = vsub.f32 %v759, %v773
    %v792 = vsub.f32 %v760, %v776
    %v793 = vsub.f32 %v761, %v779
    %v794 = vsub.f32 %v762, %v782
    %v795 = vsub.f32 %v763, %v785
    %v796 = vsub.f32 %v764, %v788
    %v797 = vmul.f32 %v789, 1.442695
    %v798 = vpow.pop %v797
    %v799 = vmul.f32 %v790, 1.442695
    %v800 = vpow.pop %v799
    %v801 = vmul.f32 %v791, 1.442695
    %v802 = vpow.pop %v801
    %v803 = vmul.f32 %v792, 1.442695
    %v804 = vpow.pop %v803
    %v805 = vmul.f32 %v793, 1.442695
    %v806 = vpow.pop %v805
    %v807 = vmul.f32 %v794, 1.442695
    %v808 = vpow.pop %v807
    %v809 = vmul.f32 %v795, 1.442695
    %v810 = vpow.pop %v809
    %v811 = vmul.f32 %v796, 1.442695
    %v812 = vpow.pop %v811
    %v814 = vsel %vm245, %v798, 0
    %v817 = vsel %vm245, %v800, 0
    %v820 = vsel %vm245, %v802, 0
    %v823 = vsel %vm245, %v804, 0
    %v826 = vsel %vm245, %v806, 0
    %v829 = vsel %vm245, %v808, 0
    %v832 = vsel %vm245, %v810, 0
    %v835 = vsel %vm245, %v812, 0
    %837 = vmatpush.msra.mxu0 0.0
    %838 = vmatpush.msra.mxu0 0.0
    %839 = vmatpush.msra.mxu0 0.0
    %840 = vmatpush.msra.mxu0 0.0
    %841 = vmatpush.msra.mxu0 0.0
    %842 = vmatpush.msra.mxu0 0.0
    %843 = vmatpush.msra.mxu0 0.0
    %844 = vmatpush.msra.mxu0 0.0
    %845 = vmatpush.msra.mxu0 0.0
    %846 = vmatpush.msra.mxu0 0.0
    %847 = vmatpush.msra.mxu0 0.0
    %848 = vmatpush.msra.mxu0 0.0
    %849 = vmatpush.msra.mxu0 %v236
    %850 = vmatpush.msra.mxu0 %v235
    %851 = vmatpush.msra.mxu0 %v234
    %852 = vmatpush.msra.mxu0 %v233
    %853 = vmatmul.f32.gmra.mxu0 %v814
    %v854 = vpop.f32.mrf.mxu0
    %v855 = vadd.f32 0.0, %v854
    %856 = vmatmul.f32.gmra.mxu0 %v817
    %v857 = vpop.f32.mrf.mxu0
    %v858 = vadd.f32 0.0, %v857
    %859 = vmatmul.f32.gmra.mxu0 %v820
    %v860 = vpop.f32.mrf.mxu0
    %v861 = vadd.f32 0.0, %v860
    %862 = vmatmul.f32.gmra.mxu0 %v823
    %v863 = vpop.f32.mrf.mxu0
    %v864 = vadd.f32 0.0, %v863
    %865 = vmatmul.f32.gmra.mxu0 %v826
    %v866 = vpop.f32.mrf.mxu0
    %v867 = vadd.f32 0.0, %v866
    %868 = vmatmul.f32.gmra.mxu0 %v829
    %v869 = vpop.f32.mrf.mxu0
    %v870 = vadd.f32 0.0, %v869
    %871 = vmatmul.f32.gmra.mxu0 %v832
    %v872 = vpop.f32.mrf.mxu0
    %v873 = vadd.f32 0.0, %v872
    %874 = vmatmul.f32.gmra.mxu0 %v835
    %v875 = vpop.f32.mrf.mxu0
    %v876 = vadd.f32 0.0, %v875
    %877 = vdwg.mxu0
    %v878 = vrcp.pop %v855
    %v879 = vrcp.pop %v858
    %v880 = vrcp.pop %v861
    %v881 = vrcp.pop %v864
    %v882 = vrcp.pop %v867
    %v883 = vrcp.pop %v870
    %v884 = vrcp.pop %v873
    %v885 = vrcp.pop %v876
    %v886 = vmul.f32 %v855, %v878
    %v887 = vmul.f32 %v858, %v879
    %v888 = vmul.f32 %v861, %v880
    %v889 = vmul.f32 %v864, %v881
    %v890 = vmul.f32 %v867, %v882
    %v891 = vmul.f32 %v870, %v883
    %v892 = vmul.f32 %v873, %v884
    %v893 = vmul.f32 %v876, %v885
    %v894 = vsub.f32 2.0, %v886
    %v895 = vsub.f32 2.0, %v887
    %v896 = vsub.f32 2.0, %v888
    %v897 = vsub.f32 2.0, %v889
    %v898 = vsub.f32 2.0, %v890
    %v899 = vsub.f32 2.0, %v891
    %v900 = vsub.f32 2.0, %v892
    %v901 = vsub.f32 2.0, %v893
    %v902 = vmul.f32 %v878, %v894
    %v903 = vmul.f32 %v879, %v895
    %v904 = vmul.f32 %v880, %v896
    %v905 = vmul.f32 %v881, %v897
    %v906 = vmul.f32 %v882, %v898
    %v907 = vmul.f32 %v883, %v899
    %v908 = vmul.f32 %v884, %v900
    %v909 = vmul.f32 %v885, %v901
    %v910 = vmul.f32 %v798, %v902
    %v911 = vmul.f32 %v800, %v903
    %v912 = vmul.f32 %v802, %v904
    %v913 = vmul.f32 %v804, %v905
    %v914 = vmul.f32 %v806, %v906
    %v915 = vmul.f32 %v808, %v907
    %v916 = vmul.f32 %v810, %v908
    %v917 = vmul.f32 %v812, %v909
    %922 = vrot.lane.b32.xlu0 %v371, 64
    %v923 = vpop.permute.xlu0 %922
    %924 = vrot.lane.b32.xlu0 %v372, 64
    %v925 = vpop.permute.xlu0 %924
    %926 = vrot.lane.b32.xlu0 %v373, 64
    %v927 = vpop.permute.xlu0 %926
    %928 = vrot.lane.b32.xlu0 %v374, 64
    %v929 = vpop.permute.xlu0 %928
    %v935 = vsel %vm245, %v910, 0
    %937 = vmatpush.msra.mxu0 0.0
    %938 = vmatpush.msra.mxu0 0.0
    %939 = vmatpush.msra.mxu0 0.0
    %940 = vmatpush.msra.mxu0 0.0
    %941 = vmatpush.msra.mxu0 0.0
    %942 = vmatpush.msra.mxu0 0.0
    %943 = vmatpush.msra.mxu0 0.0
    %944 = vmatpush.msra.mxu0 0.0
    %945 = vmatpush.msra.mxu0 0.0
    %946 = vmatpush.msra.mxu0 0.0
    %947 = vmatpush.msra.mxu0 0.0
    %948 = vmatpush.msra.mxu0 0.0
    %949 = vmatpush.msra.mxu0 %v929
    %950 = vmatpush.msra.mxu0 %v927
    %951 = vmatpush.msra.mxu0 %v925
    %952 = vmatpush.msra.mxu0 %v923
    %953 = vmatmul.f32.gmra.mxu0 %v935
    %v954 = vpop.f32.mrf.mxu0
    %v955 = vadd.f32 0.0, %v954
    %956 = vdwg.mxu0
    %961 = vrot.lane.b32.xlu0 %v375, 64
    %v962 = vpop.permute.xlu0 %961
    %963 = vrot.lane.b32.xlu0 %v376, 64
    %v964 = vpop.permute.xlu0 %963
    %965 = vrot.lane.b32.xlu0 %v377, 64
    %v966 = vpop.permute.xlu0 %965
    %967 = vrot.lane.b32.xlu0 %v378, 64
    %v968 = vpop.permute.xlu0 %967
    %v974 = vsel %vm245, %v911, 0
    %976 = vmatpush.msra.mxu0 0.0
    %977 = vmatpush.msra.mxu0 0.0
    %978 = vmatpush.msra.mxu0 0.0
    %979 = vmatpush.msra.mxu0 0.0
    %980 = vmatpush.msra.mxu0 0.0
    %981 = vmatpush.msra.mxu0 0.0
    %982 = vmatpush.msra.mxu0 0.0
    %983 = vmatpush.msra.mxu0 0.0
    %984 = vmatpush.msra.mxu0 0.0
    %985 = vmatpush.msra.mxu0 0.0
    %986 = vmatpush.msra.mxu0 0.0
    %987 = vmatpush.msra.mxu0 0.0
    %988 = vmatpush.msra.mxu0 %v968
    %989 = vmatpush.msra.mxu0 %v966
    %990 = vmatpush.msra.mxu0 %v964
    %991 = vmatpush.msra.mxu0 %v962
    %992 = vmatmul.f32.gmra.mxu0 %v974
    %v993 = vpop.f32.mrf.mxu0
    %v994 = vadd.f32 0.0, %v993
    %995 = vdwg.mxu0
    %1000 = vrot.lane.b32.xlu0 %v379, 64
    %v1001 = vpop.permute.xlu0 %1000
    %1002 = vrot.lane.b32.xlu0 %v380, 64
    %v1003 = vpop.permute.xlu0 %1002
    %1004 = vrot.lane.b32.xlu0 %v381, 64
    %v1005 = vpop.permute.xlu0 %1004
    %1006 = vrot.lane.b32.xlu0 %v382, 64
    %v1007 = vpop.permute.xlu0 %1006
    %v1013 = vsel %vm245, %v912, 0
    %1015 = vmatpush.msra.mxu0 0.0
    %1016 = vmatpush.msra.mxu0 0.0
    %1017 = vmatpush.msra.mxu0 0.0
    %1018 = vmatpush.msra.mxu0 0.0
    %1019 = vmatpush.msra.mxu0 0.0
    %1020 = vmatpush.msra.mxu0 0.0
    %1021 = vmatpush.msra.mxu0 0.0
    %1022 = vmatpush.msra.mxu0 0.0
    %1023 = vmatpush.msra.mxu0 0.0
    %1024 = vmatpush.msra.mxu0 0.0
    %1025 = vmatpush.msra.mxu0 0.0
    %1026 = vmatpush.msra.mxu0 0.0
    %1027 = vmatpush.msra.mxu0 %v1007
    %1028 = vmatpush.msra.mxu0 %v1005
    %1029 = vmatpush.msra.mxu0 %v1003
    %1030 = vmatpush.msra.mxu0 %v1001
    %1031 = vmatmul.f32.gmra.mxu0 %v1013
    %v1032 = vpop.f32.mrf.mxu0
    %v1033 = vadd.f32 0.0, %v1032
    %1034 = vdwg.mxu0
    %1039 = vrot.lane.b32.xlu0 %v383, 64
    %v1040 = vpop.permute.xlu0 %1039
    %1041 = vrot.lane.b32.xlu0 %v384, 64
    %v1042 = vpop.permute.xlu0 %1041
    %1043 = vrot.lane.b32.xlu0 %v385, 64
    %v1044 = vpop.permute.xlu0 %1043
    %1045 = vrot.lane.b32.xlu0 %v386, 64
    %v1046 = vpop.permute.xlu0 %1045
    %v1052 = vsel %vm245, %v913, 0
    %1054 = vmatpush.msra.mxu0 0.0
    %1055 = vmatpush.msra.mxu0 0.0
    %1056 = vmatpush.msra.mxu0 0.0
    %1057 = vmatpush.msra.mxu0 0.0
    %1058 = vmatpush.msra.mxu0 0.0
    %1059 = vmatpush.msra.mxu0 0.0
    %1060 = vmatpush.msra.mxu0 0.0
    %1061 = vmatpush.msra.mxu0 0.0
    %1062 = vmatpush.msra.mxu0 0.0
    %1063 = vmatpush.msra.mxu0 0.0
    %1064 = vmatpush.msra.mxu0 0.0
    %1065 = vmatpush.msra.mxu0 0.0
    %1066 = vmatpush.msra.mxu0 %v1046
    %1067 = vmatpush.msra.mxu0 %v1044
    %1068 = vmatpush.msra.mxu0 %v1042
    %1069 = vmatpush.msra.mxu0 %v1040
    %1070 = vmatmul.f32.gmra.mxu0 %v1052
    %v1071 = vpop.f32.mrf.mxu0
    %v1072 = vadd.f32 0.0, %v1071
    %1073 = vdwg.mxu0
    %1078 = vrot.lane.b32.xlu0 %v387, 64
    %v1079 = vpop.permute.xlu0 %1078
    %1080 = vrot.lane.b32.xlu0 %v388, 64
    %v1081 = vpop.permute.xlu0 %1080
    %1082 = vrot.lane.b32.xlu0 %v389, 64
    %v1083 = vpop.permute.xlu0 %1082
    %1084 = vrot.lane.b32.xlu0 %v390, 64
    %v1085 = vpop.permute.xlu0 %1084
    %v1091 = vsel %vm245, %v914, 0
    %1093 = vmatpush.msra.mxu0 0.0
    %1094 = vmatpush.msra.mxu0 0.0
    %1095 = vmatpush.msra.mxu0 0.0
    %1096 = vmatpush.msra.mxu0 0.0
    %1097 = vmatpush.msra.mxu0 0.0
    %1098 = vmatpush.msra.mxu0 0.0
    %1099 = vmatpush.msra.mxu0 0.0
    %1100 = vmatpush.msra.mxu0 0.0
    %1101 = vmatpush.msra.mxu0 0.0
    %1102 = vmatpush.msra.mxu0 0.0
    %1103 = vmatpush.msra.mxu0 0.0
    %1104 = vmatpush.msra.mxu0 0.0
    %1105 = vmatpush.msra.mxu0 %v1085
    %1106 = vmatpush.msra.mxu0 %v1083
    %1107 = vmatpush.msra.mxu0 %v1081
    %1108 = vmatpush.msra.mxu0 %v1079
    %1109 = vmatmul.f32.gmra.mxu0 %v1091
    %v1110 = vpop.f32.mrf.mxu0
    %v1111 = vadd.f32 0.0, %v1110
    %1112 = vdwg.mxu0
    %1117 = vrot.lane.b32.xlu0 %v391, 64
    %v1118 = vpop.permute.xlu0 %1117
    %1119 = vrot.lane.b32.xlu0 %v392, 64
    %v1120 = vpop.permute.xlu0 %1119
    %1121 = vrot.lane.b32.xlu0 %v393, 64
    %v1122 = vpop.permute.xlu0 %1121
    %1123 = vrot.lane.b32.xlu0 %v394, 64
    %v1124 = vpop.permute.xlu0 %1123
    %v1130 = vsel %vm245, %v915, 0
    %1132 = vmatpush.msra.mxu0 0.0
    %1133 = vmatpush.msra.mxu0 0.0
    %1134 = vmatpush.msra.mxu0 0.0
    %1135 = vmatpush.msra.mxu0 0.0
    %1136 = vmatpush.msra.mxu0 0.0
    %1137 = vmatpush.msra.mxu0 0.0
    %1138 = vmatpush.msra.mxu0 0.0
    %1139 = vmatpush.msra.mxu0 0.0
    %1140 = vmatpush.msra.mxu0 0.0
    %1141 = vmatpush.msra.mxu0 0.0
    %1142 = vmatpush.msra.mxu0 0.0
    %1143 = vmatpush.msra.mxu0 0.0
    %1144 = vmatpush.msra.mxu0 %v1124
    %1145 = vmatpush.msra.mxu0 %v1122
    %1146 = vmatpush.msra.mxu0 %v1120
    %1147 = vmatpush.msra.mxu0 %v1118
    %1148 = vmatmul.f32.gmra.mxu0 %v1130
    %v1149 = vpop.f32.mrf.mxu0
    %v1150 = vadd.f32 0.0, %v1149
    %1151 = vdwg.mxu0
    %1156 = vrot.lane.b32.xlu0 %v395, 64
    %v1157 = vpop.permute.xlu0 %1156
    %1158 = vrot.lane.b32.xlu0 %v396, 64
    %v1159 = vpop.permute.xlu0 %1158
    %1160 = vrot.lane.b32.xlu0 %v397, 64
    %v1161 = vpop.permute.xlu0 %1160
    %1162 = vrot.lane.b32.xlu0 %v398, 64
    %v1163 = vpop.permute.xlu0 %1162
    %v1169 = vsel %vm245, %v916, 0
    %1171 = vmatpush.msra.mxu0 0.0
    %1172 = vmatpush.msra.mxu0 0.0
    %1173 = vmatpush.msra.mxu0 0.0
    %1174 = vmatpush.msra.mxu0 0.0
    %1175 = vmatpush.msra.mxu0 0.0
    %1176 = vmatpush.msra.mxu0 0.0
    %1177 = vmatpush.msra.mxu0 0.0
    %1178 = vmatpush.msra.mxu0 0.0
    %1179 = vmatpush.msra.mxu0 0.0
    %1180 = vmatpush.msra.mxu0 0.0
    %1181 = vmatpush.msra.mxu0 0.0
    %1182 = vmatpush.msra.mxu0 0.0
    %1183 = vmatpush.msra.mxu0 %v1163
    %1184 = vmatpush.msra.mxu0 %v1161
    %1185 = vmatpush.msra.mxu0 %v1159
    %1186 = vmatpush.msra.mxu0 %v1157
    %1187 = vmatmul.f32.gmra.mxu0 %v1169
    %v1188 = vpop.f32.mrf.mxu0
    %v1189 = vadd.f32 0.0, %v1188
    %1190 = vdwg.mxu0
    %1195 = vrot.lane.b32.xlu0 %v399, 64
    %v1196 = vpop.permute.xlu0 %1195
    %1197 = vrot.lane.b32.xlu0 %v400, 64
    %v1198 = vpop.permute.xlu0 %1197
    %1199 = vrot.lane.b32.xlu0 %v401, 64
    %v1200 = vpop.permute.xlu0 %1199
    %1201 = vrot.lane.b32.xlu0 %v402, 64
    %v1202 = vpop.permute.xlu0 %1201
    %v1208 = vsel %vm245, %v917, 0
    %1210 = vmatpush.msra.mxu0 0.0
    %1211 = vmatpush.msra.mxu0 0.0
    %1212 = vmatpush.msra.mxu0 0.0
    %1213 = vmatpush.msra.mxu0 0.0
    %1214 = vmatpush.msra.mxu0 0.0
    %1215 = vmatpush.msra.mxu0 0.0
    %1216 = vmatpush.msra.mxu0 0.0
    %1217 = vmatpush.msra.mxu0 0.0
    %1218 = vmatpush.msra.mxu0 0.0
    %1219 = vmatpush.msra.mxu0 0.0
    %1220 = vmatpush.msra.mxu0 0.0
    %1221 = vmatpush.msra.mxu0 0.0
    %1222 = vmatpush.msra.mxu0 %v1202
    %1223 = vmatpush.msra.mxu0 %v1200
    %1224 = vmatpush.msra.mxu0 %v1198
    %1225 = vmatpush.msra.mxu0 %v1196
    %1226 = vmatmul.f32.gmra.mxu0 %v1208
    %v1227 = vpop.f32.mrf.mxu0
    %v1228 = vadd.f32 0.0, %v1227
    %1229 = vdwg.mxu0
    %v1230 = vld [vmem:[%s19] sm:$0xff]
    %v1231 = vld [vmem:[%s19 + $0x8] sm:$0xff]
    %v1232 = vld [vmem:[%s19 + $0x10] sm:$0xff]
    %v1233 = vld [vmem:[%s19 + $0x18] sm:$0xff]
    %v1234 = vld [vmem:[%s21] sm:$0x1]
    %v1236 = vperm.slane %v1234, 0
    %v1239 = vsel %vm245, %v955, 0
    %v1242 = vsel %vm245, %v994, 0
    %v1245 = vsel %vm245, %v1033, 0
    %v1248 = vsel %vm245, %v1072, 0
    %v1251 = vsel %vm245, %v1111, 0
    %v1254 = vsel %vm245, %v1150, 0
    %v1257 = vsel %vm245, %v1189, 0
    %v1260 = vsel %vm245, %v1228, 0
    %1262 = vmatpush.msra.mxu0 0.0
    %1263 = vmatpush.msra.mxu0 0.0
    %1264 = vmatpush.msra.mxu0 0.0
    %1265 = vmatpush.msra.mxu0 0.0
    %1266 = vmatpush.msra.mxu0 0.0
    %1267 = vmatpush.msra.mxu0 0.0
    %1268 = vmatpush.msra.mxu0 0.0
    %1269 = vmatpush.msra.mxu0 0.0
    %1270 = vmatpush.msra.mxu0 0.0
    %1271 = vmatpush.msra.mxu0 0.0
    %1272 = vmatpush.msra.mxu0 0.0
    %1273 = vmatpush.msra.mxu0 0.0
    %1274 = vmatpush.msra.mxu0 %v1233
    %1275 = vmatpush.msra.mxu0 %v1232
    %1276 = vmatpush.msra.mxu0 %v1231
    %1277 = vmatpush.msra.mxu0 %v1230
    %1278 = vmatmul.f32.gmra.mxu0 %v1239
    %v1279 = vpop.f32.mrf.mxu0
    %v1280 = vadd.f32 %v1236, %v1279
    %1281 = vmatmul.f32.gmra.mxu0 %v1242
    %v1282 = vpop.f32.mrf.mxu0
    %v1283 = vadd.f32 %v1236, %v1282
    %1284 = vmatmul.f32.gmra.mxu0 %v1245
    %v1285 = vpop.f32.mrf.mxu0
    %v1286 = vadd.f32 %v1236, %v1285
    %1287 = vmatmul.f32.gmra.mxu0 %v1248
    %v1288 = vpop.f32.mrf.mxu0
    %v1289 = vadd.f32 %v1236, %v1288
    %1290 = vmatmul.f32.gmra.mxu0 %v1251
    %v1291 = vpop.f32.mrf.mxu0
    %v1292 = vadd.f32 %v1236, %v1291
    %1293 = vmatmul.f32.gmra.mxu0 %v1254
    %v1294 = vpop.f32.mrf.mxu0
    %v1295 = vadd.f32 %v1236, %v1294
    %1296 = vmatmul.f32.gmra.mxu0 %v1257
    %v1297 = vpop.f32.mrf.mxu0
    %v1298 = vadd.f32 %v1236, %v1297
    %1299 = vmatmul.f32.gmra.mxu0 %v1260
    %v1300 = vpop.f32.mrf.mxu0
    %v1301 = vadd.f32 %v1236, %v1300
    %1302 = vdwg.mxu0
    %v1303 = vadd.f32 %v219, %v1280
    %v1304 = vadd.f32 %v220, %v1283
    %v1305 = vadd.f32 %v221, %v1286
    %v1306 = vadd.f32 %v222, %v1289
    %v1307 = vadd.f32 %v223, %v1292
    %v1308 = vadd.f32 %v224, %v1295
    %v1309 = vadd.f32 %v225, %v1298
    %v1310 = vadd.f32 %v226, %v1301
    %v1311 = vsel %vm245, %v1303, 0.0
    %v1312 = vsel %vm245, %v1304, 0.0
    %v1313 = vadd.f32 %v1311, %v1312
    %v1314 = vsel %vm245, %v1305, 0.0
    %v1315 = vadd.f32 %v1313, %v1314
    %v1316 = vsel %vm245, %v1306, 0.0
    %v1317 = vadd.f32 %v1315, %v1316
    %v1318 = vsel %vm245, %v1307, 0.0
    %v1319 = vadd.f32 %v1317, %v1318
    %v1320 = vsel %vm245, %v1308, 0.0
    %v1321 = vadd.f32 %v1319, %v1320
    %v1322 = vsel %vm245, %v1309, 0.0
    %v1323 = vadd.f32 %v1321, %v1322
    %v1324 = vsel %vm245, %v1310, 0.0
    %v1325 = vadd.f32 %v1323, %v1324
    %v1326 = vrot.slane %v1325, 4
    %v1327 = vadd.f32 %v1325, %v1326
    %v1328 = vrot.slane %v1327, 2
    %v1329 = vadd.f32 %v1327, %v1328
    %v1330 = vrot.slane %v1329, 1
    %v1331 = vadd.f32 %v1329, %v1330
    %v1332 = vrcp.pop 64.0
    %v1333 = vmul.f32 64.0, %v1332
    %v1334 = vsub.f32 1.0, %v1333
    %v1335 = vmul.f32 %v1332, %v1334
    %v1336 = vadd.f32 %v1332, %v1335
    %vm1337 = vweird.f32 %v1332
    %v1338 = vsel %vm1337, %v1332, %v1336
    %v1339 = vmul.f32 %v1331, %v1338
    %v1340 = vsub.f32 %v1303, %v1339
    %v1341 = vsub.f32 %v1304, %v1339
    %v1342 = vsub.f32 %v1305, %v1339
    %v1343 = vsub.f32 %v1306, %v1339
    %v1344 = vsub.f32 %v1307, %v1339
    %v1345 = vsub.f32 %v1308, %v1339
    %v1346 = vsub.f32 %v1309, %v1339
    %v1347 = vsub.f32 %v1310, %v1339
    %v1348 = vmul.f32 %v1340, %v1340
    %v1349 = vmul.f32 %v1341, %v1341
    %v1350 = vmul.f32 %v1342, %v1342
    %v1351 = vmul.f32 %v1343, %v1343
    %v1352 = vmul.f32 %v1344, %v1344
    %v1353 = vmul.f32 %v1345, %v1345
    %v1354 = vmul.f32 %v1346, %v1346
    %v1355 = vmul.f32 %v1347, %v1347
    %v1356 = vsel %vm245, %v1348, 0.0
    %v1357 = vsel %vm245, %v1349, 0.0
    %v1358 = vadd.f32 %v1356, %v1357
    %v1359 = vsel %vm245, %v1350, 0.0
    %v1360 = vadd.f32 %v1358, %v1359
    %v1361 = vsel %vm245, %v1351, 0.0
    %v1362 = vadd.f32 %v1360, %v1361
    %v1363 = vsel %vm245, %v1352, 0.0
    %v1364 = vadd.f32 %v1362, %v1363
    %v1365 = vsel %vm245, %v1353, 0.0
    %v1366 = vadd.f32 %v1364, %v1365
    %v1367 = vsel %vm245, %v1354, 0.0
    %v1368 = vadd.f32 %v1366, %v1367
    %v1369 = vsel %vm245, %v1355, 0.0
    %v1370 = vadd.f32 %v1368, %v1369
    %v1371 = vrot.slane %v1370, 4
    %v1372 = vadd.f32 %v1370, %v1371
    %v1373 = vrot.slane %v1372, 2
    %v1374 = vadd.f32 %v1372, %v1373
    %v1375 = vrot.slane %v1374, 1
    %v1376 = vadd.f32 %v1374, %v1375
    %v1377 = vmul.f32 %v1376, %v1338
    %v1378 = vadd.f32 %v1377, 1e-05
    %v1379 = vrsqrt.pop %v1378
    %v1380 = vmul.f32 %v1379, %v1378
    %v1381 = vmul.f32 %v1380, %v1379
    %v1382 = vmul.f32 0.5, %v1381
    %v1383 = vsub.f32 1.5, %v1382
    %v1384 = vmul.f32 %v1379, %v1383
    %vm1385 = vweird.f32 %v1378
    %vm1386 = vweird.f32 %v1379
    %vm1387 = vmor %vm1385, %vm1386
    %v1388 = vsel %vm1387, %v1379, %v1384
    %v1389 = vmul.f32 %v1340, %v1388
    %v1390 = vmul.f32 %v1341, %v1388
    %v1391 = vmul.f32 %v1342, %v1388
    %v1392 = vmul.f32 %v1343, %v1388
    %v1393 = vmul.f32 %v1344, %v1388
    %v1394 = vmul.f32 %v1345, %v1388
    %v1395 = vmul.f32 %v1346, %v1388
    %v1396 = vmul.f32 %v1347, %v1388
    %v1397 = vld [vmem:[%s23] sm:$0x1]
    %v1399 = vperm.slane %v1397, 0
    %v1401 = vmul.f32 %v1389, %v1399
    %v1402 = vmul.f32 %v1390, %v1399
    %v1403 = vmul.f32 %v1391, %v1399
    %v1404 = vmul.f32 %v1392, %v1399
    %v1405 = vmul.f32 %v1393, %v1399
    %v1406 = vmul.f32 %v1394, %v1399
    %v1407 = vmul.f32 %v1395, %v1399
    %v1408 = vmul.f32 %v1396, %v1399
    %v1409 = vld [vmem:[%s25] sm:$0x1]
    %v1411 = vperm.slane %v1409, 0
    %v1413 = vadd.f32 %v1401, %v1411
    %v1414 = vadd.f32 %v1402, %v1411
    %v1415 = vadd.f32 %v1403, %v1411
    %v1416 = vadd.f32 %v1404, %v1411
    %v1417 = vadd.f32 %v1405, %v1411
    %v1418 = vadd.f32 %v1406, %v1411
    %v1419 = vadd.f32 %v1407, %v1411
    %v1420 = vadd.f32 %v1408, %v1411
    %v1421 = vld [vmem:[%s27] sm:$0xff]
    %v1422 = vld [vmem:[%s27 + $0x8] sm:$0xff]
    %v1423 = vld [vmem:[%s27 + $0x10] sm:$0xff]
    %v1424 = vld [vmem:[%s27 + $0x18] sm:$0xff]
    %v1425 = vld [vmem:[%s29] sm:$0x1]
    %v1427 = vperm.slane %v1425, 0
    %v1430 = vsel %vm245, %v1413, 0
    %v1433 = vsel %vm245, %v1414, 0
    %v1436 = vsel %vm245, %v1415, 0
    %v1439 = vsel %vm245, %v1416, 0
    %v1442 = vsel %vm245, %v1417, 0
    %v1445 = vsel %vm245, %v1418, 0
    %v1448 = vsel %vm245, %v1419, 0
    %v1451 = vsel %vm245, %v1420, 0
    %1453 = vmatpush.msra.mxu0 0.0
    %1454 = vmatpush.msra.mxu0 0.0
    %1455 = vmatpush.msra.mxu0 0.0
    %1456 = vmatpush.msra.mxu0 0.0
    %1457 = vmatpush.msra.mxu0 0.0
    %1458 = vmatpush.msra.mxu0 0.0
    %1459 = vmatpush.msra.mxu0 0.0
    %1460 = vmatpush.msra.mxu0 0.0
    %1461 = vmatpush.msra.mxu0 0.0
    %1462 = vmatpush.msra.mxu0 0.0
    %1463 = vmatpush.msra.mxu0 0.0
    %1464 = vmatpush.msra.mxu0 0.0
    %1465 = vmatpush.msra.mxu0 %v1424
    %1466 = vmatpush.msra.mxu0 %v1423
    %1467 = vmatpush.msra.mxu0 %v1422
    %1468 = vmatpush.msra.mxu0 %v1421
    %1469 = vmatmul.f32.gmra.mxu0 %v1430
    %v1470 = vpop.f32.mrf.mxu0
    %v1471 = vadd.f32 %v1427, %v1470
    %1472 = vmatmul.f32.gmra.mxu0 %v1433
    %v1473 = vpop.f32.mrf.mxu0
    %v1474 = vadd.f32 %v1427, %v1473
    %1475 = vmatmul.f32.gmra.mxu0 %v1436
    %v1476 = vpop.f32.mrf.mxu0
    %v1477 = vadd.f32 %v1427, %v1476
    %1478 = vmatmul.f32.gmra.mxu0 %v1439
    %v1479 = vpop.f32.mrf.mxu0
    %v1480 = vadd.f32 %v1427, %v1479
    %1481 = vmatmul.f32.gmra.mxu0 %v1442
    %v1482 = vpop.f32.mrf.mxu0
    %v1483 = vadd.f32 %v1427, %v1482
    %1484 = vmatmul.f32.gmra.mxu0 %v1445
    %v1485 = vpop.f32.mrf.mxu0
    %v1486 = vadd.f32 %v1427, %v1485
    %1487 = vmatmul.f32.gmra.mxu0 %v1448
    %v1488 = vpop.f32.mrf.mxu0
    %v1489 = vadd.f32 %v1427, %v1488
    %1490 = vmatmul.f32.gmra.mxu0 %v1451
    %v1491 = vpop.f32.mrf.mxu0
    %v1492 = vadd.f32 %v1427, %v1491
    %1493 = vdwg.mxu0
    %v1494 = vmul.f32 %v1471, 0.5
    %v1495 = vmul.f32 %v1474, 0.5
    %v1496 = vmul.f32 %v1477, 0.5
    %v1497 = vmul.f32 %v1480, 0.5
    %v1498 = vmul.f32 %v1483, 0.5
    %v1499 = vmul.f32 %v1486, 0.5
    %v1500 = vmul.f32 %v1489, 0.5
    %v1501 = vmul.f32 %v1492, 0.5
    %v1502 = vmul.f32 %v1471, 0.70710677
    %v1503 = vmul.f32 %v1474, 0.70710677
    %v1504 = vmul.f32 %v1477, 0.70710677
    %v1505 = vmul.f32 %v1480, 0.70710677
    %v1506 = vmul.f32 %v1483, 0.70710677
    %v1507 = vmul.f32 %v1486, 0.70710677
    %v1508 = vmul.f32 %v1489, 0.70710677
    %v1509 = vmul.f32 %v1492, 0.70710677
    %v1510 = vand.u32 2147483647, %v1502
    %v1511 = vand.u32 2147483647, %v1503
    %v1512 = vand.u32 2147483647, %v1504
    %v1513 = vand.u32 2147483647, %v1505
    %v1514 = vand.u32 2147483647, %v1506
    %v1515 = vand.u32 2147483647, %v1507
    %v1516 = vand.u32 2147483647, %v1508
    %v1517 = vand.u32 2147483647, %v1509
    %v1518 = vmul.f32 %v1510, 0.3275911
    %v1519 = vmul.f32 %v1511, 0.3275911
    %v1520 = vmul.f32 %v1512, 0.3275911
    %v1521 = vmul.f32 %v1513, 0.3275911
    %v1522 = vmul.f32 %v1514, 0.3275911
    %v1523 = vmul.f32 %v1515, 0.3275911
    %v1524 = vmul.f32 %v1516, 0.3275911
    %v1525 = vmul.f32 %v1517, 0.3275911
    %v1526 = vadd.f32 %v1518, 1.0
    %v1527 = vadd.f32 %v1519, 1.0
    %v1528 = vadd.f32 %v1520, 1.0
    %v1529 = vadd.f32 %v1521, 1.0
    %v1530 = vadd.f32 %v1522, 1.0
    %v1531 = vadd.f32 %v1523, 1.0
    %v1532 = vadd.f32 %v1524, 1.0
    %v1533 = vadd.f32 %v1525, 1.0
    %v1534 = vrcp.pop %v1526
    %v1535 = vmul.f32 %v1526, %v1534
    %v1536 = vsub.f32 1.0, %v1535
    %v1537 = vmul.f32 %v1534, %v1536
    %v1538 = vadd.f32 %v1534, %v1537
    %vm1539 = vweird.f32 %v1526
    %vm1540 = vweird.f32 %v1534
    %vm1541 = vmor %vm1539, %vm1540
    %v1542 = vsel %vm1541, %v1534, %v1538
    %v1543 = vand.u32 2147483647, %v1526
    %vm1544 = vcmp.eq.f32.partialorder %v1543, 8.507059e+37
    %v1545 = vand.u32 %v1526, 2147483648
    %v1546 = vor.u32 1.1754944e-38, %v1545
    %v1547 = vsel %vm1544, %v1546, %v1542
    %v1548 = vmul.f32 1.0, %v1547
    %v1549 = vrcp.pop %v1527
    %v1550 = vmul.f32 %v1527, %v1549
    %v1551 = vsub.f32 1.0, %v1550
    %v1552 = vmul.f32 %v1549, %v1551
    %v1553 = vadd.f32 %v1549, %v1552
    %vm1554 = vweird.f32 %v1527
    %vm1555 = vweird.f32 %v1549
    %vm1556 = vmor %vm1554, %vm1555
    %v1557 = vsel %vm1556, %v1549, %v1553
    %v1558 = vand.u32 2147483647, %v1527
    %vm1559 = vcmp.eq.f32.partialorder %v1558, 8.507059e+37
    %v1560 = vand.u32 %v1527, 2147483648
    %v1561 = vor.u32 1.1754944e-38, %v1560
    %v1562 = vsel %vm1559, %v1561, %v1557
    %v1563 = vmul.f32 1.0, %v1562
    %v1564 = vrcp.pop %v1528
    %v1565 = vmul.f32 %v1528, %v1564
    %v1566 = vsub.f32 1.0, %v1565
    %v1567 = vmul.f32 %v1564, %v1566
    %v1568 = vadd.f32 %v1564, %v1567
    %vm1569 = vweird.f32 %v1528
    %vm1570 = vweird.f32 %v1564
    %vm1571 = vmor %vm1569, %vm1570
    %v1572 = vsel %vm1571, %v1564, %v1568
    %v1573 = vand.u32 2147483647, %v1528
    %vm1574 = vcmp.eq.f32.partialorder %v1573, 8.507059e+37
    %v1575 = vand.u32 %v1528, 2147483648
    %v1576 = vor.u32 1.1754944e-38, %v1575
    %v1577 = vsel %vm1574, %v1576, %v1572
    %v1578 = vmul.f32 1.0, %v1577
    %v1579 = vrcp.pop %v1529
    %v1580 = vmul.f32 %v1529, %v1579
    %v1581 = vsub.f32 1.0, %v1580
    %v1582 = vmul.f32 %v1579, %v1581
    %v1583 = vadd.f32 %v1579, %v1582
    %vm1584 = vweird.f32 %v1529
    %vm1585 = vweird.f32 %v1579
    %vm1586 = vmor %vm1584, %vm1585
    %v1587 = vsel %vm1586, %v1579, %v1583
    %v1588 = vand.u32 2147483647, %v1529
    %vm1589 = vcmp.eq.f32.partialorder %v1588, 8.507059e+37
    %v1590 = vand.u32 %v1529, 2147483648
    %v1591 = vor.u32 1.1754944e-38, %v1590
    %v1592 = vsel %vm1589, %v1591, %v1587
    %v1593 = vmul.f32 1.0, %v1592
    %v1594 = vrcp.pop %v1530
    %v1595 = vmul.f32 %v1530, %v1594
    %v1596 = vsub.f32 1.0, %v1595
    %v1597 = vmul.f32 %v1594, %v1596
    %v1598 = vadd.f32 %v1594, %v1597
    %vm1599 = vweird.f32 %v1530
    %vm1600 = vweird.f32 %v1594
    %vm1601 = vmor %vm1599, %vm1600
    %v1602 = vsel %vm1601, %v1594, %v1598
    %v1603 = vand.u32 2147483647, %v1530
    %vm1604 = vcmp.eq.f32.partialorder %v1603, 8.507059e+37
    %v1605 = vand.u32 %v1530, 2147483648
    %v1606 = vor.u32 1.1754944e-38, %v1605
    %v1607 = vsel %vm1604, %v1606, %v1602
    %v1608 = vmul.f32 1.0, %v1607
    %v1609 = vrcp.pop %v1531
    %v1610 = vmul.f32 %v1531, %v1609
    %v1611 = vsub.f32 1.0, %v1610
    %v1612 = vmul.f32 %v1609, %v1611
    %v1613 = vadd.f32 %v1609, %v1612
    %vm1614 = vweird.f32 %v1531
    %vm1615 = vweird.f32 %v1609
    %vm1616 = vmor %vm1614, %vm1615
    %v1617 = vsel %vm1616, %v1609, %v1613
    %v1618 = vand.u32 2147483647, %v1531
    %vm1619 = vcmp.eq.f32.partialorder %v1618, 8.507059e+37
    %v1620 = vand.u32 %v1531, 2147483648
    %v1621 = vor.u32 1.1754944e-38, %v1620
    %v1622 = vsel %vm1619, %v1621, %v1617
    %v1623 = vmul.f32 1.0, %v1622
    %v1624 = vrcp.pop %v1532
    %v1625 = vmul.f32 %v1532, %v1624
    %v1626 = vsub.f32 1.0, %v1625
    %v1627 = vmul.f32 %v1624, %v1626
    %v1628 = vadd.f32 %v1624, %v1627
    %vm1629 = vweird.f32 %v1532
    %vm1630 = vweird.f32 %v1624
    %vm1631 = vmor %vm1629, %vm1630
    %v1632 = vsel %vm1631, %v1624, %v1628
    %v1633 = vand.u32 2147483647, %v1532
    %vm1634 = vcmp.eq.f32.partialorder %v1633, 8.507059e+37
    %v1635 = vand.u32 %v1532, 2147483648
    %v1636 = vor.u32 1.1754944e-38, %v1635
    %v1637 = vsel %vm1634, %v1636, %v1632
    %v1638 = vmul.f32 1.0, %v1637
    %v1639 = vrcp.pop %v1533
    %v1640 = vmul.f32 %v1533, %v1639
    %v1641 = vsub.f32 1.0, %v1640
    %v1642 = vmul.f32 %v1639, %v1641
    %v1643 = vadd.f32 %v1639, %v1642
    %vm1644 = vweird.f32 %v1533
    %vm1645 = vweird.f32 %v1639
    %vm1646 = vmor %vm1644, %vm1645
    %v1647 = vsel %vm1646, %v1639, %v1643
    %v1648 = vand.u32 2147483647, %v1533
    %vm1649 = vcmp.eq.f32.partialorder %v1648, 8.507059e+37
    %v1650 = vand.u32 %v1533, 2147483648
    %v1651 = vor.u32 1.1754944e-38, %v1650
    %v1652 = vsel %vm1649, %v1651, %v1647
    %v1653 = vmul.f32 1.0, %v1652
    %v1654 = vmul.f32 %v1548, 1.0614054
    %v1655 = vmul.f32 %v1563, 1.0614054
    %v1656 = vmul.f32 %v1578, 1.0614054
    %v1657 = vmul.f32 %v1593, 1.0614054
    %v1658 = vmul.f32 %v1608, 1.0614054
    %v1659 = vmul.f32 %v1623, 1.0614054
    %v1660 = vmul.f32 %v1638, 1.0614054
    %v1661 = vmul.f32 %v1653, 1.0614054
    %v1662 = vadd.f32 %v1654, -1.4531521
    %v1663 = vadd.f32 %v1655, -1.4531521
    %v1664 = vadd.f32 %v1656, -1.4531521
    %v1665 = vadd.f32 %v1657, -1.4531521
    %v1666 = vadd.f32 %v1658, -1.4531521
    %v1667 = vadd.f32 %v1659, -1.4531521
    %v1668 = vadd.f32 %v1660, -1.4531521
    %v1669 = vadd.f32 %v1661, -1.4531521
    %v1670 = vmul.f32 %v1662, %v1548
    %v1671 = vmul.f32 %v1663, %v1563
    %v1672 = vmul.f32 %v1664, %v1578
    %v1673 = vmul.f32 %v1665, %v1593
    %v1674 = vmul.f32 %v1666, %v1608
    %v1675 = vmul.f32 %v1667, %v1623
    %v1676 = vmul.f32 %v1668, %v1638
    %v1677 = vmul.f32 %v1669, %v1653
    %v1678 = vadd.f32 %v1670, 1.4214138
    %v1679 = vadd.f32 %v1671, 1.4214138
    %v1680 = vadd.f32 %v1672, 1.4214138
    %v1681 = vadd.f32 %v1673, 1.4214138
    %v1682 = vadd.f32 %v1674, 1.4214138
    %v1683 = vadd.f32 %v1675, 1.4214138
    %v1684 = vadd.f32 %v1676, 1.4214138
    %v1685 = vadd.f32 %v1677, 1.4214138
    %v1686 = vmul.f32 %v1678, %v1548
    %v1687 = vmul.f32 %v1679, %v1563
    %v1688 = vmul.f32 %v1680, %v1578
    %v1689 = vmul.f32 %v1681, %v1593
    %v1690 = vmul.f32 %v1682, %v1608
    %v1691 = vmul.f32 %v1683, %v1623
    %v1692 = vmul.f32 %v1684, %v1638
    %v1693 = vmul.f32 %v1685, %v1653
    %v1694 = vadd.f32 %v1686, -0.28449672
    %v1695 = vadd.f32 %v1687, -0.28449672
    %v1696 = vadd.f32 %v1688, -0.28449672
    %v1697 = vadd.f32 %v1689, -0.28449672
    %v1698 = vadd.f32 %v1690, -0.28449672
    %v1699 = vadd.f32 %v1691, -0.28449672
    %v1700 = vadd.f32 %v1692, -0.28449672
    %v1701 = vadd.f32 %v1693, -0.28449672
    %v1702 = vmul.f32 %v1694, %v1548
    %v1703 = vmul.f32 %v1695, %v1563
    %v1704 = vmul.f32 %v1696, %v1578
    %v1705 = vmul.f32 %v1697, %v1593
    %v1706 = vmul.f32 %v1698, %v1608
    %v1707 = vmul.f32 %v1699, %v1623
    %v1708 = vmul.f32 %v1700, %v1638
    %v1709 = vmul.f32 %v1701, %v1653
    %v1710 = vadd.f32 %v1702, 0.2548296
    %v1711 = vadd.f32 %v1703, 0.2548296
    %v1712 = vadd.f32 %v1704, 0.2548296
    %v1713 = vadd.f32 %v1705, 0.2548296
    %v1714 = vadd.f32 %v1706, 0.2548296
    %v1715 = vadd.f32 %v1707, 0.2548296
    %v1716 = vadd.f32 %v1708, 0.2548296
    %v1717 = vadd.f32 %v1709, 0.2548296
    %v1718 = vmul.f32 %v1710, %v1548
    %v1719 = vmul.f32 %v1711, %v1563
    %v1720 = vmul.f32 %v1712, %v1578
    %v1721 = vmul.f32 %v1713, %v1593
    %v1722 = vmul.f32 %v1714, %v1608
    %v1723 = vmul.f32 %v1715, %v1623
    %v1724 = vmul.f32 %v1716, %v1638
    %v1725 = vmul.f32 %v1717, %v1653
    %v1726 = vsub.f32 0.0, %v1510
    %v1727 = vsub.f32 0.0, %v1511
    %v1728 = vsub.f32 0.0, %v1512
    %v1729 = vsub.f32 0.0, %v1513
    %v1730 = vsub.f32 0.0, %v1514
    %v1731 = vsub.f32 0.0, %v1515
    %v1732 = vsub.f32 0.0, %v1516
    %v1733 = vsub.f32 0.0, %v1517
    %v1734 = vmul.f32 %v1726, %v1510
    %v1735 = vmul.f32 %v1727, %v1511
    %v1736 = vmul.f32 %v1728, %v1512
    %v1737 = vmul.f32 %v1729, %v1513
    %v1738 = vmul.f32 %v1730, %v1514
    %v1739 = vmul.f32 %v1731, %v1515
    %v1740 = vmul.f32 %v1732, %v1516
    %v1741 = vmul.f32 %v1733, %v1517
    %v1742 = vmul.f32 %v1734, 1.442695
    %v1743 = vpow.pop %v1742
    %v1744 = vmul.f32 %v1735, 1.442695
    %v1745 = vpow.pop %v1744
    %v1746 = vmul.f32 %v1736, 1.442695
    %v1747 = vpow.pop %v1746
    %v1748 = vmul.f32 %v1737, 1.442695
    %v1749 = vpow.pop %v1748
    %v1750 = vmul.f32 %v1738, 1.442695
    %v1751 = vpow.pop %v1750
    %v1752 = vmul.f32 %v1739, 1.442695
    %v1753 = vpow.pop %v1752
    %v1754 = vmul.f32 %v1740, 1.442695
    %v1755 = vpow.pop %v1754
    %v1756 = vmul.f32 %v1741, 1.442695
    %v1757 = vpow.pop %v1756
    %v1758 = vmul.f32 %v1718, %v1743
    %v1759 = vmul.f32 %v1719, %v1745
    %v1760 = vmul.f32 %v1720, %v1747
    %v1761 = vmul.f32 %v1721, %v1749
    %v1762 = vmul.f32 %v1722, %v1751
    %v1763 = vmul.f32 %v1723, %v1753
    %v1764 = vmul.f32 %v1724, %v1755
    %v1765 = vmul.f32 %v1725, %v1757
    %v1766 = vsub.f32 1.0, %v1758
    %v1767 = vsub.f32 1.0, %v1759
    %v1768 = vsub.f32 1.0, %v1760
    %v1769 = vsub.f32 1.0, %v1761
    %v1770 = vsub.f32 1.0, %v1762
    %v1771 = vsub.f32 1.0, %v1763
    %v1772 = vsub.f32 1.0, %v1764
    %v1773 = vsub.f32 1.0, %v1765
    %vm1774 = vcmp.ge.f32.partialorder %v1502, 0.0
    %vm1775 = vcmp.ge.f32.partialorder %v1503, 0.0
    %vm1776 = vcmp.ge.f32.partialorder %v1504, 0.0
    %vm1777 = vcmp.ge.f32.partialorder %v1505, 0.0
    %vm1778 = vcmp.ge.f32.partialorder %v1506, 0.0
    %vm1779 = vcmp.ge.f32.partialorder %v1507, 0.0
    %vm1780 = vcmp.ge.f32.partialorder %v1508, 0.0
    %vm1781 = vcmp.ge.f32.partialorder %v1509, 0.0
    %v1782 = vsub.f32 0.0, %v1766
    %v1783 = vsub.f32 0.0, %v1767
    %v1784 = vsub.f32 0.0, %v1768
    %v1785 = vsub.f32 0.0, %v1769
    %v1786 = vsub.f32 0.0, %v1770
    %v1787 = vsub.f32 0.0, %v1771
    %v1788 = vsub.f32 0.0, %v1772
    %v1789 = vsub.f32 0.0, %v1773
    %v1790 = vsel %vm1774, %v1766, %v1782
    %v1791 = vsel %vm1775, %v1767, %v1783
    %v1792 = vsel %vm1776, %v1768, %v1784
    %v1793 = vsel %vm1777, %v1769, %v1785
    %v1794 = vsel %vm1778, %v1770, %v1786
    %v1795 = vsel %vm1779, %v1771, %v1787
    %v1796 = vsel %vm1780, %v1772, %v1788
    %v1797 = vsel %vm1781, %v1773, %v1789
    %v1798 = vadd.f32 %v1790, 1.0
    %v1799 = vadd.f32 %v1791, 1.0
    %v1800 = vadd.f32 %v1792, 1.0
    %v1801 = vadd.f32 %v1793, 1.0
    %v1802 = vadd.f32 %v1794, 1.0
    %v1803 = vadd.f32 %v1795, 1.0
    %v1804 = vadd.f32 %v1796, 1.0
    %v1805 = vadd.f32 %v1797, 1.0
    %v1806 = vmul.f32 %v1494, %v1798
    %v1807 = vmul.f32 %v1495, %v1799
    %v1808 = vmul.f32 %v1496, %v1800
    %v1809 = vmul.f32 %v1497, %v1801
    %v1810 = vmul.f32 %v1498, %v1802
    %v1811 = vmul.f32 %v1499, %v1803
    %v1812 = vmul.f32 %v1500, %v1804
    %v1813 = vmul.f32 %v1501, %v1805
    %v1814 = vld [vmem:[%s31] sm:$0xff]
    %v1815 = vld [vmem:[%s31 + $0x8] sm:$0xff]
    %v1816 = vld [vmem:[%s31 + $0x10] sm:$0xff]
    %v1817 = vld [vmem:[%s31 + $0x18] sm:$0xff]
    %v1818 = vld [vmem:[%s31 + $0x20] sm:$0xff]
    %v1819 = vld [vmem:[%s31 + $0x28] sm:$0xff]
    %v1820 = vld [vmem:[%s31 + $0x30] sm:$0xff]
    %v1821 = vld [vmem:[%s31 + $0x38] sm:$0xff]
    %v1822 = vld [vmem:[%s33] sm:$0x1]
    %v1824 = vperm.slane %v1822, 0
    %vm1826 = vcmask 523264
    %v1828 = vsel %vm1826, %v1806, 0
    %v1831 = vsel %vm1826, %v1807, 0
    %v1834 = vsel %vm1826, %v1808, 0
    %v1837 = vsel %vm1826, %v1809, 0
    %v1840 = vsel %vm1826, %v1810, 0
    %v1843 = vsel %vm1826, %v1811, 0
    %v1846 = vsel %vm1826, %v1812, 0
    %v1849 = vsel %vm1826, %v1813, 0
    %1851 = vmatpush.msra.mxu0 0.0
    %1852 = vmatpush.msra.mxu0 0.0
    %1853 = vmatpush.msra.mxu0 0.0
    %1854 = vmatpush.msra.mxu0 0.0
    %1855 = vmatpush.msra.mxu0 0.0
    %1856 = vmatpush.msra.mxu0 0.0
    %1857 = vmatpush.msra.mxu0 0.0
    %1858 = vmatpush.msra.mxu0 0.0
    %1859 = vmatpush.msra.mxu0 %v1821
    %1860 = vmatpush.msra.mxu0 %v1820
    %1861 = vmatpush.msra.mxu0 %v1819
    %1862 = vmatpush.msra.mxu0 %v1818
    %1863 = vmatpush.msra.mxu0 %v1817
    %1864 = vmatpush.msra.mxu0 %v1816
    %1865 = vmatpush.msra.mxu0 %v1815
    %1866 = vmatpush.msra.mxu0 %v1814
    %1867 = vmatmul.f32.gmra.mxu0 %v1828
    %v1868 = vpop.f32.mrf.mxu0
    %v1869 = vadd.f32 %v1824, %v1868
    %1870 = vmatmul.f32.gmra.mxu0 %v1831
    %v1871 = vpop.f32.mrf.mxu0
    %v1872 = vadd.f32 %v1824, %v1871
    %1873 = vmatmul.f32.gmra.mxu0 %v1834
    %v1874 = vpop.f32.mrf.mxu0
    %v1875 = vadd.f32 %v1824, %v1874
    %1876 = vmatmul.f32.gmra.mxu0 %v1837
    %v1877 = vpop.f32.mrf.mxu0
    %v1878 = vadd.f32 %v1824, %v1877
    %1879 = vmatmul.f32.gmra.mxu0 %v1840
    %v1880 = vpop.f32.mrf.mxu0
    %v1881 = vadd.f32 %v1824, %v1880
    %1882 = vmatmul.f32.gmra.mxu0 %v1843
    %v1883 = vpop.f32.mrf.mxu0
    %v1884 = vadd.f32 %v1824, %v1883
    %1885 = vmatmul.f32.gmra.mxu0 %v1846
    %v1886 = vpop.f32.mrf.mxu0
    %v1887 = vadd.f32 %v1824, %v1886
    %1888 = vmatmul.f32.gmra.mxu0 %v1849
    %v1889 = vpop.f32.mrf.mxu0
    %v1890 = vadd.f32 %v1824, %v1889
    %1891 = vdwg.mxu0
    %v1892 = vadd.f32 %v1413, %v1869
    %v1893 = vadd.f32 %v1414, %v1872
    %v1894 = vadd.f32 %v1415, %v1875
    %v1895 = vadd.f32 %v1416, %v1878
    %v1896 = vadd.f32 %v1417, %v1881
    %v1897 = vadd.f32 %v1418, %v1884
    %v1898 = vadd.f32 %v1419, %v1887
    %v1899 = vadd.f32 %v1420, %v1890
    %v1900 = vsel %vm245, %v1892, 0.0
    %v1901 = vsel %vm245, %v1893, 0.0
    %v1902 = vadd.f32 %v1900, %v1901
    %v1903 = vsel %vm245, %v1894, 0.0
    %v1904 = vadd.f32 %v1902, %v1903
    %v1905 = vsel %vm245, %v1895, 0.0
    %v1906 = vadd.f32 %v1904, %v1905
    %v1907 = vsel %vm245, %v1896, 0.0
    %v1908 = vadd.f32 %v1906, %v1907
    %v1909 = vsel %vm245, %v1897, 0.0
    %v1910 = vadd.f32 %v1908, %v1909
    %v1911 = vsel %vm245, %v1898, 0.0
    %v1912 = vadd.f32 %v1910, %v1911
    %v1913 = vsel %vm245, %v1899, 0.0
    %v1914 = vadd.f32 %v1912, %v1913
    %v1915 = vrot.slane %v1914, 4
    %v1916 = vadd.f32 %v1914, %v1915
    %v1917 = vrot.slane %v1916, 2
    %v1918 = vadd.f32 %v1916, %v1917
    %v1919 = vrot.slane %v1918, 1
    %v1920 = vadd.f32 %v1918, %v1919
    %v1921 = vmul.f32 %v1920, %v1338
    %v1922 = vsub.f32 %v1892, %v1921
    %v1923 = vsub.f32 %v1893, %v1921
    %v1924 = vsub.f32 %v1894, %v1921
    %v1925 = vsub.f32 %v1895, %v1921
    %v1926 = vsub.f32 %v1896, %v1921
    %v1927 = vsub.f32 %v1897, %v1921
    %v1928 = vsub.f32 %v1898, %v1921
    %v1929 = vsub.f32 %v1899, %v1921
    %v1930 = vmul.f32 %v1922, %v1922
    %v1931 = vmul.f32 %v1923, %v1923
    %v1932 = vmul.f32 %v1924, %v1924
    %v1933 = vmul.f32 %v1925, %v1925
    %v1934 = vmul.f32 %v1926, %v1926
    %v1935 = vmul.f32 %v1927, %v1927
    %v1936 = vmul.f32 %v1928, %v1928
    %v1937 = vmul.f32 %v1929, %v1929
    %v1938 = vsel %vm245, %v1930, 0.0
    %v1939 = vsel %vm245, %v1931, 0.0
    %v1940 = vadd.f32 %v1938, %v1939
    %v1941 = vsel %vm245, %v1932, 0.0
    %v1942 = vadd.f32 %v1940, %v1941
    %v1943 = vsel %vm245, %v1933, 0.0
    %v1944 = vadd.f32 %v1942, %v1943
    %v1945 = vsel %vm245, %v1934, 0.0
    %v1946 = vadd.f32 %v1944, %v1945
    %v1947 = vsel %vm245, %v1935, 0.0
    %v1948 = vadd.f32 %v1946, %v1947
    %v1949 = vsel %vm245, %v1936, 0.0
    %v1950 = vadd.f32 %v1948, %v1949
    %v1951 = vsel %vm245, %v1937, 0.0
    %v1952 = vadd.f32 %v1950, %v1951
    %v1953 = vrot.slane %v1952, 4
    %v1954 = vadd.f32 %v1952, %v1953
    %v1955 = vrot.slane %v1954, 2
    %v1956 = vadd.f32 %v1954, %v1955
    %v1957 = vrot.slane %v1956, 1
    %v1958 = vadd.f32 %v1956, %v1957
    %v1959 = vmul.f32 %v1958, %v1338
    %v1960 = vadd.f32 %v1959, 1e-05
    %v1961 = vrsqrt.pop %v1960
    %v1962 = vmul.f32 %v1961, %v1960
    %v1963 = vmul.f32 %v1962, %v1961
    %v1964 = vmul.f32 0.5, %v1963
    %v1965 = vsub.f32 1.5, %v1964
    %v1966 = vmul.f32 %v1961, %v1965
    %vm1967 = vweird.f32 %v1960
    %vm1968 = vweird.f32 %v1961
    %vm1969 = vmor %vm1967, %vm1968
    %v1970 = vsel %vm1969, %v1961, %v1966
    %v1971 = vmul.f32 %v1922, %v1970
    %v1972 = vmul.f32 %v1923, %v1970
    %v1973 = vmul.f32 %v1924, %v1970
    %v1974 = vmul.f32 %v1925, %v1970
    %v1975 = vmul.f32 %v1926, %v1970
    %v1976 = vmul.f32 %v1927, %v1970
    %v1977 = vmul.f32 %v1928, %v1970
    %v1978 = vmul.f32 %v1929, %v1970
    %v1979 = vld [vmem:[%s35] sm:$0x1]
    %v1981 = vperm.slane %v1979, 0
    %v1983 = vmul.f32 %v1971, %v1981
    %v1984 = vmul.f32 %v1972, %v1981
    %v1985 = vmul.f32 %v1973, %v1981
    %v1986 = vmul.f32 %v1974, %v1981
    %v1987 = vmul.f32 %v1975, %v1981
    %v1988 = vmul.f32 %v1976, %v1981
    %v1989 = vmul.f32 %v1977, %v1981
    %v1990 = vmul.f32 %v1978, %v1981
    %v1991 = vld [vmem:[%s37] sm:$0x1]
    %v1993 = vperm.slane %v1991, 0
    %v1995 = vadd.f32 %v1983, %v1993
    %v1996 = vadd.f32 %v1984, %v1993
    %v1997 = vadd.f32 %v1985, %v1993
    %v1998 = vadd.f32 %v1986, %v1993
    %v1999 = vadd.f32 %v1987, %v1993
    %v2000 = vadd.f32 %v1988, %v1993
    %v2001 = vadd.f32 %v1989, %v1993
    %v2002 = vadd.f32 %v1990, %v1993
    %v2003 = vld [vmem:[%s39] sm:$0xff]
    %v2004 = vld [vmem:[%s39 + $0x8] sm:$0xff]
    %v2005 = vld [vmem:[%s39 + $0x10] sm:$0xff]
    %v2006 = vld [vmem:[%s39 + $0x18] sm:$0xff]
    %v2007 = vld [vmem:[%s41] sm:$0x1]
    %v2009 = vperm.slane %v2007, 0
    %v2012 = vsel %vm245, %v1995, 0
    %v2015 = vsel %vm245, %v1996, 0
    %v2018 = vsel %vm245, %v1997, 0
    %v2021 = vsel %vm245, %v1998, 0
    %v2024 = vsel %vm245, %v1999, 0
    %v2027 = vsel %vm245, %v2000, 0
    %v2030 = vsel %vm245, %v2001, 0
    %v2033 = vsel %vm245, %v2002, 0
    %2035 = vmatpush.msra.mxu0 0.0
    %2036 = vmatpush.msra.mxu0 0.0
    %2037 = vmatpush.msra.mxu0 0.0
    %2038 = vmatpush.msra.mxu0 0.0
    %2039 = vmatpush.msra.mxu0 0.0
    %2040 = vmatpush.msra.mxu0 0.0
    %2041 = vmatpush.msra.mxu0 0.0
    %2042 = vmatpush.msra.mxu0 0.0
    %2043 = vmatpush.msra.mxu0 0.0
    %2044 = vmatpush.msra.mxu0 0.0
    %2045 = vmatpush.msra.mxu0 0.0
    %2046 = vmatpush.msra.mxu0 0.0
    %2047 = vmatpush.msra.mxu0 %v2006
    %2048 = vmatpush.msra.mxu0 %v2005
    %2049 = vmatpush.msra.mxu0 %v2004
    %2050 = vmatpush.msra.mxu0 %v2003
    %2051 = vmatmul.f32.gmra.mxu0 %v2012
    %v2052 = vpop.f32.mrf.mxu0
    %v2053 = vadd.f32 %v2009, %v2052
    %2054 = vmatmul.f32.gmra.mxu0 %v2015
    %v2055 = vpop.f32.mrf.mxu0
    %v2056 = vadd.f32 %v2009, %v2055
    %2057 = vmatmul.f32.gmra.mxu0 %v2018
    %v2058 = vpop.f32.mrf.mxu0
    %v2059 = vadd.f32 %v2009, %v2058
    %2060 = vmatmul.f32.gmra.mxu0 %v2021
    %v2061 = vpop.f32.mrf.mxu0
    %v2062 = vadd.f32 %v2009, %v2061
    %2063 = vmatmul.f32.gmra.mxu0 %v2024
    %v2064 = vpop.f32.mrf.mxu0
    %v2065 = vadd.f32 %v2009, %v2064
    %2066 = vmatmul.f32.gmra.mxu0 %v2027
    %v2067 = vpop.f32.mrf.mxu0
    %v2068 = vadd.f32 %v2009, %v2067
    %2069 = vmatmul.f32.gmra.mxu0 %v2030
    %v2070 = vpop.f32.mrf.mxu0
    %v2071 = vadd.f32 %v2009, %v2070
    %2072 = vmatmul.f32.gmra.mxu0 %v2033
    %v2073 = vpop.f32.mrf.mxu0
    %v2074 = vadd.f32 %v2009, %v2073
    %2075 = vdwg.mxu0
    %v2076 = vmul.f32 %v2053, %v316
    %v2077 = vmul.f32 %v2053, %v318
    %v2078 = vmul.f32 %v2053, %v320
    %v2079 = vmul.f32 %v2053, %v322
    %v2080 = vmul.f32 %v2056, %v316
    %v2081 = vmul.f32 %v2056, %v318
    %v2082 = vmul.f32 %v2056, %v320
    %v2083 = vmul.f32 %v2056, %v322
    %v2084 = vmul.f32 %v2059, %v316
    %v2085 = vmul.f32 %v2059, %v318
    %v2086 = vmul.f32 %v2059, %v320
    %v2087 = vmul.f32 %v2059, %v322
    %v2088 = vmul.f32 %v2062, %v316
    %v2089 = vmul.f32 %v2062, %v318
    %v2090 = vmul.f32 %v2062, %v320
    %v2091 = vmul.f32 %v2062, %v322
    %v2092 = vmul.f32 %v2065, %v316
    %v2093 = vmul.f32 %v2065, %v318
    %v2094 = vmul.f32 %v2065, %v320
    %v2095 = vmul.f32 %v2065, %v322
    %v2096 = vmul.f32 %v2068, %v316
    %v2097 = vmul.f32 %v2068, %v318
    %v2098 = vmul.f32 %v2068, %v320
    %v2099 = vmul.f32 %v2068, %v322
    %v2100 = vmul.f32 %v2071, %v316
    %v2101 = vmul.f32 %v2071, %v318
    %v2102 = vmul.f32 %v2071, %v320
    %v2103 = vmul.f32 %v2071, %v322
    %v2104 = vmul.f32 %v2074, %v316
    %v2105 = vmul.f32 %v2074, %v318
    %v2106 = vmul.f32 %v2074, %v320
    %v2107 = vmul.f32 %v2074, %v322
    %v2108 = vmul.f32 %v2053, %v360
    %v2109 = vmul.f32 %v2053, %v362
    %v2110 = vmul.f32 %v2053, %v364
    %v2111 = vmul.f32 %v2053, %v366
    %v2112 = vmul.f32 %v2056, %v360
    %v2113 = vmul.f32 %v2056, %v362
    %v2114 = vmul.f32 %v2056, %v364
    %v2115 = vmul.f32 %v2056, %v366
    %v2116 = vmul.f32 %v2059, %v360
    %v2117 = vmul.f32 %v2059, %v362
    %v2118 = vmul.f32 %v2059, %v364
    %v2119 = vmul.f32 %v2059, %v366
    %v2120 = vmul.f32 %v2062, %v360
    %v2121 = vmul.f32 %v2062, %v362
    %v2122 = vmul.f32 %v2062, %v364
    %v2123 = vmul.f32 %v2062, %v366
    %v2124 = vmul.f32 %v2065, %v360
    %v2125 = vmul.f32 %v2065, %v362
    %v2126 = vmul.f32 %v2065, %v364
    %v2127 = vmul.f32 %v2065, %v366
    %v2128 = vmul.f32 %v2068, %v360
    %v2129 = vmul.f32 %v2068, %v362
    %v2130 = vmul.f32 %v2068, %v364
    %v2131 = vmul.f32 %v2068, %v366
    %v2132 = vmul.f32 %v2071, %v360
    %v2133 = vmul.f32 %v2071, %v362
    %v2134 = vmul.f32 %v2071, %v364
    %v2135 = vmul.f32 %v2071, %v366
    %v2136 = vmul.f32 %v2074, %v360
    %v2137 = vmul.f32 %v2074, %v362
    %v2138 = vmul.f32 %v2074, %v364
    %v2139 = vmul.f32 %v2074, %v366
    %2144 = vrot.lane.b32.xlu0 %v2076, 96
    %v2145 = vpop.permute.xlu0 %2144
    %2146 = vrot.lane.b32.xlu0 %v2077, 96
    %v2147 = vpop.permute.xlu0 %2146
    %2148 = vrot.lane.b32.xlu0 %v2078, 96
    %v2149 = vpop.permute.xlu0 %2148
    %2150 = vrot.lane.b32.xlu0 %v2079, 96
    %v2151 = vpop.permute.xlu0 %2150
    %v2153 = vsel %vm245, %v2053, 0
    %v2155 = vsel %vm245, %v2145, 0
    %v2157 = vsel %vm245, %v2147, 0
    %v2159 = vsel %vm245, %v2149, 0
    %v2161 = vsel %vm245, %v2151, 0
    %2163 = vmatpush.xpose.msra.mxu0 0.0
    %2164 = vmatpush.xpose.msra.mxu0 0.0
    %2165 = vmatpush.xpose.msra.mxu0 0.0
    %2166 = vmatpush.xpose.msra.mxu0 0.0
    %2167 = vmatpush.xpose.msra.mxu0 0.0
    %2168 = vmatpush.xpose.msra.mxu0 0.0
    %2169 = vmatpush.xpose.msra.mxu0 0.0
    %2170 = vmatpush.xpose.msra.mxu0 0.0
    %2171 = vmatpush.xpose.msra.mxu0 0.0
    %2172 = vmatpush.xpose.msra.mxu0 0.0
    %2173 = vmatpush.xpose.msra.mxu0 0.0
    %2174 = vmatpush.xpose.msra.mxu0 0.0
    %2175 = vmatpush.xpose.msra.mxu0 %v2161
    %2176 = vmatpush.xpose.msra.mxu0 %v2159
    %2177 = vmatpush.xpose.msra.mxu0 %v2157
    %2178 = vmatpush.xpose.msra.mxu0 %v2155
    %2179 = vmatmul.f32.gmra.mxu0 %v2153
    %v2180 = vpop.f32.mrf.mxu0
    %v2181 = vadd.f32 0.0, %v2180
    %2182 = vdwg.mxu0
    %2187 = vrot.lane.b32.xlu0 %v2080, 96
    %v2188 = vpop.permute.xlu0 %2187
    %2189 = vrot.lane.b32.xlu0 %v2081, 96
    %v2190 = vpop.permute.xlu0 %2189
    %2191 = vrot.lane.b32.xlu0 %v2082, 96
    %v2192 = vpop.permute.xlu0 %2191
    %2193 = vrot.lane.b32.xlu0 %v2083, 96
    %v2194 = vpop.permute.xlu0 %2193
    %v2196 = vsel %vm245, %v2056, 0
    %v2198 = vsel %vm245, %v2188, 0
    %v2200 = vsel %vm245, %v2190, 0
    %v2202 = vsel %vm245, %v2192, 0
    %v2204 = vsel %vm245, %v2194, 0
    %2206 = vmatpush.xpose.msra.mxu0 0.0
    %2207 = vmatpush.xpose.msra.mxu0 0.0
    %2208 = vmatpush.xpose.msra.mxu0 0.0
    %2209 = vmatpush.xpose.msra.mxu0 0.0
    %2210 = vmatpush.xpose.msra.mxu0 0.0
    %2211 = vmatpush.xpose.msra.mxu0 0.0
    %2212 = vmatpush.xpose.msra.mxu0 0.0
    %2213 = vmatpush.xpose.msra.mxu0 0.0
    %2214 = vmatpush.xpose.msra.mxu0 0.0
    %2215 = vmatpush.xpose.msra.mxu0 0.0
    %2216 = vmatpush.xpose.msra.mxu0 0.0
    %2217 = vmatpush.xpose.msra.mxu0 0.0
    %2218 = vmatpush.xpose.msra.mxu0 %v2204
    %2219 = vmatpush.xpose.msra.mxu0 %v2202
    %2220 = vmatpush.xpose.msra.mxu0 %v2200
    %2221 = vmatpush.xpose.msra.mxu0 %v2198
    %2222 = vmatmul.f32.gmra.mxu0 %v2196
    %v2223 = vpop.f32.mrf.mxu0
    %v2224 = vadd.f32 0.0, %v2223
    %2225 = vdwg.mxu0
    %2230 = vrot.lane.b32.xlu0 %v2084, 96
    %v2231 = vpop.permute.xlu0 %2230
    %2232 = vrot.lane.b32.xlu0 %v2085, 96
    %v2233 = vpop.permute.xlu0 %2232
    %2234 = vrot.lane.b32.xlu0 %v2086, 96
    %v2235 = vpop.permute.xlu0 %2234
    %2236 = vrot.lane.b32.xlu0 %v2087, 96
    %v2237 = vpop.permute.xlu0 %2236
    %v2239 = vsel %vm245, %v2059, 0
    %v2241 = vsel %vm245, %v2231, 0
    %v2243 = vsel %vm245, %v2233, 0
    %v2245 = vsel %vm245, %v2235, 0
    %v2247 = vsel %vm245, %v2237, 0
    %2249 = vmatpush.xpose.msra.mxu0 0.0
    %2250 = vmatpush.xpose.msra.mxu0 0.0
    %2251 = vmatpush.xpose.msra.mxu0 0.0
    %2252 = vmatpush.xpose.msra.mxu0 0.0
    %2253 = vmatpush.xpose.msra.mxu0 0.0
    %2254 = vmatpush.xpose.msra.mxu0 0.0
    %2255 = vmatpush.xpose.msra.mxu0 0.0
    %2256 = vmatpush.xpose.msra.mxu0 0.0
    %2257 = vmatpush.xpose.msra.mxu0 0.0
    %2258 = vmatpush.xpose.msra.mxu0 0.0
    %2259 = vmatpush.xpose.msra.mxu0 0.0
    %2260 = vmatpush.xpose.msra.mxu0 0.0
    %2261 = vmatpush.xpose.msra.mxu0 %v2247
    %2262 = vmatpush.xpose.msra.mxu0 %v2245
    %2263 = vmatpush.xpose.msra.mxu0 %v2243
    %2264 = vmatpush.xpose.msra.mxu0 %v2241
    %2265 = vmatmul.f32.gmra.mxu0 %v2239
    %v2266 = vpop.f32.mrf.mxu0
    %v2267 = vadd.f32 0.0, %v2266
    %2268 = vdwg.mxu0
    %2273 = vrot.lane.b32.xlu0 %v2088, 96
    %v2274 = vpop.permute.xlu0 %2273
    %2275 = vrot.lane.b32.xlu0 %v2089, 96
    %v2276 = vpop.permute.xlu0 %2275
    %2277 = vrot.lane.b32.xlu0 %v2090, 96
    %v2278 = vpop.permute.xlu0 %2277
    %2279 = vrot.lane.b32.xlu0 %v2091, 96
    %v2280 = vpop.permute.xlu0 %2279
    %v2282 = vsel %vm245, %v2062, 0
    %v2284 = vsel %vm245, %v2274, 0
    %v2286 = vsel %vm245, %v2276, 0
    %v2288 = vsel %vm245, %v2278, 0
    %v2290 = vsel %vm245, %v2280, 0
    %2292 = vmatpush.xpose.msra.mxu0 0.0
    %2293 = vmatpush.xpose.msra.mxu0 0.0
    %2294 = vmatpush.xpose.msra.mxu0 0.0
    %2295 = vmatpush.xpose.msra.mxu0 0.0
    %2296 = vmatpush.xpose.msra.mxu0 0.0
    %2297 = vmatpush.xpose.msra.mxu0 0.0
    %2298 = vmatpush.xpose.msra.mxu0 0.0
    %2299 = vmatpush.xpose.msra.mxu0 0.0
    %2300 = vmatpush.xpose.msra.mxu0 0.0
    %2301 = vmatpush.xpose.msra.mxu0 0.0
    %2302 = vmatpush.xpose.msra.mxu0 0.0
    %2303 = vmatpush.xpose.msra.mxu0 0.0
    %2304 = vmatpush.xpose.msra.mxu0 %v2290
    %2305 = vmatpush.xpose.msra.mxu0 %v2288
    %2306 = vmatpush.xpose.msra.mxu0 %v2286
    %2307 = vmatpush.xpose.msra.mxu0 %v2284
    %2308 = vmatmul.f32.gmra.mxu0 %v2282
    %v2309 = vpop.f32.mrf.mxu0
    %v2310 = vadd.f32 0.0, %v2309
    %2311 = vdwg.mxu0
    %2316 = vrot.lane.b32.xlu0 %v2092, 96
    %v2317 = vpop.permute.xlu0 %2316
    %2318 = vrot.lane.b32.xlu0 %v2093, 96
    %v2319 = vpop.permute.xlu0 %2318
    %2320 = vrot.lane.b32.xlu0 %v2094, 96
    %v2321 = vpop.permute.xlu0 %2320
    %2322 = vrot.lane.b32.xlu0 %v2095, 96
    %v2323 = vpop.permute.xlu0 %2322
    %v2325 = vsel %vm245, %v2065, 0
    %v2327 = vsel %vm245, %v2317, 0
    %v2329 = vsel %vm245, %v2319, 0
    %v2331 = vsel %vm245, %v2321, 0
    %v2333 = vsel %vm245, %v2323, 0
    %2335 = vmatpush.xpose.msra.mxu0 0.0
    %2336 = vmatpush.xpose.msra.mxu0 0.0
    %2337 = vmatpush.xpose.msra.mxu0 0.0
    %2338 = vmatpush.xpose.msra.mxu0 0.0
    %2339 = vmatpush.xpose.msra.mxu0 0.0
    %2340 = vmatpush.xpose.msra.mxu0 0.0
    %2341 = vmatpush.xpose.msra.mxu0 0.0
    %2342 = vmatpush.xpose.msra.mxu0 0.0
    %2343 = vmatpush.xpose.msra.mxu0 0.0
    %2344 = vmatpush.xpose.msra.mxu0 0.0
    %2345 = vmatpush.xpose.msra.mxu0 0.0
    %2346 = vmatpush.xpose.msra.mxu0 0.0
    %2347 = vmatpush.xpose.msra.mxu0 %v2333
    %2348 = vmatpush.xpose.msra.mxu0 %v2331
    %2349 = vmatpush.xpose.msra.mxu0 %v2329
    %2350 = vmatpush.xpose.msra.mxu0 %v2327
    %2351 = vmatmul.f32.gmra.mxu0 %v2325
    %v2352 = vpop.f32.mrf.mxu0
    %v2353 = vadd.f32 0.0, %v2352
    %2354 = vdwg.mxu0
    %2359 = vrot.lane.b32.xlu0 %v2096, 96
    %v2360 = vpop.permute.xlu0 %2359
    %2361 = vrot.lane.b32.xlu0 %v2097, 96
    %v2362 = vpop.permute.xlu0 %2361
    %2363 = vrot.lane.b32.xlu0 %v2098, 96
    %v2364 = vpop.permute.xlu0 %2363
    %2365 = vrot.lane.b32.xlu0 %v2099, 96
    %v2366 = vpop.permute.xlu0 %2365
    %v2368 = vsel %vm245, %v2068, 0
    %v2370 = vsel %vm245, %v2360, 0
    %v2372 = vsel %vm245, %v2362, 0
    %v2374 = vsel %vm245, %v2364, 0
    %v2376 = vsel %vm245, %v2366, 0
    %2378 = vmatpush.xpose.msra.mxu0 0.0
    %2379 = vmatpush.xpose.msra.mxu0 0.0
    %2380 = vmatpush.xpose.msra.mxu0 0.0
    %2381 = vmatpush.xpose.msra.mxu0 0.0
    %2382 = vmatpush.xpose.msra.mxu0 0.0
    %2383 = vmatpush.xpose.msra.mxu0 0.0
    %2384 = vmatpush.xpose.msra.mxu0 0.0
    %2385 = vmatpush.xpose.msra.mxu0 0.0
    %2386 = vmatpush.xpose.msra.mxu0 0.0
    %2387 = vmatpush.xpose.msra.mxu0 0.0
    %2388 = vmatpush.xpose.msra.mxu0 0.0
    %2389 = vmatpush.xpose.msra.mxu0 0.0
    %2390 = vmatpush.xpose.msra.mxu0 %v2376
    %2391 = vmatpush.xpose.msra.mxu0 %v2374
    %2392 = vmatpush.xpose.msra.mxu0 %v2372
    %2393 = vmatpush.xpose.msra.mxu0 %v2370
    %2394 = vmatmul.f32.gmra.mxu0 %v2368
    %v2395 = vpop.f32.mrf.mxu0
    %v2396 = vadd.f32 0.0, %v2395
    %2397 = vdwg.mxu0
    %2402 = vrot.lane.b32.xlu0 %v2100, 96
    %v2403 = vpop.permute.xlu0 %2402
    %2404 = vrot.lane.b32.xlu0 %v2101, 96
    %v2405 = vpop.permute.xlu0 %2404
    %2406 = vrot.lane.b32.xlu0 %v2102, 96
    %v2407 = vpop.permute.xlu0 %2406
    %2408 = vrot.lane.b32.xlu0 %v2103, 96
    %v2409 = vpop.permute.xlu0 %2408
    %v2411 = vsel %vm245, %v2071, 0
    %v2413 = vsel %vm245, %v2403, 0
    %v2415 = vsel %vm245, %v2405, 0
    %v2417 = vsel %vm245, %v2407, 0
    %v2419 = vsel %vm245, %v2409, 0
    %2421 = vmatpush.xpose.msra.mxu0 0.0
    %2422 = vmatpush.xpose.msra.mxu0 0.0
    %2423 = vmatpush.xpose.msra.mxu0 0.0
    %2424 = vmatpush.xpose.msra.mxu0 0.0
    %2425 = vmatpush.xpose.msra.mxu0 0.0
    %2426 = vmatpush.xpose.msra.mxu0 0.0
    %2427 = vmatpush.xpose.msra.mxu0 0.0
    %2428 = vmatpush.xpose.msra.mxu0 0.0
    %2429 = vmatpush.xpose.msra.mxu0 0.0
    %2430 = vmatpush.xpose.msra.mxu0 0.0
    %2431 = vmatpush.xpose.msra.mxu0 0.0
    %2432 = vmatpush.xpose.msra.mxu0 0.0
    %2433 = vmatpush.xpose.msra.mxu0 %v2419
    %2434 = vmatpush.xpose.msra.mxu0 %v2417
    %2435 = vmatpush.xpose.msra.mxu0 %v2415
    %2436 = vmatpush.xpose.msra.mxu0 %v2413
    %2437 = vmatmul.f32.gmra.mxu0 %v2411
    %v2438 = vpop.f32.mrf.mxu0
    %v2439 = vadd.f32 0.0, %v2438
    %2440 = vdwg.mxu0
    %2445 = vrot.lane.b32.xlu0 %v2104, 96
    %v2446 = vpop.permute.xlu0 %2445
    %2447 = vrot.lane.b32.xlu0 %v2105, 96
    %v2448 = vpop.permute.xlu0 %2447
    %2449 = vrot.lane.b32.xlu0 %v2106, 96
    %v2450 = vpop.permute.xlu0 %2449
    %2451 = vrot.lane.b32.xlu0 %v2107, 96
    %v2452 = vpop.permute.xlu0 %2451
    %v2454 = vsel %vm245, %v2074, 0
    %v2456 = vsel %vm245, %v2446, 0
    %v2458 = vsel %vm245, %v2448, 0
    %v2460 = vsel %vm245, %v2450, 0
    %v2462 = vsel %vm245, %v2452, 0
    %2464 = vmatpush.xpose.msra.mxu0 0.0
    %2465 = vmatpush.xpose.msra.mxu0 0.0
    %2466 = vmatpush.xpose.msra.mxu0 0.0
    %2467 = vmatpush.xpose.msra.mxu0 0.0
    %2468 = vmatpush.xpose.msra.mxu0 0.0
    %2469 = vmatpush.xpose.msra.mxu0 0.0
    %2470 = vmatpush.xpose.msra.mxu0 0.0
    %2471 = vmatpush.xpose.msra.mxu0 0.0
    %2472 = vmatpush.xpose.msra.mxu0 0.0
    %2473 = vmatpush.xpose.msra.mxu0 0.0
    %2474 = vmatpush.xpose.msra.mxu0 0.0
    %2475 = vmatpush.xpose.msra.mxu0 0.0
    %2476 = vmatpush.xpose.msra.mxu0 %v2462
    %2477 = vmatpush.xpose.msra.mxu0 %v2460
    %2478 = vmatpush.xpose.msra.mxu0 %v2458
    %2479 = vmatpush.xpose.msra.mxu0 %v2456
    %2480 = vmatmul.f32.gmra.mxu0 %v2454
    %v2481 = vpop.f32.mrf.mxu0
    %v2482 = vadd.f32 0.0, %v2481
    %2483 = vdwg.mxu0
    %v2484 = vmul.f32 %v2181, 0.35355338
    %v2485 = vmul.f32 %v2224, 0.35355338
    %v2486 = vmul.f32 %v2267, 0.35355338
    %v2487 = vmul.f32 %v2310, 0.35355338
    %v2488 = vmul.f32 %v2353, 0.35355338
    %v2489 = vmul.f32 %v2396, 0.35355338
    %v2490 = vmul.f32 %v2439, 0.35355338
    %v2491 = vmul.f32 %v2482, 0.35355338
    %v2492 = vadd.f32 %v2484, %v757
    %v2493 = vadd.f32 %v2485, %v758
    %v2494 = vadd.f32 %v2486, %v759
    %v2495 = vadd.f32 %v2487, %v760
    %v2496 = vadd.f32 %v2488, %v761
    %v2497 = vadd.f32 %v2489, %v762
    %v2498 = vadd.f32 %v2490, %v763
    %v2499 = vadd.f32 %v2491, %v764
    %v2500 = vsel %vm756, -1e+30, %v2492
    %v2501 = vsel %vm756, -1e+30, %v2493
    %v2502 = vsel %vm756, -1e+30, %v2494
    %v2503 = vsel %vm756, -1e+30, %v2495
    %v2504 = vsel %vm756, -1e+30, %v2496
    %v2505 = vsel %vm756, -1e+30, %v2497
    %v2506 = vsel %vm756, -1e+30, %v2498
    %v2507 = vsel %vm756, -1e+30, %v2499
    %v2508 = vsel %vm245, %v2500, -inf
    %2509 = vmax.xlane.f32.xlu0 %v2508
    %v2510 = vpop.xlane.xlu0 %2509
    %v2511 = vsel %vm245, %v2501, -inf
    %2512 = vmax.xlane.f32.xlu0 %v2511
    %v2513 = vpop.xlane.xlu0 %2512
    %v2514 = vsel %vm245, %v2502, -inf
    %2515 = vmax.xlane.f32.xlu0 %v2514
    %v2516 = vpop.xlane.xlu0 %2515
    %v2517 = vsel %vm245, %v2503, -inf
    %2518 = vmax.xlane.f32.xlu0 %v2517
    %v2519 = vpop.xlane.xlu0 %2518
    %v2520 = vsel %vm245, %v2504, -inf
    %2521 = vmax.xlane.f32.xlu0 %v2520
    %v2522 = vpop.xlane.xlu0 %2521
    %v2523 = vsel %vm245, %v2505, -inf
    %2524 = vmax.xlane.f32.xlu0 %v2523
    %v2525 = vpop.xlane.xlu0 %2524
    %v2526 = vsel %vm245, %v2506, -inf
    %2527 = vmax.xlane.f32.xlu0 %v2526
    %v2528 = vpop.xlane.xlu0 %2527
    %v2529 = vsel %vm245, %v2507, -inf
    %2530 = vmax.xlane.f32.xlu0 %v2529
    %v2531 = vpop.xlane.xlu0 %2530
    %v2532 = vsub.f32 %v2500, %v2510
    %v2533 = vsub.f32 %v2501, %v2513
    %v2534 = vsub.f32 %v2502, %v2516
    %v2535 = vsub.f32 %v2503, %v2519
    %v2536 = vsub.f32 %v2504, %v2522
    %v2537 = vsub.f32 %v2505, %v2525
    %v2538 = vsub.f32 %v2506, %v2528
    %v2539 = vsub.f32 %v2507, %v2531
    %v2540 = vmul.f32 %v2532, 1.442695
    %v2541 = vpow.pop %v2540
    %v2542 = vmul.f32 %v2533, 1.442695
    %v2543 = vpow.pop %v2542
    %v2544 = vmul.f32 %v2534, 1.442695
    %v2545 = vpow.pop %v2544
    %v2546 = vmul.f32 %v2535, 1.442695
    %v2547 = vpow.pop %v2546
    %v2548 = vmul.f32 %v2536, 1.442695
    %v2549 = vpow.pop %v2548
    %v2550 = vmul.f32 %v2537, 1.442695
    %v2551 = vpow.pop %v2550
    %v2552 = vmul.f32 %v2538, 1.442695
    %v2553 = vpow.pop %v2552
    %v2554 = vmul.f32 %v2539, 1.442695
    %v2555 = vpow.pop %v2554
    %v2557 = vsel %vm245, %v2541, 0
    %v2560 = vsel %vm245, %v2543, 0
    %v2563 = vsel %vm245, %v2545, 0
    %v2566 = vsel %vm245, %v2547, 0
    %v2569 = vsel %vm245, %v2549, 0
    %v2572 = vsel %vm245, %v2551, 0
    %v2575 = vsel %vm245, %v2553, 0
    %v2578 = vsel %vm245, %v2555, 0
    %2580 = vmatpush.msra.mxu0 0.0
    %2581 = vmatpush.msra.mxu0 0.0
    %2582 = vmatpush.msra.mxu0 0.0
    %2583 = vmatpush.msra.mxu0 0.0
    %2584 = vmatpush.msra.mxu0 0.0
    %2585 = vmatpush.msra.mxu0 0.0
    %2586 = vmatpush.msra.mxu0 0.0
    %2587 = vmatpush.msra.mxu0 0.0
    %2588 = vmatpush.msra.mxu0 0.0
    %2589 = vmatpush.msra.mxu0 0.0
    %2590 = vmatpush.msra.mxu0 0.0
    %2591 = vmatpush.msra.mxu0 0.0
    %2592 = vmatpush.msra.mxu0 %v236
    %2593 = vmatpush.msra.mxu0 %v235
    %2594 = vmatpush.msra.mxu0 %v234
    %2595 = vmatpush.msra.mxu0 %v233
    %2596 = vmatmul.f32.gmra.mxu0 %v2557
    %v2597 = vpop.f32.mrf.mxu0
    %v2598 = vadd.f32 0.0, %v2597
    %2599 = vmatmul.f32.gmra.mxu0 %v2560
    %v2600 = vpop.f32.mrf.mxu0
    %v2601 = vadd.f32 0.0, %v2600
    %2602 = vmatmul.f32.gmra.mxu0 %v2563
    %v2603 = vpop.f32.mrf.mxu0
    %v2604 = vadd.f32 0.0, %v2603
    %2605 = vmatmul.f32.gmra.mxu0 %v2566
    %v2606 = vpop.f32.mrf.mxu0
    %v2607 = vadd.f32 0.0, %v2606
    %2608 = vmatmul.f32.gmra.mxu0 %v2569
    %v2609 = vpop.f32.mrf.mxu0
    %v2610 = vadd.f32 0.0, %v2609
    %2611 = vmatmul.f32.gmra.mxu0 %v2572
    %v2612 = vpop.f32.mrf.mxu0
    %v2613 = vadd.f32 0.0, %v2612
    %2614 = vmatmul.f32.gmra.mxu0 %v2575
    %v2615 = vpop.f32.mrf.mxu0
    %v2616 = vadd.f32 0.0, %v2615
    %2617 = vmatmul.f32.gmra.mxu0 %v2578
    %v2618 = vpop.f32.mrf.mxu0
    %v2619 = vadd.f32 0.0, %v2618
    %2620 = vdwg.mxu0
    %v2621 = vrcp.pop %v2598
    %v2622 = vrcp.pop %v2601
    %v2623 = vrcp.pop %v2604
    %v2624 = vrcp.pop %v2607
    %v2625 = vrcp.pop %v2610
    %v2626 = vrcp.pop %v2613
    %v2627 = vrcp.pop %v2616
    %v2628 = vrcp.pop %v2619
    %v2629 = vmul.f32 %v2598, %v2621
    %v2630 = vmul.f32 %v2601, %v2622
    %v2631 = vmul.f32 %v2604, %v2623
    %v2632 = vmul.f32 %v2607, %v2624
    %v2633 = vmul.f32 %v2610, %v2625
    %v2634 = vmul.f32 %v2613, %v2626
    %v2635 = vmul.f32 %v2616, %v2627
    %v2636 = vmul.f32 %v2619, %v2628
    %v2637 = vsub.f32 2.0, %v2629
    %v2638 = vsub.f32 2.0, %v2630
    %v2639 = vsub.f32 2.0, %v2631
    %v2640 = vsub.f32 2.0, %v2632
    %v2641 = vsub.f32 2.0, %v2633
    %v2642 = vsub.f32 2.0, %v2634
    %v2643 = vsub.f32 2.0, %v2635
    %v2644 = vsub.f32 2.0, %v2636
    %v2645 = vmul.f32 %v2621, %v2637
    %v2646 = vmul.f32 %v2622, %v2638
    %v2647 = vmul.f32 %v2623, %v2639
    %v2648 = vmul.f32 %v2624, %v2640
    %v2649 = vmul.f32 %v2625, %v2641
    %v2650 = vmul.f32 %v2626, %v2642
    %v2651 = vmul.f32 %v2627, %v2643
    %v2652 = vmul.f32 %v2628, %v2644
    %v2653 = vmul.f32 %v2541, %v2645
    %v2654 = vmul.f32 %v2543, %v2646
    %v2655 = vmul.f32 %v2545, %v2647
    %v2656 = vmul.f32 %v2547, %v2648
    %v2657 = vmul.f32 %v2549, %v2649
    %v2658 = vmul.f32 %v2551, %v2650
    %v2659 = vmul.f32 %v2553, %v2651
    %v2660 = vmul.f32 %v2555, %v2652
    %2665 = vrot.lane.b32.xlu0 %v2108, 64
    %v2666 = vpop.permute.xlu0 %2665
    %2667 = vrot.lane.b32.xlu0 %v2109, 64
    %v2668 = vpop.permute.xlu0 %2667
    %2669 = vrot.lane.b32.xlu0 %v2110, 64
    %v2670 = vpop.permute.xlu0 %2669
    %2671 = vrot.lane.b32.xlu0 %v2111, 64
    %v2672 = vpop.permute.xlu0 %2671
    %v2678 = vsel %vm245, %v2653, 0
    %2680 = vmatpush.msra.mxu0 0.0
    %2681 = vmatpush.msra.mxu0 0.0
    %2682 = vmatpush.msra.mxu0 0.0
    %2683 = vmatpush.msra.mxu0 0.0
    %2684 = vmatpush.msra.mxu0 0.0
    %2685 = vmatpush.msra.mxu0 0.0
    %2686 = vmatpush.msra.mxu0 0.0
    %2687 = vmatpush.msra.mxu0 0.0
    %2688 = vmatpush.msra.mxu0 0.0
    %2689 = vmatpush.msra.mxu0 0.0
    %2690 = vmatpush.msra.mxu0 0.0
    %2691 = vmatpush.msra.mxu0 0.0
    %2692 = vmatpush.msra.mxu0 %v2672
    %2693 = vmatpush.msra.mxu0 %v2670
    %2694 = vmatpush.msra.mxu0 %v2668
    %2695 = vmatpush.msra.mxu0 %v2666
    %2696 = vmatmul.f32.gmra.mxu0 %v2678
    %v2697 = vpop.f32.mrf.mxu0
    %v2698 = vadd.f32 0.0, %v2697
    %2699 = vdwg.mxu0
    %2704 = vrot.lane.b32.xlu0 %v2112, 64
    %v2705 = vpop.permute.xlu0 %2704
    %2706 = vrot.lane.b32.xlu0 %v2113, 64
    %v2707 = vpop.permute.xlu0 %2706
    %2708 = vrot.lane.b32.xlu0 %v2114, 64
    %v2709 = vpop.permute.xlu0 %2708
    %2710 = vrot.lane.b32.xlu0 %v2115, 64
    %v2711 = vpop.permute.xlu0 %2710
    %v2717 = vsel %vm245, %v2654, 0
    %2719 = vmatpush.msra.mxu0 0.0
    %2720 = vmatpush.msra.mxu0 0.0
    %2721 = vmatpush.msra.mxu0 0.0
    %2722 = vmatpush.msra.mxu0 0.0
    %2723 = vmatpush.msra.mxu0 0.0
    %2724 = vmatpush.msra.mxu0 0.0
    %2725 = vmatpush.msra.mxu0 0.0
    %2726 = vmatpush.msra.mxu0 0.0
    %2727 = vmatpush.msra.mxu0 0.0
    %2728 = vmatpush.msra.mxu0 0.0
    %2729 = vmatpush.msra.mxu0 0.0
    %2730 = vmatpush.msra.mxu0 0.0
    %2731 = vmatpush.msra.mxu0 %v2711
    %2732 = vmatpush.msra.mxu0 %v2709
    %2733 = vmatpush.msra.mxu0 %v2707
    %2734 = vmatpush.msra.mxu0 %v2705
    %2735 = vmatmul.f32.gmra.mxu0 %v2717
    %v2736 = vpop.f32.mrf.mxu0
    %v2737 = vadd.f32 0.0, %v2736
    %2738 = vdwg.mxu0
    %2743 = vrot.lane.b32.xlu0 %v2116, 64
    %v2744 = vpop.permute.xlu0 %2743
    %2745 = vrot.lane.b32.xlu0 %v2117, 64
    %v2746 = vpop.permute.xlu0 %2745
    %2747 = vrot.lane.b32.xlu0 %v2118, 64
    %v2748 = vpop.permute.xlu0 %2747
    %2749 = vrot.lane.b32.xlu0 %v2119, 64
    %v2750 = vpop.permute.xlu0 %2749
    %v2756 = vsel %vm245, %v2655, 0
    %2758 = vmatpush.msra.mxu0 0.0
    %2759 = vmatpush.msra.mxu0 0.0
    %2760 = vmatpush.msra.mxu0 0.0
    %2761 = vmatpush.msra.mxu0 0.0
    %2762 = vmatpush.msra.mxu0 0.0
    %2763 = vmatpush.msra.mxu0 0.0
    %2764 = vmatpush.msra.mxu0 0.0
    %2765 = vmatpush.msra.mxu0 0.0
    %2766 = vmatpush.msra.mxu0 0.0
    %2767 = vmatpush.msra.mxu0 0.0
    %2768 = vmatpush.msra.mxu0 0.0
    %2769 = vmatpush.msra.mxu0 0.0
    %2770 = vmatpush.msra.mxu0 %v2750
    %2771 = vmatpush.msra.mxu0 %v2748
    %2772 = vmatpush.msra.mxu0 %v2746
    %2773 = vmatpush.msra.mxu0 %v2744
    %2774 = vmatmul.f32.gmra.mxu0 %v2756
    %v2775 = vpop.f32.mrf.mxu0
    %v2776 = vadd.f32 0.0, %v2775
    %2777 = vdwg.mxu0
    %2782 = vrot.lane.b32.xlu0 %v2120, 64
    %v2783 = vpop.permute.xlu0 %2782
    %2784 = vrot.lane.b32.xlu0 %v2121, 64
    %v2785 = vpop.permute.xlu0 %2784
    %2786 = vrot.lane.b32.xlu0 %v2122, 64
    %v2787 = vpop.permute.xlu0 %2786
    %2788 = vrot.lane.b32.xlu0 %v2123, 64
    %v2789 = vpop.permute.xlu0 %2788
    %v2795 = vsel %vm245, %v2656, 0
    %2797 = vmatpush.msra.mxu0 0.0
    %2798 = vmatpush.msra.mxu0 0.0
    %2799 = vmatpush.msra.mxu0 0.0
    %2800 = vmatpush.msra.mxu0 0.0
    %2801 = vmatpush.msra.mxu0 0.0
    %2802 = vmatpush.msra.mxu0 0.0
    %2803 = vmatpush.msra.mxu0 0.0
    %2804 = vmatpush.msra.mxu0 0.0
    %2805 = vmatpush.msra.mxu0 0.0
    %2806 = vmatpush.msra.mxu0 0.0
    %2807 = vmatpush.msra.mxu0 0.0
    %2808 = vmatpush.msra.mxu0 0.0
    %2809 = vmatpush.msra.mxu0 %v2789
    %2810 = vmatpush.msra.mxu0 %v2787
    %2811 = vmatpush.msra.mxu0 %v2785
    %2812 = vmatpush.msra.mxu0 %v2783
    %2813 = vmatmul.f32.gmra.mxu0 %v2795
    %v2814 = vpop.f32.mrf.mxu0
    %v2815 = vadd.f32 0.0, %v2814
    %2816 = vdwg.mxu0
    %2821 = vrot.lane.b32.xlu0 %v2124, 64
    %v2822 = vpop.permute.xlu0 %2821
    %2823 = vrot.lane.b32.xlu0 %v2125, 64
    %v2824 = vpop.permute.xlu0 %2823
    %2825 = vrot.lane.b32.xlu0 %v2126, 64
    %v2826 = vpop.permute.xlu0 %2825
    %2827 = vrot.lane.b32.xlu0 %v2127, 64
    %v2828 = vpop.permute.xlu0 %2827
    %v2834 = vsel %vm245, %v2657, 0
    %2836 = vmatpush.msra.mxu0 0.0
    %2837 = vmatpush.msra.mxu0 0.0
    %2838 = vmatpush.msra.mxu0 0.0
    %2839 = vmatpush.msra.mxu0 0.0
    %2840 = vmatpush.msra.mxu0 0.0
    %2841 = vmatpush.msra.mxu0 0.0
    %2842 = vmatpush.msra.mxu0 0.0
    %2843 = vmatpush.msra.mxu0 0.0
    %2844 = vmatpush.msra.mxu0 0.0
    %2845 = vmatpush.msra.mxu0 0.0
    %2846 = vmatpush.msra.mxu0 0.0
    %2847 = vmatpush.msra.mxu0 0.0
    %2848 = vmatpush.msra.mxu0 %v2828
    %2849 = vmatpush.msra.mxu0 %v2826
    %2850 = vmatpush.msra.mxu0 %v2824
    %2851 = vmatpush.msra.mxu0 %v2822
    %2852 = vmatmul.f32.gmra.mxu0 %v2834
    %v2853 = vpop.f32.mrf.mxu0
    %v2854 = vadd.f32 0.0, %v2853
    %2855 = vdwg.mxu0
    %2860 = vrot.lane.b32.xlu0 %v2128, 64
    %v2861 = vpop.permute.xlu0 %2860
    %2862 = vrot.lane.b32.xlu0 %v2129, 64
    %v2863 = vpop.permute.xlu0 %2862
    %2864 = vrot.lane.b32.xlu0 %v2130, 64
    %v2865 = vpop.permute.xlu0 %2864
    %2866 = vrot.lane.b32.xlu0 %v2131, 64
    %v2867 = vpop.permute.xlu0 %2866
    %v2873 = vsel %vm245, %v2658, 0
    %2875 = vmatpush.msra.mxu0 0.0
    %2876 = vmatpush.msra.mxu0 0.0
    %2877 = vmatpush.msra.mxu0 0.0
    %2878 = vmatpush.msra.mxu0 0.0
    %2879 = vmatpush.msra.mxu0 0.0
    %2880 = vmatpush.msra.mxu0 0.0
    %2881 = vmatpush.msra.mxu0 0.0
    %2882 = vmatpush.msra.mxu0 0.0
    %2883 = vmatpush.msra.mxu0 0.0
    %2884 = vmatpush.msra.mxu0 0.0
    %2885 = vmatpush.msra.mxu0 0.0
    %2886 = vmatpush.msra.mxu0 0.0
    %2887 = vmatpush.msra.mxu0 %v2867
    %2888 = vmatpush.msra.mxu0 %v2865
    %2889 = vmatpush.msra.mxu0 %v2863
    %2890 = vmatpush.msra.mxu0 %v2861
    %2891 = vmatmul.f32.gmra.mxu0 %v2873
    %v2892 = vpop.f32.mrf.mxu0
    %v2893 = vadd.f32 0.0, %v2892
    %2894 = vdwg.mxu0
    %2899 = vrot.lane.b32.xlu0 %v2132, 64
    %v2900 = vpop.permute.xlu0 %2899
    %2901 = vrot.lane.b32.xlu0 %v2133, 64
    %v2902 = vpop.permute.xlu0 %2901
    %2903 = vrot.lane.b32.xlu0 %v2134, 64
    %v2904 = vpop.permute.xlu0 %2903
    %2905 = vrot.lane.b32.xlu0 %v2135, 64
    %v2906 = vpop.permute.xlu0 %2905
    %v2912 = vsel %vm245, %v2659, 0
    %2914 = vmatpush.msra.mxu0 0.0
    %2915 = vmatpush.msra.mxu0 0.0
    %2916 = vmatpush.msra.mxu0 0.0
    %2917 = vmatpush.msra.mxu0 0.0
    %2918 = vmatpush.msra.mxu0 0.0
    %2919 = vmatpush.msra.mxu0 0.0
    %2920 = vmatpush.msra.mxu0 0.0
    %2921 = vmatpush.msra.mxu0 0.0
    %2922 = vmatpush.msra.mxu0 0.0
    %2923 = vmatpush.msra.mxu0 0.0
    %2924 = vmatpush.msra.mxu0 0.0
    %2925 = vmatpush.msra.mxu0 0.0
    %2926 = vmatpush.msra.mxu0 %v2906
    %2927 = vmatpush.msra.mxu0 %v2904
    %2928 = vmatpush.msra.mxu0 %v2902
    %2929 = vmatpush.msra.mxu0 %v2900
    %2930 = vmatmul.f32.gmra.mxu0 %v2912
    %v2931 = vpop.f32.mrf.mxu0
    %v2932 = vadd.f32 0.0, %v2931
    %2933 = vdwg.mxu0
    %2938 = vrot.lane.b32.xlu0 %v2136, 64
    %v2939 = vpop.permute.xlu0 %2938
    %2940 = vrot.lane.b32.xlu0 %v2137, 64
    %v2941 = vpop.permute.xlu0 %2940
    %2942 = vrot.lane.b32.xlu0 %v2138, 64
    %v2943 = vpop.permute.xlu0 %2942
    %2944 = vrot.lane.b32.xlu0 %v2139, 64
    %v2945 = vpop.permute.xlu0 %2944
    %v2951 = vsel %vm245, %v2660, 0
    %2953 = vmatpush.msra.mxu0 0.0
    %2954 = vmatpush.msra.mxu0 0.0
    %2955 = vmatpush.msra.mxu0 0.0
    %2956 = vmatpush.msra.mxu0 0.0
    %2957 = vmatpush.msra.mxu0 0.0
    %2958 = vmatpush.msra.mxu0 0.0
    %2959 = vmatpush.msra.mxu0 0.0
    %2960 = vmatpush.msra.mxu0 0.0
    %2961 = vmatpush.msra.mxu0 0.0
    %2962 = vmatpush.msra.mxu0 0.0
    %2963 = vmatpush.msra.mxu0 0.0
    %2964 = vmatpush.msra.mxu0 0.0
    %2965 = vmatpush.msra.mxu0 %v2945
    %2966 = vmatpush.msra.mxu0 %v2943
    %2967 = vmatpush.msra.mxu0 %v2941
    %2968 = vmatpush.msra.mxu0 %v2939
    %2969 = vmatmul.f32.gmra.mxu0 %v2951
    %v2970 = vpop.f32.mrf.mxu0
    %v2971 = vadd.f32 0.0, %v2970
    %2972 = vdwg.mxu0
    %v2973 = vld [vmem:[%s43] sm:$0xff]
    %v2974 = vld [vmem:[%s43 + $0x8] sm:$0xff]
    %v2975 = vld [vmem:[%s43 + $0x10] sm:$0xff]
    %v2976 = vld [vmem:[%s43 + $0x18] sm:$0xff]
    %v2977 = vld [vmem:[%s45] sm:$0x1]
    %v2979 = vperm.slane %v2977, 0
    %v2982 = vsel %vm245, %v2698, 0
    %v2985 = vsel %vm245, %v2737, 0
    %v2988 = vsel %vm245, %v2776, 0
    %v2991 = vsel %vm245, %v2815, 0
    %v2994 = vsel %vm245, %v2854, 0
    %v2997 = vsel %vm245, %v2893, 0
    %v3000 = vsel %vm245, %v2932, 0
    %v3003 = vsel %vm245, %v2971, 0
    %3005 = vmatpush.msra.mxu0 0.0
    %3006 = vmatpush.msra.mxu0 0.0
    %3007 = vmatpush.msra.mxu0 0.0
    %3008 = vmatpush.msra.mxu0 0.0
    %3009 = vmatpush.msra.mxu0 0.0
    %3010 = vmatpush.msra.mxu0 0.0
    %3011 = vmatpush.msra.mxu0 0.0
    %3012 = vmatpush.msra.mxu0 0.0
    %3013 = vmatpush.msra.mxu0 0.0
    %3014 = vmatpush.msra.mxu0 0.0
    %3015 = vmatpush.msra.mxu0 0.0
    %3016 = vmatpush.msra.mxu0 0.0
    %3017 = vmatpush.msra.mxu0 %v2976
    %3018 = vmatpush.msra.mxu0 %v2975
    %3019 = vmatpush.msra.mxu0 %v2974
    %3020 = vmatpush.msra.mxu0 %v2973
    %3021 = vmatmul.f32.gmra.mxu0 %v2982
    %v3022 = vpop.f32.mrf.mxu0
    %v3023 = vadd.f32 %v2979, %v3022
    %3024 = vmatmul.f32.gmra.mxu0 %v2985
    %v3025 = vpop.f32.mrf.mxu0
    %v3026 = vadd.f32 %v2979, %v3025
    %3027 = vmatmul.f32.gmra.mxu0 %v2988
    %v3028 = vpop.f32.mrf.mxu0
    %v3029 = vadd.f32 %v2979, %v3028
    %3030 = vmatmul.f32.gmra.mxu0 %v2991
    %v3031 = vpop.f32.mrf.mxu0
    %v3032 = vadd.f32 %v2979, %v3031
    %3033 = vmatmul.f32.gmra.mxu0 %v2994
    %v3034 = vpop.f32.mrf.mxu0
    %v3035 = vadd.f32 %v2979, %v3034
    %3036 = vmatmul.f32.gmra.mxu0 %v2997
    %v3037 = vpop.f32.mrf.mxu0
    %v3038 = vadd.f32 %v2979, %v3037
    %3039 = vmatmul.f32.gmra.mxu0 %v3000
    %v3040 = vpop.f32.mrf.mxu0
    %v3041 = vadd.f32 %v2979, %v3040
    %3042 = vmatmul.f32.gmra.mxu0 %v3003
    %v3043 = vpop.f32.mrf.mxu0
    %v3044 = vadd.f32 %v2979, %v3043
    %3045 = vdwg.mxu0
    %v3046 = vadd.f32 %v1995, %v3023
    %v3047 = vadd.f32 %v1996, %v3026
    %v3048 = vadd.f32 %v1997, %v3029
    %v3049 = vadd.f32 %v1998, %v3032
    %v3050 = vadd.f32 %v1999, %v3035
    %v3051 = vadd.f32 %v2000, %v3038
    %v3052 = vadd.f32 %v2001, %v3041
    %v3053 = vadd.f32 %v2002, %v3044
    %v3054 = vsel %vm245, %v3046, 0.0
    %v3055 = vsel %vm245, %v3047, 0.0
    %v3056 = vadd.f32 %v3054, %v3055
    %v3057 = vsel %vm245, %v3048, 0.0
    %v3058 = vadd.f32 %v3056, %v3057
    %v3059 = vsel %vm245, %v3049, 0.0
    %v3060 = vadd.f32 %v3058, %v3059
    %v3061 = vsel %vm245, %v3050, 0.0
    %v3062 = vadd.f32 %v3060, %v3061
    %v3063 = vsel %vm245, %v3051, 0.0
    %v3064 = vadd.f32 %v3062, %v3063
    %v3065 = vsel %vm245, %v3052, 0.0
    %v3066 = vadd.f32 %v3064, %v3065
    %v3067 = vsel %vm245, %v3053, 0.0
    %v3068 = vadd.f32 %v3066, %v3067
    %v3069 = vrot.slane %v3068, 4
    %v3070 = vadd.f32 %v3068, %v3069
    %v3071 = vrot.slane %v3070, 2
    %v3072 = vadd.f32 %v3070, %v3071
    %v3073 = vrot.slane %v3072, 1
    %v3074 = vadd.f32 %v3072, %v3073
    %v3075 = vmul.f32 %v3074, %v1338
    %v3076 = vsub.f32 %v3046, %v3075
    %v3077 = vsub.f32 %v3047, %v3075
    %v3078 = vsub.f32 %v3048, %v3075
    %v3079 = vsub.f32 %v3049, %v3075
    %v3080 = vsub.f32 %v3050, %v3075
    %v3081 = vsub.f32 %v3051, %v3075
    %v3082 = vsub.f32 %v3052, %v3075
    %v3083 = vsub.f32 %v3053, %v3075
    %v3084 = vmul.f32 %v3076, %v3076
    %v3085 = vmul.f32 %v3077, %v3077
    %v3086 = vmul.f32 %v3078, %v3078
    %v3087 = vmul.f32 %v3079, %v3079
    %v3088 = vmul.f32 %v3080, %v3080
    %v3089 = vmul.f32 %v3081, %v3081
    %v3090 = vmul.f32 %v3082, %v3082
    %v3091 = vmul.f32 %v3083, %v3083
    %v3092 = vsel %vm245, %v3084, 0.0
    %v3093 = vsel %vm245, %v3085, 0.0
    %v3094 = vadd.f32 %v3092, %v3093
    %v3095 = vsel %vm245, %v3086, 0.0
    %v3096 = vadd.f32 %v3094, %v3095
    %v3097 = vsel %vm245, %v3087, 0.0
    %v3098 = vadd.f32 %v3096, %v3097
    %v3099 = vsel %vm245, %v3088, 0.0
    %v3100 = vadd.f32 %v3098, %v3099
    %v3101 = vsel %vm245, %v3089, 0.0
    %v3102 = vadd.f32 %v3100, %v3101
    %v3103 = vsel %vm245, %v3090, 0.0
    %v3104 = vadd.f32 %v3102, %v3103
    %v3105 = vsel %vm245, %v3091, 0.0
    %v3106 = vadd.f32 %v3104, %v3105
    %v3107 = vrot.slane %v3106, 4
    %v3108 = vadd.f32 %v3106, %v3107
    %v3109 = vrot.slane %v3108, 2
    %v3110 = vadd.f32 %v3108, %v3109
    %v3111 = vrot.slane %v3110, 1
    %v3112 = vadd.f32 %v3110, %v3111
    %v3113 = vmul.f32 %v3112, %v1338
    %v3114 = vadd.f32 %v3113, 1e-05
    %v3115 = vrsqrt.pop %v3114
    %v3116 = vmul.f32 %v3115, %v3114
    %v3117 = vmul.f32 %v3116, %v3115
    %v3118 = vmul.f32 0.5, %v3117
    %v3119 = vsub.f32 1.5, %v3118
    %v3120 = vmul.f32 %v3115, %v3119
    %vm3121 = vweird.f32 %v3114
    %vm3122 = vweird.f32 %v3115
    %vm3123 = vmor %vm3121, %vm3122
    %v3124 = vsel %vm3123, %v3115, %v3120
    %v3125 = vmul.f32 %v3076, %v3124
    %v3126 = vmul.f32 %v3077, %v3124
    %v3127 = vmul.f32 %v3078, %v3124
    %v3128 = vmul.f32 %v3079, %v3124
    %v3129 = vmul.f32 %v3080, %v3124
    %v3130 = vmul.f32 %v3081, %v3124
    %v3131 = vmul.f32 %v3082, %v3124
    %v3132 = vmul.f32 %v3083, %v3124
    %v3133 = vld [vmem:[%s47] sm:$0x1]
    %v3135 = vperm.slane %v3133, 0
    %v3137 = vmul.f32 %v3125, %v3135
    %v3138 = vmul.f32 %v3126, %v3135
    %v3139 = vmul.f32 %v3127, %v3135
    %v3140 = vmul.f32 %v3128, %v3135
    %v3141 = vmul.f32 %v3129, %v3135
    %v3142 = vmul.f32 %v3130, %v3135
    %v3143 = vmul.f32 %v3131, %v3135
    %v3144 = vmul.f32 %v3132, %v3135
    %v3145 = vld [vmem:[%s49] sm:$0x1]
    %v3147 = vperm.slane %v3145, 0
    %v3149 = vadd.f32 %v3137, %v3147
    %v3150 = vadd.f32 %v3138, %v3147
    %v3151 = vadd.f32 %v3139, %v3147
    %v3152 = vadd.f32 %v3140, %v3147
    %v3153 = vadd.f32 %v3141, %v3147
    %v3154 = vadd.f32 %v3142, %v3147
    %v3155 = vadd.f32 %v3143, %v3147
    %v3156 = vadd.f32 %v3144, %v3147
    %v3157 = vld [vmem:[%s51] sm:$0xff]
    %v3158 = vld [vmem:[%s51 + $0x8] sm:$0xff]
    %v3159 = vld [vmem:[%s51 + $0x10] sm:$0xff]
    %v3160 = vld [vmem:[%s51 + $0x18] sm:$0xff]
    %v3161 = vld [vmem:[%s53] sm:$0x1]
    %v3163 = vperm.slane %v3161, 0
    %v3166 = vsel %vm245, %v3149, 0
    %v3169 = vsel %vm245, %v3150, 0
    %v3172 = vsel %vm245, %v3151, 0
    %v3175 = vsel %vm245, %v3152, 0
    %v3178 = vsel %vm245, %v3153, 0
    %v3181 = vsel %vm245, %v3154, 0
    %v3184 = vsel %vm245, %v3155, 0
    %v3187 = vsel %vm245, %v3156, 0
    %3189 = vmatpush.msra.mxu0 0.0
    %3190 = vmatpush.msra.mxu0 0.0
    %3191 = vmatpush.msra.mxu0 0.0
    %3192 = vmatpush.msra.mxu0 0.0
    %3193 = vmatpush.msra.mxu0 0.0
    %3194 = vmatpush.msra.mxu0 0.0
    %3195 = vmatpush.msra.mxu0 0.0
    %3196 = vmatpush.msra.mxu0 0.0
    %3197 = vmatpush.msra.mxu0 0.0
    %3198 = vmatpush.msra.mxu0 0.0
    %3199 = vmatpush.msra.mxu0 0.0
    %3200 = vmatpush.msra.mxu0 0.0
    %3201 = vmatpush.msra.mxu0 %v3160
    %3202 = vmatpush.msra.mxu0 %v3159
    %3203 = vmatpush.msra.mxu0 %v3158
    %3204 = vmatpush.msra.mxu0 %v3157
    %3205 = vmatmul.f32.gmra.mxu0 %v3166
    %v3206 = vpop.f32.mrf.mxu0
    %v3207 = vadd.f32 %v3163, %v3206
    %3208 = vmatmul.f32.gmra.mxu0 %v3169
    %v3209 = vpop.f32.mrf.mxu0
    %v3210 = vadd.f32 %v3163, %v3209
    %3211 = vmatmul.f32.gmra.mxu0 %v3172
    %v3212 = vpop.f32.mrf.mxu0
    %v3213 = vadd.f32 %v3163, %v3212
    %3214 = vmatmul.f32.gmra.mxu0 %v3175
    %v3215 = vpop.f32.mrf.mxu0
    %v3216 = vadd.f32 %v3163, %v3215
    %3217 = vmatmul.f32.gmra.mxu0 %v3178
    %v3218 = vpop.f32.mrf.mxu0
    %v3219 = vadd.f32 %v3163, %v3218
    %3220 = vmatmul.f32.gmra.mxu0 %v3181
    %v3221 = vpop.f32.mrf.mxu0
    %v3222 = vadd.f32 %v3163, %v3221
    %3223 = vmatmul.f32.gmra.mxu0 %v3184
    %v3224 = vpop.f32.mrf.mxu0
    %v3225 = vadd.f32 %v3163, %v3224
    %3226 = vmatmul.f32.gmra.mxu0 %v3187
    %v3227 = vpop.f32.mrf.mxu0
    %v3228 = vadd.f32 %v3163, %v3227
    %3229 = vdwg.mxu0
    %v3230 = vmul.f32 %v3207, 0.5
    %v3231 = vmul.f32 %v3210, 0.5
    %v3232 = vmul.f32 %v3213, 0.5
    %v3233 = vmul.f32 %v3216, 0.5
    %v3234 = vmul.f32 %v3219, 0.5
    %v3235 = vmul.f32 %v3222, 0.5
    %v3236 = vmul.f32 %v3225, 0.5
    %v3237 = vmul.f32 %v3228, 0.5
    %v3238 = vmul.f32 %v3207, 0.70710677
    %v3239 = vmul.f32 %v3210, 0.70710677
    %v3240 = vmul.f32 %v3213, 0.70710677
    %v3241 = vmul.f32 %v3216, 0.70710677
    %v3242 = vmul.f32 %v3219, 0.70710677
    %v3243 = vmul.f32 %v3222, 0.70710677
    %v3244 = vmul.f32 %v3225, 0.70710677
    %v3245 = vmul.f32 %v3228, 0.70710677
    %v3246 = vand.u32 2147483647, %v3238
    %v3247 = vand.u32 2147483647, %v3239
    %v3248 = vand.u32 2147483647, %v3240
    %v3249 = vand.u32 2147483647, %v3241
    %v3250 = vand.u32 2147483647, %v3242
    %v3251 = vand.u32 2147483647, %v3243
    %v3252 = vand.u32 2147483647, %v3244
    %v3253 = vand.u32 2147483647, %v3245
    %v3254 = vmul.f32 %v3246, 0.3275911
    %v3255 = vmul.f32 %v3247, 0.3275911
    %v3256 = vmul.f32 %v3248, 0.3275911
    %v3257 = vmul.f32 %v3249, 0.3275911
    %v3258 = vmul.f32 %v3250, 0.3275911
    %v3259 = vmul.f32 %v3251, 0.3275911
    %v3260 = vmul.f32 %v3252, 0.3275911
    %v3261 = vmul.f32 %v3253, 0.3275911
    %v3262 = vadd.f32 %v3254, 1.0
    %v3263 = vadd.f32 %v3255, 1.0
    %v3264 = vadd.f32 %v3256, 1.0
    %v3265 = vadd.f32 %v3257, 1.0
    %v3266 = vadd.f32 %v3258, 1.0
    %v3267 = vadd.f32 %v3259, 1.0
    %v3268 = vadd.f32 %v3260, 1.0
    %v3269 = vadd.f32 %v3261, 1.0
    %v3270 = vrcp.pop %v3262
    %v3271 = vmul.f32 %v3262, %v3270
    %v3272 = vsub.f32 1.0, %v3271
    %v3273 = vmul.f32 %v3270, %v3272
    %v3274 = vadd.f32 %v3270, %v3273
    %vm3275 = vweird.f32 %v3262
    %vm3276 = vweird.f32 %v3270
    %vm3277 = vmor %vm3275, %vm3276
    %v3278 = vsel %vm3277, %v3270, %v3274
    %v3279 = vand.u32 2147483647, %v3262
    %vm3280 = vcmp.eq.f32.partialorder %v3279, 8.507059e+37
    %v3281 = vand.u32 %v3262, 2147483648
    %v3282 = vor.u32 1.1754944e-38, %v3281
    %v3283 = vsel %vm3280, %v3282, %v3278
    %v3284 = vmul.f32 1.0, %v3283
    %v3285 = vrcp.pop %v3263
    %v3286 = vmul.f32 %v3263, %v3285
    %v3287 = vsub.f32 1.0, %v3286
    %v3288 = vmul.f32 %v3285, %v3287
    %v3289 = vadd.f32 %v3285, %v3288
    %vm3290 = vweird.f32 %v3263
    %vm3291 = vweird.f32 %v3285
    %vm3292 = vmor %vm3290, %vm3291
    %v3293 = vsel %vm3292, %v3285, %v3289
    %v3294 = vand.u32 2147483647, %v3263
    %vm3295 = vcmp.eq.f32.partialorder %v3294, 8.507059e+37
    %v3296 = vand.u32 %v3263, 2147483648
    %v3297 = vor.u32 1.1754944e-38, %v3296
    %v3298 = vsel %vm3295, %v3297, %v3293
    %v3299 = vmul.f32 1.0, %v3298
    %v3300 = vrcp.pop %v3264
    %v3301 = vmul.f32 %v3264, %v3300
    %v3302 = vsub.f32 1.0, %v3301
    %v3303 = vmul.f32 %v3300, %v3302
    %v3304 = vadd.f32 %v3300, %v3303
    %vm3305 = vweird.f32 %v3264
    %vm3306 = vweird.f32 %v3300
    %vm3307 = vmor %vm3305, %vm3306
    %v3308 = vsel %vm3307, %v3300, %v3304
    %v3309 = vand.u32 2147483647, %v3264
    %vm3310 = vcmp.eq.f32.partialorder %v3309, 8.507059e+37
    %v3311 = vand.u32 %v3264, 2147483648
    %v3312 = vor.u32 1.1754944e-38, %v3311
    %v3313 = vsel %vm3310, %v3312, %v3308
    %v3314 = vmul.f32 1.0, %v3313
    %v3315 = vrcp.pop %v3265
    %v3316 = vmul.f32 %v3265, %v3315
    %v3317 = vsub.f32 1.0, %v3316
    %v3318 = vmul.f32 %v3315, %v3317
    %v3319 = vadd.f32 %v3315, %v3318
    %vm3320 = vweird.f32 %v3265
    %vm3321 = vweird.f32 %v3315
    %vm3322 = vmor %vm3320, %vm3321
    %v3323 = vsel %vm3322, %v3315, %v3319
    %v3324 = vand.u32 2147483647, %v3265
    %vm3325 = vcmp.eq.f32.partialorder %v3324, 8.507059e+37
    %v3326 = vand.u32 %v3265, 2147483648
    %v3327 = vor.u32 1.1754944e-38, %v3326
    %v3328 = vsel %vm3325, %v3327, %v3323
    %v3329 = vmul.f32 1.0, %v3328
    %v3330 = vrcp.pop %v3266
    %v3331 = vmul.f32 %v3266, %v3330
    %v3332 = vsub.f32 1.0, %v3331
    %v3333 = vmul.f32 %v3330, %v3332
    %v3334 = vadd.f32 %v3330, %v3333
    %vm3335 = vweird.f32 %v3266
    %vm3336 = vweird.f32 %v3330
    %vm3337 = vmor %vm3335, %vm3336
    %v3338 = vsel %vm3337, %v3330, %v3334
    %v3339 = vand.u32 2147483647, %v3266
    %vm3340 = vcmp.eq.f32.partialorder %v3339, 8.507059e+37
    %v3341 = vand.u32 %v3266, 2147483648
    %v3342 = vor.u32 1.1754944e-38, %v3341
    %v3343 = vsel %vm3340, %v3342, %v3338
    %v3344 = vmul.f32 1.0, %v3343
    %v3345 = vrcp.pop %v3267
    %v3346 = vmul.f32 %v3267, %v3345
    %v3347 = vsub.f32 1.0, %v3346
    %v3348 = vmul.f32 %v3345, %v3347
    %v3349 = vadd.f32 %v3345, %v3348
    %vm3350 = vweird.f32 %v3267
    %vm3351 = vweird.f32 %v3345
    %vm3352 = vmor %vm3350, %vm3351
    %v3353 = vsel %vm3352, %v3345, %v3349
    %v3354 = vand.u32 2147483647, %v3267
    %vm3355 = vcmp.eq.f32.partialorder %v3354, 8.507059e+37
    %v3356 = vand.u32 %v3267, 2147483648
    %v3357 = vor.u32 1.1754944e-38, %v3356
    %v3358 = vsel %vm3355, %v3357, %v3353
    %v3359 = vmul.f32 1.0, %v3358
    %v3360 = vrcp.pop %v3268
    %v3361 = vmul.f32 %v3268, %v3360
    %v3362 = vsub.f32 1.0, %v3361
    %v3363 = vmul.f32 %v3360, %v3362
    %v3364 = vadd.f32 %v3360, %v3363
    %vm3365 = vweird.f32 %v3268
    %vm3366 = vweird.f32 %v3360
    %vm3367 = vmor %vm3365, %vm3366
    %v3368 = vsel %vm3367, %v3360, %v3364
    %v3369 = vand.u32 2147483647, %v3268
    %vm3370 = vcmp.eq.f32.partialorder %v3369, 8.507059e+37
    %v3371 = vand.u32 %v3268, 2147483648
    %v3372 = vor.u32 1.1754944e-38, %v3371
    %v3373 = vsel %vm3370, %v3372, %v3368
    %v3374 = vmul.f32 1.0, %v3373
    %v3375 = vrcp.pop %v3269
    %v3376 = vmul.f32 %v3269, %v3375
    %v3377 = vsub.f32 1.0, %v3376
    %v3378 = vmul.f32 %v3375, %v3377
    %v3379 = vadd.f32 %v3375, %v3378
    %vm3380 = vweird.f32 %v3269
    %vm3381 = vweird.f32 %v3375
    %vm3382 = vmor %vm3380, %vm3381
    %v3383 = vsel %vm3382, %v3375, %v3379
    %v3384 = vand.u32 2147483647, %v3269
    %vm3385 = vcmp.eq.f32.partialorder %v3384, 8.507059e+37
    %v3386 = vand.u32 %v3269, 2147483648
    %v3387 = vor.u32 1.1754944e-38, %v3386
    %v3388 = vsel %vm3385, %v3387, %v3383
    %v3389 = vmul.f32 1.0, %v3388
    %v3390 = vmul.f32 %v3284, 1.0614054
    %v3391 = vmul.f32 %v3299, 1.0614054
    %v3392 = vmul.f32 %v3314, 1.0614054
    %v3393 = vmul.f32 %v3329, 1.0614054
    %v3394 = vmul.f32 %v3344, 1.0614054
    %v3395 = vmul.f32 %v3359, 1.0614054
    %v3396 = vmul.f32 %v3374, 1.0614054
    %v3397 = vmul.f32 %v3389, 1.0614054
    %v3398 = vadd.f32 %v3390, -1.4531521
    %v3399 = vadd.f32 %v3391, -1.4531521
    %v3400 = vadd.f32 %v3392, -1.4531521
    %v3401 = vadd.f32 %v3393, -1.4531521
    %v3402 = vadd.f32 %v3394, -1.4531521
    %v3403 = vadd.f32 %v3395, -1.4531521
    %v3404 = vadd.f32 %v3396, -1.4531521
    %v3405 = vadd.f32 %v3397, -1.4531521
    %v3406 = vmul.f32 %v3398, %v3284
    %v3407 = vmul.f32 %v3399, %v3299
    %v3408 = vmul.f32 %v3400, %v3314
    %v3409 = vmul.f32 %v3401, %v3329
    %v3410 = vmul.f32 %v3402, %v3344
    %v3411 = vmul.f32 %v3403, %v3359
    %v3412 = vmul.f32 %v3404, %v3374
    %v3413 = vmul.f32 %v3405, %v3389
    %v3414 = vadd.f32 %v3406, 1.4214138
    %v3415 = vadd.f32 %v3407, 1.4214138
    %v3416 = vadd.f32 %v3408, 1.4214138
    %v3417 = vadd.f32 %v3409, 1.4214138
    %v3418 = vadd.f32 %v3410, 1.4214138
    %v3419 = vadd.f32 %v3411, 1.4214138
    %v3420 = vadd.f32 %v3412, 1.4214138
    %v3421 = vadd.f32 %v3413, 1.4214138
    %v3422 = vmul.f32 %v3414, %v3284
    %v3423 = vmul.f32 %v3415, %v3299
    %v3424 = vmul.f32 %v3416, %v3314
    %v3425 = vmul.f32 %v3417, %v3329
    %v3426 = vmul.f32 %v3418, %v3344
    %v3427 = vmul.f32 %v3419, %v3359
    %v3428 = vmul.f32 %v3420, %v3374
    %v3429 = vmul.f32 %v3421, %v3389
    %v3430 = vadd.f32 %v3422, -0.28449672
    %v3431 = vadd.f32 %v3423, -0.28449672
    %v3432 = vadd.f32 %v3424, -0.28449672
    %v3433 = vadd.f32 %v3425, -0.28449672
    %v3434 = vadd.f32 %v3426, -0.28449672
    %v3435 = vadd.f32 %v3427, -0.28449672
    %v3436 = vadd.f32 %v3428, -0.28449672
    %v3437 = vadd.f32 %v3429, -0.28449672
    %v3438 = vmul.f32 %v3430, %v3284
    %v3439 = vmul.f32 %v3431, %v3299
    %v3440 = vmul.f32 %v3432, %v3314
    %v3441 = vmul.f32 %v3433, %v3329
    %v3442 = vmul.f32 %v3434, %v3344
    %v3443 = vmul.f32 %v3435, %v3359
    %v3444 = vmul.f32 %v3436, %v3374
    %v3445 = vmul.f32 %v3437, %v3389
    %v3446 = vadd.f32 %v3438, 0.2548296
    %v3447 = vadd.f32 %v3439, 0.2548296
    %v3448 = vadd.f32 %v3440, 0.2548296
    %v3449 = vadd.f32 %v3441, 0.2548296
    %v3450 = vadd.f32 %v3442, 0.2548296
    %v3451 = vadd.f32 %v3443, 0.2548296
    %v3452 = vadd.f32 %v3444, 0.2548296
    %v3453 = vadd.f32 %v3445, 0.2548296
    %v3454 = vmul.f32 %v3446, %v3284
    %v3455 = vmul.f32 %v3447, %v3299
    %v3456 = vmul.f32 %v3448, %v3314
    %v3457 = vmul.f32 %v3449, %v3329
    %v3458 = vmul.f32 %v3450, %v3344
    %v3459 = vmul.f32 %v3451, %v3359
    %v3460 = vmul.f32 %v3452, %v3374
    %v3461 = vmul.f32 %v3453, %v3389
    %v3462 = vsub.f32 0.0, %v3246
    %v3463 = vsub.f32 0.0, %v3247
    %v3464 = vsub.f32 0.0, %v3248
    %v3465 = vsub.f32 0.0, %v3249
    %v3466 = vsub.f32 0.0, %v3250
    %v3467 = vsub.f32 0.0, %v3251
    %v3468 = vsub.f32 0.0, %v3252
    %v3469 = vsub.f32 0.0, %v3253
    %v3470 = vmul.f32 %v3462, %v3246
    %v3471 = vmul.f32 %v3463, %v3247
    %v3472 = vmul.f32 %v3464, %v3248
    %v3473 = vmul.f32 %v3465, %v3249
    %v3474 = vmul.f32 %v3466, %v3250
    %v3475 = vmul.f32 %v3467, %v3251
    %v3476 = vmul.f32 %v3468, %v3252
    %v3477 = vmul.f32 %v3469, %v3253
    %v3478 = vmul.f32 %v3470, 1.442695
    %v3479 = vpow.pop %v3478
    %v3480 = vmul.f32 %v3471, 1.442695
    %v3481 = vpow.pop %v3480
    %v3482 = vmul.f32 %v3472, 1.442695
    %v3483 = vpow.pop %v3482
    %v3484 = vmul.f32 %v3473, 1.442695
    %v3485 = vpow.pop %v3484
    %v3486 = vmul.f32 %v3474, 1.442695
    %v3487 = vpow.pop %v3486
    %v3488 = vmul.f32 %v3475, 1.442695
    %v3489 = vpow.pop %v3488
    %v3490 = vmul.f32 %v3476, 1.442695
    %v3491 = vpow.pop %v3490
    %v3492 = vmul.f32 %v3477, 1.442695
    %v3493 = vpow.pop %v3492
    %v3494 = vmul.f32 %v3454, %v3479
    %v3495 = vmul.f32 %v3455, %v3481
    %v3496 = vmul.f32 %v3456, %v3483
    %v3497 = vmul.f32 %v3457, %v3485
    %v3498 = vmul.f32 %v3458, %v3487
    %v3499 = vmul.f32 %v3459, %v3489
    %v3500 = vmul.f32 %v3460, %v3491
    %v3501 = vmul.f32 %v3461, %v3493
    %v3502 = vsub.f32 1.0, %v3494
    %v3503 = vsub.f32 1.0, %v3495
    %v3504 = vsub.f32 1.0, %v3496
    %v3505 = vsub.f32 1.0, %v3497
    %v3506 = vsub.f32 1.0, %v3498
    %v3507 = vsub.f32 1.0, %v3499
    %v3508 = vsub.f32 1.0, %v3500
    %v3509 = vsub.f32 1.0, %v3501
    %vm3510 = vcmp.ge.f32.partialorder %v3238, 0.0
    %vm3511 = vcmp.ge.f32.partialorder %v3239, 0.0
    %vm3512 = vcmp.ge.f32.partialorder %v3240, 0.0
    %vm3513 = vcmp.ge.f32.partialorder %v3241, 0.0
    %vm3514 = vcmp.ge.f32.partialorder %v3242, 0.0
    %vm3515 = vcmp.ge.f32.partialorder %v3243, 0.0
    %vm3516 = vcmp.ge.f32.partialorder %v3244, 0.0
    %vm3517 = vcmp.ge.f32.partialorder %v3245, 0.0
    %v3518 = vsub.f32 0.0, %v3502
    %v3519 = vsub.f32 0.0, %v3503
    %v3520 = vsub.f32 0.0, %v3504
    %v3521 = vsub.f32 0.0, %v3505
    %v3522 = vsub.f32 0.0, %v3506
    %v3523 = vsub.f32 0.0, %v3507
    %v3524 = vsub.f32 0.0, %v3508
    %v3525 = vsub.f32 0.0, %v3509
    %v3526 = vsel %vm3510, %v3502, %v3518
    %v3527 = vsel %vm3511, %v3503, %v3519
    %v3528 = vsel %vm3512, %v3504, %v3520
    %v3529 = vsel %vm3513, %v3505, %v3521
    %v3530 = vsel %vm3514, %v3506, %v3522
    %v3531 = vsel %vm3515, %v3507, %v3523
    %v3532 = vsel %vm3516, %v3508, %v3524
    %v3533 = vsel %vm3517, %v3509, %v3525
    %v3534 = vadd.f32 %v3526, 1.0
    %v3535 = vadd.f32 %v3527, 1.0
    %v3536 = vadd.f32 %v3528, 1.0
    %v3537 = vadd.f32 %v3529, 1.0
    %v3538 = vadd.f32 %v3530, 1.0
    %v3539 = vadd.f32 %v3531, 1.0
    %v3540 = vadd.f32 %v3532, 1.0
    %v3541 = vadd.f32 %v3533, 1.0
    %v3542 = vmul.f32 %v3230, %v3534
    %v3543 = vmul.f32 %v3231, %v3535
    %v3544 = vmul.f32 %v3232, %v3536
    %v3545 = vmul.f32 %v3233, %v3537
    %v3546 = vmul.f32 %v3234, %v3538
    %v3547 = vmul.f32 %v3235, %v3539
    %v3548 = vmul.f32 %v3236, %v3540
    %v3549 = vmul.f32 %v3237, %v3541
    %v3550 = vld [vmem:[%s55] sm:$0xff]
    %v3551 = vld [vmem:[%s55 + $0x8] sm:$0xff]
    %v3552 = vld [vmem:[%s55 + $0x10] sm:$0xff]
    %v3553 = vld [vmem:[%s55 + $0x18] sm:$0xff]
    %v3554 = vld [vmem:[%s55 + $0x20] sm:$0xff]
    %v3555 = vld [vmem:[%s55 + $0x28] sm:$0xff]
    %v3556 = vld [vmem:[%s55 + $0x30] sm:$0xff]
    %v3557 = vld [vmem:[%s55 + $0x38] sm:$0xff]
    %v3558 = vld [vmem:[%s57] sm:$0x1]
    %v3560 = vperm.slane %v3558, 0
    %v3563 = vsel %vm1826, %v3542, 0
    %v3566 = vsel %vm1826, %v3543, 0
    %v3569 = vsel %vm1826, %v3544, 0
    %v3572 = vsel %vm1826, %v3545, 0
    %v3575 = vsel %vm1826, %v3546, 0
    %v3578 = vsel %vm1826, %v3547, 0
    %v3581 = vsel %vm1826, %v3548, 0
    %v3584 = vsel %vm1826, %v3549, 0
    %3586 = vmatpush.msra.mxu0 0.0
    %3587 = vmatpush.msra.mxu0 0.0
    %3588 = vmatpush.msra.mxu0 0.0
    %3589 = vmatpush.msra.mxu0 0.0
    %3590 = vmatpush.msra.mxu0 0.0
    %3591 = vmatpush.msra.mxu0 0.0
    %3592 = vmatpush.msra.mxu0 0.0
    %3593 = vmatpush.msra.mxu0 0.0
    %3594 = vmatpush.msra.mxu0 %v3557
    %3595 = vmatpush.msra.mxu0 %v3556
    %3596 = vmatpush.msra.mxu0 %v3555
    %3597 = vmatpush.msra.mxu0 %v3554
    %3598 = vmatpush.msra.mxu0 %v3553
    %3599 = vmatpush.msra.mxu0 %v3552
    %3600 = vmatpush.msra.mxu0 %v3551
    %3601 = vmatpush.msra.mxu0 %v3550
    %3602 = vmatmul.f32.gmra.mxu0 %v3563
    %v3603 = vpop.f32.mrf.mxu0
    %v3604 = vadd.f32 %v3560, %v3603
    %3605 = vmatmul.f32.gmra.mxu0 %v3566
    %v3606 = vpop.f32.mrf.mxu0
    %v3607 = vadd.f32 %v3560, %v3606
    %3608 = vmatmul.f32.gmra.mxu0 %v3569
    %v3609 = vpop.f32.mrf.mxu0
    %v3610 = vadd.f32 %v3560, %v3609
    %3611 = vmatmul.f32.gmra.mxu0 %v3572
    %v3612 = vpop.f32.mrf.mxu0
    %v3613 = vadd.f32 %v3560, %v3612
    %3614 = vmatmul.f32.gmra.mxu0 %v3575
    %v3615 = vpop.f32.mrf.mxu0
    %v3616 = vadd.f32 %v3560, %v3615
    %3617 = vmatmul.f32.gmra.mxu0 %v3578
    %v3618 = vpop.f32.mrf.mxu0
    %v3619 = vadd.f32 %v3560, %v3618
    %3620 = vmatmul.f32.gmra.mxu0 %v3581
    %v3621 = vpop.f32.mrf.mxu0
    %v3622 = vadd.f32 %v3560, %v3621
    %3623 = vmatmul.f32.gmra.mxu0 %v3584
    %v3624 = vpop.f32.mrf.mxu0
    %v3625 = vadd.f32 %v3560, %v3624
    %3626 = vdwg.mxu0
    %v3627 = vadd.f32 %v3149, %v3604
    %v3628 = vadd.f32 %v3150, %v3607
    %v3629 = vadd.f32 %v3151, %v3610
    %v3630 = vadd.f32 %v3152, %v3613
    %v3631 = vadd.f32 %v3153, %v3616
    %v3632 = vadd.f32 %v3154, %v3619
    %v3633 = vadd.f32 %v3155, %v3622
    %v3634 = vadd.f32 %v3156, %v3625
    %v3635 = vsel %vm245, %v3627, 0.0
    %v3636 = vsel %vm245, %v3628, 0.0
    %v3637 = vadd.f32 %v3635, %v3636
    %v3638 = vsel %vm245, %v3629, 0.0
    %v3639 = vadd.f32 %v3637, %v3638
    %v3640 = vsel %vm245, %v3630, 0.0
    %v3641 = vadd.f32 %v3639, %v3640
    %v3642 = vsel %vm245, %v3631, 0.0
    %v3643 = vadd.f32 %v3641, %v3642
    %v3644 = vsel %vm245, %v3632, 0.0
    %v3645 = vadd.f32 %v3643, %v3644
    %v3646 = vsel %vm245, %v3633, 0.0
    %v3647 = vadd.f32 %v3645, %v3646
    %v3648 = vsel %vm245, %v3634, 0.0
    %v3649 = vadd.f32 %v3647, %v3648
    %v3650 = vrot.slane %v3649, 4
    %v3651 = vadd.f32 %v3649, %v3650
    %v3652 = vrot.slane %v3651, 2
    %v3653 = vadd.f32 %v3651, %v3652
    %v3654 = vrot.slane %v3653, 1
    %v3655 = vadd.f32 %v3653, %v3654
    %v3656 = vmul.f32 %v3655, %v1338
    %v3657 = vsub.f32 %v3627, %v3656
    %v3658 = vsub.f32 %v3628, %v3656
    %v3659 = vsub.f32 %v3629, %v3656
    %v3660 = vsub.f32 %v3630, %v3656
    %v3661 = vsub.f32 %v3631, %v3656
    %v3662 = vsub.f32 %v3632, %v3656
    %v3663 = vsub.f32 %v3633, %v3656
    %v3664 = vsub.f32 %v3634, %v3656
    %v3665 = vmul.f32 %v3657, %v3657
    %v3666 = vmul.f32 %v3658, %v3658
    %v3667 = vmul.f32 %v3659, %v3659
    %v3668 = vmul.f32 %v3660, %v3660
    %v3669 = vmul.f32 %v3661, %v3661
    %v3670 = vmul.f32 %v3662, %v3662
    %v3671 = vmul.f32 %v3663, %v3663
    %v3672 = vmul.f32 %v3664, %v3664
    %v3673 = vsel %vm245, %v3665, 0.0
    %v3674 = vsel %vm245, %v3666, 0.0
    %v3675 = vadd.f32 %v3673, %v3674
    %v3676 = vsel %vm245, %v3667, 0.0
    %v3677 = vadd.f32 %v3675, %v3676
    %v3678 = vsel %vm245, %v3668, 0.0
    %v3679 = vadd.f32 %v3677, %v3678
    %v3680 = vsel %vm245, %v3669, 0.0
    %v3681 = vadd.f32 %v3679, %v3680
    %v3682 = vsel %vm245, %v3670, 0.0
    %v3683 = vadd.f32 %v3681, %v3682
    %v3684 = vsel %vm245, %v3671, 0.0
    %v3685 = vadd.f32 %v3683, %v3684
    %v3686 = vsel %vm245, %v3672, 0.0
    %v3687 = vadd.f32 %v3685, %v3686
    %v3688 = vrot.slane %v3687, 4
    %v3689 = vadd.f32 %v3687, %v3688
    %v3690 = vrot.slane %v3689, 2
    %v3691 = vadd.f32 %v3689, %v3690
    %v3692 = vrot.slane %v3691, 1
    %v3693 = vadd.f32 %v3691, %v3692
    %v3694 = vmul.f32 %v3693, %v1338
    %v3695 = vadd.f32 %v3694, 1e-05
    %v3696 = vrsqrt.pop %v3695
    %v3697 = vmul.f32 %v3696, %v3695
    %v3698 = vmul.f32 %v3697, %v3696
    %v3699 = vmul.f32 0.5, %v3698
    %v3700 = vsub.f32 1.5, %v3699
    %v3701 = vmul.f32 %v3696, %v3700
    %vm3702 = vweird.f32 %v3695
    %vm3703 = vweird.f32 %v3696
    %vm3704 = vmor %vm3702, %vm3703
    %v3705 = vsel %vm3704, %v3696, %v3701
    %v3706 = vmul.f32 %v3657, %v3705
    %v3707 = vmul.f32 %v3658, %v3705
    %v3708 = vmul.f32 %v3659, %v3705
    %v3709 = vmul.f32 %v3660, %v3705
    %v3710 = vmul.f32 %v3661, %v3705
    %v3711 = vmul.f32 %v3662, %v3705
    %v3712 = vmul.f32 %v3663, %v3705
    %v3713 = vmul.f32 %v3664, %v3705
    %v3714 = vld [vmem:[%s59] sm:$0x1]
    %v3716 = vperm.slane %v3714, 0
    %v3718 = vmul.f32 %v3706, %v3716
    %v3719 = vmul.f32 %v3707, %v3716
    %v3720 = vmul.f32 %v3708, %v3716
    %v3721 = vmul.f32 %v3709, %v3716
    %v3722 = vmul.f32 %v3710, %v3716
    %v3723 = vmul.f32 %v3711, %v3716
    %v3724 = vmul.f32 %v3712, %v3716
    %v3725 = vmul.f32 %v3713, %v3716
    %v3726 = vld [vmem:[%s61] sm:$0x1]
    %v3728 = vperm.slane %v3726, 0
    %v3730 = vadd.f32 %v3718, %v3728
    %v3731 = vadd.f32 %v3719, %v3728
    %v3732 = vadd.f32 %v3720, %v3728
    %v3733 = vadd.f32 %v3721, %v3728
    %v3734 = vadd.f32 %v3722, %v3728
    %v3735 = vadd.f32 %v3723, %v3728
    %v3736 = vadd.f32 %v3724, %v3728
    %v3737 = vadd.f32 %v3725, %v3728
    %3738 = vst.msk [vmem:[#allocation2] sm:$0xff] %vm245, %v3730
    %3739 = vst.msk [vmem:[#allocation2 + $0x8] sm:$0xff] %vm245, %v3731
    %3740 = vst.msk [vmem:[#allocation2 + $0x10] sm:$0xff] %vm245, %v3732
    %3741 = vst.msk [vmem:[#allocation2 + $0x18] sm:$0xff] %vm245, %v3733
    %3742 = vst.msk [vmem:[#allocation2 + $0x20] sm:$0xff] %vm245, %v3734
    %3743 = vst.msk [vmem:[#allocation2 + $0x28] sm:$0xff] %vm245, %v3735
    %3744 = vst.msk [vmem:[#allocation2 + $0x30] sm:$0xff] %vm245, %v3736
    %3745 = vst.msk [vmem:[#allocation2 + $0x38] sm:$0xff] %vm245, %v3737
    // Predicated region
    $region126: #{tsti_encoder_forward.1} parent=1 // pred_check
      _
    $region127: #{tsti_encoder_forward.1} parent=1 // pred_check_branch
      %3747 = sbr.rel (0) target = $region129
    $region128: #{tsti_encoder_forward.1} parent=1 // pred_region
      %3749 = vsyncadd [#allocation3], 0
      %s3750 = sshll.u32 [#allocation2], 4
      %s3751 = int_to_ptr.vmem [resolvable:$true] %s3750
      %s3752 = sshll.u32 %s63, 4
      %s3753 = int_to_ptr.hbm [resolvable:$true] %s3752
      %3758 = dma.vmem_to_hbm [thread:$0]  %s3751, 1024, %s3753, [#allocation3], 128, 128, 8
    $region129: #{tsti_encoder_forward.1} parent=1 // pred_fallthru
      _
    // Predicated region
    $region130: #{tsti_encoder_forward.1} parent=1 // pred_check
      _
    $region131: #{tsti_encoder_forward.1} parent=1 // pred_check_branch
      %3760 = sbr.rel (0) target = $region133
    $region132: #{tsti_encoder_forward.1} parent=1 // pred_region
      %3762 = dma.done [#allocation3], 1024
    $region133: #{tsti_encoder_forward.1} parent=1 // pred_fallthru
      _
    %3763 = vsyncpa [#allocation3], 1

</llo_original>
